<compile_context>
chip_gen: v6e
topology: v6e:2x2x1
jax: 0.10.0
libtpu: 0.0.40
codegen_flags: <defaults>
</compile_context>

<pallas_src>
import functools

import jax
import jax.numpy as jnp
from jax import lax
from jax.experimental import pallas as pl
from jax.experimental.pallas import tpu as pltpu

F32 = jnp.float32
BF16 = jnp.bfloat16

_VMEM_LIMIT = 48 * 1024 * 1024  # conservative: fits v7x's 64 MiB VMEM budget


def _dense_params():
    return pltpu.CompilerParams(
        dimension_semantics=("parallel",),
        vmem_limit_bytes=_VMEM_LIMIT,
    )


def _m_tile(M, target=512):
    """Largest multiple-of-8 divisor of M that is <= target (or M itself)."""
    if M <= target:
        return M
    t = (target // 8) * 8
    while t >= 8:
        if M % t == 0:
            return t
        t -= 8
    return M


def _row_spec(tm, n):
    return pl.BlockSpec((tm, n), lambda i: (i, 0))


def _const_spec(shape):
    nd = len(shape)
    return pl.BlockSpec(shape, lambda i: (0,) * nd)


# --------------------------- layernorm kernels --------------------------------

def _ln(x, w, b, eps):
    mean = jnp.mean(x, axis=-1, keepdims=True)
    xc = x - mean
    var = jnp.mean(xc * xc, axis=-1, keepdims=True)
    return xc * lax.rsqrt(var + eps) * w + b


def _double_ln_kernel(eps, x_ref, w1_ref, b1_ref, w2_ref, b2_ref, res_ref, y_ref):
    x = x_ref[...]
    r = _ln(x, w1_ref[...], b1_ref[...], eps)       # pre_norm output (new residual)
    res_ref[...] = r
    y_ref[...] = _ln(r, w2_ref[...], b2_ref[...], eps)  # attn_norm output


def double_layernorm(x2, w1, b1, w2, b2, eps):
    M, D = x2.shape
    tm = _m_tile(M)
    return pl.pallas_call(
        functools.partial(_double_ln_kernel, eps),
        grid=(M // tm,),
        in_specs=[
            _row_spec(tm, D),
            _const_spec((1, D)), _const_spec((1, D)),
            _const_spec((1, D)), _const_spec((1, D)),
        ],
        out_specs=(_row_spec(tm, D), _row_spec(tm, D)),
        out_shape=(jax.ShapeDtypeStruct((M, D), F32),
                   jax.ShapeDtypeStruct((M, D), F32)),
        compiler_params=_dense_params(),
    )(x2, w1.reshape(1, -1), b1.reshape(1, -1), w2.reshape(1, -1), b2.reshape(1, -1))


def _ln_kernel(eps, x_ref, w_ref, b_ref, o_ref):
    o_ref[...] = _ln(x_ref[...], w_ref[...], b_ref[...], eps)


def layernorm(x2, w, b, eps):
    M, D = x2.shape
    tm = _m_tile(M)
    return pl.pallas_call(
        functools.partial(_ln_kernel, eps),
        grid=(M // tm,),
        in_specs=[_row_spec(tm, D), _const_spec((1, D)), _const_spec((1, D))],
        out_specs=_row_spec(tm, D),
        out_shape=jax.ShapeDtypeStruct((M, D), F32),
        compiler_params=_dense_params(),
    )(x2, w.reshape(1, -1), b.reshape(1, -1))


# ---------------------- fused attention pre-projections -----------------------

def _attn_proj_kernel(x_ref, d_ref, xmu_ref, xw1_ref, xw2_ref, xb_ref,
                      rw_ref, kw_ref, vw_ref,
                      wa_ref, wb_ref, wbias_ref,
                      ga_ref, gb_ref, gbias_ref,
                      r_ref, k_ref, dec_ref, v_ref, g_ref):
    x = x_ref[...]
    d = d_ref[...]

    # x_proj[0]: LerpLinear(D, 5R); x_proj[1]: Tanh; x_proj[2]: low-rank mix + x_bias
    z0 = (x + d * xmu_ref[...]).astype(BF16)
    x1 = jnp.tanh(jnp.dot(z0, xw1_ref[...], preferred_element_type=F32))   # (tm, 5R)
    R = xw1_ref.shape[1] // 5
    xw2 = xw2_ref[...]                                                     # (5, R, D)
    xb = xb_ref[...]                                                       # (5, D)
    mus = []
    for n in range(5):
        mu_n = jnp.dot(x1[:, n * R:(n + 1) * R].astype(BF16), xw2[n],
                       preferred_element_type=F32) + xb[n:n + 1]
        mus.append(mu_n)
    mu_r, mu_w, mu_k, mu_v, mu_g = mus                                     # fla order

    def lerp(mu):
        return (x + d * mu).astype(BF16)

    r_ref[...] = jnp.dot(lerp(mu_r), rw_ref[...], preferred_element_type=F32)
    k_ref[...] = jnp.dot(lerp(mu_k), kw_ref[...], preferred_element_type=F32)
    v_ref[...] = jnp.dot(lerp(mu_v), vw_ref[...], preferred_element_type=F32)

    hw = jnp.tanh(jnp.dot(lerp(mu_w), wa_ref[...], preferred_element_type=F32))
    w = jnp.dot(hw.astype(BF16), wb_ref[...], preferred_element_type=F32) + wbias_ref[...]
    dec_ref[...] = jnp.exp(-jnp.exp(w))   # decay hoisted out of the recurrence

    hg = jnp.tanh(jnp.dot(lerp(mu_g), ga_ref[...], preferred_element_type=F32))
    g_ref[...] = jnp.dot(hg.astype(BF16), gb_ref[...], preferred_element_type=F32) + gbias_ref[...]


def attn_projections(x2, d2, p):
    M, D = x2.shape
    tm = _m_tile(M)
    Kd = p["r_w"].shape[1]
    Vd = p["v_w"].shape[1]
    R5 = p["x_w1"].shape[1]
    G = p["w_a"].shape[1]
    out_shape = (
        jax.ShapeDtypeStruct((M, Kd), F32),   # r
        jax.ShapeDtypeStruct((M, Kd), F32),   # k
        jax.ShapeDtypeStruct((M, Kd), F32),   # decay = exp(-exp(w))
        jax.ShapeDtypeStruct((M, Vd), F32),   # v
        jax.ShapeDtypeStruct((M, Vd), F32),   # g (pre-gate)
    )
    return pl.pallas_call(
        _attn_proj_kernel,
        grid=(M // tm,),
        in_specs=[
            _row_spec(tm, D), _row_spec(tm, D),
            _const_spec((1, D)),
            _const_spec((D, R5)),
            _const_spec(p["x_w2"].shape),
            _const_spec(p["x_bias"].shape),
            _const_spec((D, Kd)), _const_spec((D, Kd)), _const_spec((D, Vd)),
            _const_spec((D, G)), _const_spec((G, Kd)), _const_spec((1, Kd)),
            _const_spec((D, G)), _const_spec((G, Vd)), _const_spec((1, Vd)),
        ],
        out_specs=(_row_spec(tm, Kd), _row_spec(tm, Kd), _row_spec(tm, Kd),
                   _row_spec(tm, Vd), _row_spec(tm, Vd)),
        out_shape=out_shape,
        compiler_params=_dense_params(),
    )(x2, d2, p["x_mu"], p["x_w1"], p["x_w2"], p["x_bias"],
      p["r_w"], p["k_w"], p["v_w"],
      p["w_a"], p["w_b"], p["w_bias"],
      p["g_a"], p["g_b"], p["g_bias"])


# ----------------- fused GroupNorm + gate + o_proj + residual -----------------

def _gn_gate_oproj_kernel(eps, o_ref, g_ref, res_ref, gnw_ref, gnb_ref,
                          pool_ref, scat_ref, ow_ref, out_ref):
    o = o_ref[...]                                                     # (tm, Vd) f32
    pool = pool_ref[...]                                               # (Vd, H)
    scat = scat_ref[...]                                               # (H, Vd)
    # Per-(token, head) GroupNorm statistics via tiny pooling matmuls (lane-dense,
    # no in-kernel reshapes).
    mean = jnp.dot(jnp.dot(o, pool, preferred_element_type=F32), scat,
                   preferred_element_type=F32)
    xc = o - mean
    var = jnp.dot(jnp.dot(xc * xc, pool, preferred_element_type=F32), scat,
                  preferred_element_type=F32)
    normed = xc * lax.rsqrt(var + eps) * gnw_ref[...] + gnb_ref[...]
    # TODO(synk): fla's fused GroupNorm+gate may use its own eps; RWKV-6 output gate
    # modeled here as SiLU (swish), eps reuses the block norm_eps.
    g = g_ref[...]
    y = normed * (g * jax.nn.sigmoid(g))
    out_ref[...] = res_ref[...] + jnp.dot(y.astype(BF16), ow_ref[...],
                                          preferred_element_type=F32)


def gn_gate_oproj_residual(o2, g2, res2, p, H, eps):
    M, Vd = o2.shape
    D = p["o_w"].shape[1]
    Dv = Vd // H
    tm = _m_tile(M)
    scat = jnp.kron(jnp.eye(H, dtype=F32), jnp.ones((1, Dv), F32))      # (H, Vd)
    pool = scat.T / float(Dv)                                           # (Vd, H)
    return pl.pallas_call(
        functools.partial(_gn_gate_oproj_kernel, eps),
        grid=(M // tm,),
        in_specs=[
            _row_spec(tm, Vd), _row_spec(tm, Vd), _row_spec(tm, D),
            _const_spec((1, Vd)), _const_spec((1, Vd)),
            _const_spec((Vd, H)), _const_spec((H, Vd)),
            _const_spec((Vd, D)),
        ],
        out_specs=_row_spec(tm, D),
        out_shape=jax.ShapeDtypeStruct((M, D), F32),
        compiler_params=_dense_params(),
    )(o2, g2, res2, p["gn_w"].reshape(1, -1), p["gn_b"].reshape(1, -1),
      pool, scat, p["o_w"])


# --------------------- RWKV6 chunked linear-attention recurrence --------------

def _rwkv6_recurrent_kernel(C, r_ref, k_ref, d_ref, v_ref, u_ref, o_ref, s_ref):
    # blocks: r/k/d (bhb, C, Dk); v/o (bhb, C, Dv); u (bhb, 1, Dk)
    # scratch: s (bhb, Dk, Dv) f32 recurrent state (persists across the chunk axis).
    @pl.when(pl.program_id(1) == 0)
    def _():
        s_ref[...] = jnp.zeros_like(s_ref)

    u = u_ref[:, 0, :]                      # (bhb, Dk), resident (constant index_map)
    s = s_ref[...]
    # TODO(synk): for very long T, fla's chunk_rwkv6 MXU formulation (cumulative
    # decays + per-chunk matmuls) would replace this per-step elementwise loop.
    for t in range(C):                      # static unroll over the time chunk
        rt = r_ref[:, t, :]                 # (bhb, Dk)
        kt = k_ref[:, t, :]
        dt = d_ref[:, t, :]                 # precomputed decay = exp(-exp(w_raw))
        vt = v_ref[:, t, :]                 # (bhb, Dv)
        # o_t = r . S_{t-1} + (r . (u*k)) v
        coeff = jnp.sum(rt * u * kt, axis=-1, keepdims=True)            # (bhb, 1)
        ot = jnp.sum(rt[:, :, None] * s, axis=1) + coeff * vt           # (bhb, Dv)
        o_ref[:, t:t + 1, :] = ot[:, None, :]
        # S_t = diag(decay_t) S_{t-1} + k_t v_t^T
        s = dt[:, :, None] * s + kt[:, :, None] * vt[:, None, :]
    s_ref[...] = s


def rwkv6_fused_recurrent(r, k, decay, v, u, B, T, H, chunk=32):
    # r/k/decay: (M, key_dim); v: (M, value_dim); u: (H, Dk) -> out (M, value_dim)
    Kd = r.shape[-1]
    Vd = v.shape[-1]
    Dk, Dv = Kd // H, Vd // H
    BH = B * H

    def to_bht(z, d):                       # (M, H*d) -> (BH, T, d), lane-dense on d
        return z.reshape(B, T, H, d).transpose(0, 2, 1, 3).reshape(BH, T, d)

    r3, k3, d3 = to_bht(r, Dk), to_bht(k, Dk), to_bht(decay, Dk)
    v3 = to_bht(v, Dv)

    C = min(chunk, T)
    n_chunks = -(-T // C)
    T_pad = n_chunks * C
    if T_pad != T:
        pad = ((0, 0), (0, T_pad - T), (0, 0))
        r3, k3, d3, v3 = (jnp.pad(a, pad) for a in (r3, k3, d3, v3))

    bhb = BH // 2 if (BH % 2 == 0 and BH >= 2) else BH   # megacore: 2 parallel blocks
    u3 = jnp.tile(u[None], (B, 1, 1)).reshape(BH, 1, Dk)

    o = pl.pallas_call(
        functools.partial(_rwkv6_recurrent_kernel, C),
        grid=(BH // bhb, n_chunks),
        in_specs=[
            pl.BlockSpec((bhb, C, Dk), lambda b, c: (b, c, 0)),
            pl.BlockSpec((bhb, C, Dk), lambda b, c: (b, c, 0)),
            pl.BlockSpec((bhb, C, Dk), lambda b, c: (b, c, 0)),
            pl.BlockSpec((bhb, C, Dv), lambda b, c: (b, c, 0)),
            pl.BlockSpec((bhb, 1, Dk), lambda b, c: (b, 0, 0)),
        ],
        out_specs=pl.BlockSpec((bhb, C, Dv), lambda b, c: (b, c, 0)),
        out_shape=jax.ShapeDtypeStruct((BH, T_pad, Dv), F32),
        scratch_shapes=[pltpu.VMEM((bhb, Dk, Dv), F32)],
        compiler_params=pltpu.CompilerParams(
            dimension_semantics=("parallel", "arbitrary"),
            vmem_limit_bytes=_VMEM_LIMIT,
        ),
    )(r3, k3, d3, v3, u3)

    # (BH, T_pad, Dv) -> (M, value_dim)
    return o[:, :T].reshape(B, H, T, Dv).transpose(0, 2, 1, 3).reshape(B * T, Vd)


# --------------------------- fused FFN (+ residual) ---------------------------

def _ffn_kernel(x_ref, d_ref, res_ref, muk_ref, mur_ref, wk_ref, wv_ref, wr_ref, o_ref):
    x = x_ref[...]
    d = d_ref[...]
    k = jnp.dot((x + d * muk_ref[...]).astype(BF16), wk_ref[...],
                preferred_element_type=F32)
    k = jnp.square(jnp.maximum(k, 0.0))                                 # sqrelu
    v = jnp.dot(k.astype(BF16), wv_ref[...], preferred_element_type=F32)
    r = jnp.dot((x + d * mur_ref[...]).astype(BF16), wr_ref[...],
                preferred_element_type=F32)
    o_ref[...] = res_ref[...] + jax.nn.sigmoid(r) * v


def rwkv6_ffn(x2, d2, res2, p):
    M, D = x2.shape
    inter = p["k_w"].shape[1]
    tm = _m_tile(M)
    return pl.pallas_call(
        _ffn_kernel,
        grid=(M // tm,),
        in_specs=[
            _row_spec(tm, D), _row_spec(tm, D), _row_spec(tm, D),
            _const_spec((1, D)), _const_spec((1, D)),
            _const_spec((D, inter)), _const_spec((inter, D)), _const_spec((D, D)),
        ],
        out_specs=_row_spec(tm, D),
        out_shape=jax.ShapeDtypeStruct((M, D), F32),
        compiler_params=_dense_params(),
    )(x2, d2, res2, p["k_mu"], p["r_mu"], p["k_w"], p["v_w"], p["r_w"])


# --------------------------- module-level wrappers -----------------------------

def _token_shift_delta(x):
    # ZeroPad2d((0,0,1,-1)): shifted[:, t] = x[:, t-1], shifted[:, 0] = 0
    T = x.shape[1]
    shifted = jnp.pad(x, ((0, 0), (1, 0), (0, 0)))[:, :T]
    return shifted - x


def rwkv6_attention(xn2, res2, B, T, p, num_heads, eps):
    D = xn2.shape[-1]
    d2 = _token_shift_delta(xn2.reshape(B, T, D)).reshape(B * T, D)
    r, k, decay, v, g = attn_projections(xn2, d2, p)
    o = rwkv6_fused_recurrent(r, k, decay, v, p["bonus"], B, T, num_heads)
    # returns residual + o_proj(groupnorm(o) * swish(g))
    return gn_gate_oproj_residual(o, g, res2, p, num_heads, eps)


def rwkv6_block(x, params, num_heads, eps):
    B, T, D = x.shape
    x2 = x.reshape(B * T, D)
    # pre_norm (norm_first, layer_idx == 0) and attn_norm fused in one pass.
    residual, h = double_layernorm(
        x2, params["pre_norm_w"], params["pre_norm_b"],
        params["attn_norm_w"], params["attn_norm_b"], eps)
    h = rwkv6_attention(h, residual, B, T, params["attn"], num_heads, eps)
    # h == residual + attn_out, which becomes the new residual.
    hn = layernorm(h, params["ffn_norm_w"], params["ffn_norm_b"], eps)
    d2 = _token_shift_delta(hn.reshape(B, T, D)).reshape(B * T, D)
    out = rwkv6_ffn(hn, d2, h, params["ffn"])
    return out.reshape(B, T, D)


# --------------------- deterministic synthetic parameters ---------------------

def init_params(key, D, H, expand_k=0.5, expand_v=1.0, proj_low_rank_dim=8,
                gate_low_rank_dim=16, hidden_ratio=3.5):
    key_dim = int(D * expand_k)
    value_dim = int(D * expand_v)
    Dk = key_dim // H
    R = proj_low_rank_dim
    G = gate_low_rank_dim
    inter = 32 * ((int(D * hidden_ratio) + 31) // 32)

    ks = iter(jax.random.split(key, 40))

    def w(shape, scale=0.02, dtype=F32):
        return (scale * jax.random.normal(next(ks), shape)).astype(dtype)

    attn = dict(
        x_mu=w((1, D), 0.5),
        x_w1=w((D, 5 * R), dtype=BF16),
        x_w2=w((5, R, D), dtype=BF16),        # x_proj[2].weight.view(D, 5, R) re-laid out
        x_bias=w((5, D), 0.1),
        r_w=w((D, key_dim), dtype=BF16),
        k_w=w((D, key_dim), dtype=BF16),
        v_w=w((D, value_dim), dtype=BF16),
        w_a=w((D, G), dtype=BF16), w_b=w((G, key_dim), dtype=BF16),
        w_bias=w((1, key_dim), 0.5),
        g_a=w((D, G), dtype=BF16), g_b=w((G, value_dim), dtype=BF16),
        g_bias=w((1, value_dim), 0.1),
        bonus=w((H, Dk), 0.5),
        gn_w=jnp.ones((value_dim,), F32),
        gn_b=jnp.zeros((value_dim,), F32),
        o_w=w((value_dim, D), dtype=BF16),
    )
    ffn = dict(
        k_mu=w((1, D), 0.5),
        r_mu=w((1, D), 0.5),
        k_w=w((D, inter), dtype=BF16),
        v_w=w((inter, D), dtype=BF16),
        r_w=w((D, D), dtype=BF16),
    )
    return dict(
        pre_norm_w=jnp.ones((D,), F32), pre_norm_b=jnp.zeros((D,), F32),
        attn_norm_w=jnp.ones((D,), F32), attn_norm_b=jnp.zeros((D,), F32),
        ffn_norm_w=jnp.ones((D,), F32), ffn_norm_b=jnp.zeros((D,), F32),
        attn=attn, ffn=ffn,
    )


if __name__ == "__main__":
    B, T, D, H = 2, 8, 64, 2
    eps = 1e-5
    key = jax.random.PRNGKey(0)
    k_params, k_x = jax.random.split(key)
    params = init_params(k_params, D, H)
    x = jax.random.normal(k_x, (B, T, D), F32)

    fwd = jax.jit(functools.partial(rwkv6_block, num_heads=H, eps=eps))
    out = jax.block_until_ready(fwd(x, params))

    assert out.shape == (B, T, D), out.shape
    assert bool(jnp.all(jnp.isfinite(out)))
    print("KERNEL_OK")
</pallas_src>

<mosaic_0001>
module attributes {stable_mosaic.version = 11 : i64} {
  func.func @_double_ln_kernel(%arg0: i32, %arg1: memref<16x64xf32, #tpu.memory_space<vmem>>, %arg2: memref<1x64xf32, #tpu.memory_space<vmem>>, %arg3: memref<1x64xf32, #tpu.memory_space<vmem>>, %arg4: memref<1x64xf32, #tpu.memory_space<vmem>>, %arg5: memref<1x64xf32, #tpu.memory_space<vmem>>, %arg6: memref<16x64xf32, #tpu.memory_space<vmem>>, %arg7: memref<16x64xf32, #tpu.memory_space<vmem>>) attributes {dimension_semantics = [#tpu.dimension_semantics<parallel>], iteration_bounds = array<i64: 1>, scalar_prefetch = 0 : i64, scratch_operands = 0 : i64, tpu.core_type = #tpu.core_type<tc>, window_params = [{transform_indices = @transform_0, window_bounds = array<i64: 16, 64>}, {pipeline_mode = #tpu.pipeline_mode<synchronous>, transform_indices = @transform_1, window_bounds = array<i64: 1, 64>}, {pipeline_mode = #tpu.pipeline_mode<synchronous>, transform_indices = @transform_2, window_bounds = array<i64: 1, 64>}, {pipeline_mode = #tpu.pipeline_mode<synchronous>, transform_indices = @transform_3, window_bounds = array<i64: 1, 64>}, {pipeline_mode = #tpu.pipeline_mode<synchronous>, transform_indices = @transform_4, window_bounds = array<i64: 1, 64>}, {transform_indices = @transform_5, window_bounds = array<i64: 16, 64>}, {transform_indices = @transform_6, window_bounds = array<i64: 16, 64>}]} {
    %c0 = arith.constant 0 : index
    %c0_0 = arith.constant 0 : index
    %0 = vector.load %arg1[%c0, %c0_0] : memref<16x64xf32, #tpu.memory_space<vmem>>, vector<16x64xf32>
    %c0_1 = arith.constant 0 : index
    %c0_2 = arith.constant 0 : index
    %1 = vector.load %arg2[%c0_1, %c0_2] : memref<1x64xf32, #tpu.memory_space<vmem>>, vector<1x64xf32>
    %c0_3 = arith.constant 0 : index
    %c0_4 = arith.constant 0 : index
    %2 = vector.load %arg3[%c0_3, %c0_4] : memref<1x64xf32, #tpu.memory_space<vmem>>, vector<1x64xf32>
    %cst = arith.constant dense<0.000000e+00> : vector<16xf32>
    %3 = vector.multi_reduction <add>, %0, %cst [1] : vector<16x64xf32> to vector<16xf32>
    %4 = vector.shape_cast %3 : vector<16xf32> to vector<16x1xf32>
    %cst_5 = arith.constant 6.400000e+01 : f32
    %5 = vector.broadcast %cst_5 : f32 to vector<16x1xf32>
    %6 = arith.divf %4, %5 : vector<16x1xf32>
    %7 = vector.broadcast %6 : vector<16x1xf32> to vector<16x64xf32>
    %8 = arith.subf %0, %7 : vector<16x64xf32>
    %9 = arith.mulf %8, %8 : vector<16x64xf32>
    %cst_6 = arith.constant dense<0.000000e+00> : vector<16xf32>
    %10 = vector.multi_reduction <add>, %9, %cst_6 [1] : vector<16x64xf32> to vector<16xf32>
    %11 = vector.shape_cast %10 : vector<16xf32> to vector<16x1xf32>
    %cst_7 = arith.constant 6.400000e+01 : f32
    %12 = vector.broadcast %cst_7 : f32 to vector<16x1xf32>
    %13 = arith.divf %11, %12 : vector<16x1xf32>
    %cst_8 = arith.constant 9.99999974E-6 : f32
    %14 = vector.broadcast %cst_8 : f32 to vector<16x1xf32>
    %15 = arith.addf %13, %14 : vector<16x1xf32>
    %16 = math.rsqrt %15 : vector<16x1xf32>
    %17 = vector.broadcast %16 : vector<16x1xf32> to vector<16x64xf32>
    %18 = arith.mulf %8, %17 : vector<16x64xf32>
    %19 = vector.broadcast %1 : vector<1x64xf32> to vector<16x64xf32>
    %20 = arith.mulf %18, %19 : vector<16x64xf32>
    %21 = vector.broadcast %2 : vector<1x64xf32> to vector<16x64xf32>
    %22 = arith.addf %20, %21 : vector<16x64xf32>
    %c0_9 = arith.constant 0 : index
    %c0_10 = arith.constant 0 : index
    %23 = vector.load %arg6[%c0_9, %c0_10] : memref<16x64xf32, #tpu.memory_space<vmem>>, vector<16x64xf32>
    tpu.vector_store %arg6[%c0_9, %c0_10], %22 {strides = array<i32>} : memref<16x64xf32, #tpu.memory_space<vmem>>, vector<16x64xf32>,
    %c0_11 = arith.constant 0 : index
    %c0_12 = arith.constant 0 : index
    %24 = vector.load %arg4[%c0_11, %c0_12] : memref<1x64xf32, #tpu.memory_space<vmem>>, vector<1x64xf32>
    %c0_13 = arith.constant 0 : index
    %c0_14 = arith.constant 0 : index
    %25 = vector.load %arg5[%c0_13, %c0_14] : memref<1x64xf32, #tpu.memory_space<vmem>>, vector<1x64xf32>
    %cst_15 = arith.constant dense<0.000000e+00> : vector<16xf32>
    %26 = vector.multi_reduction <add>, %22, %cst_15 [1] : vector<16x64xf32> to vector<16xf32>
    %27 = vector.shape_cast %26 : vector<16xf32> to vector<16x1xf32>
    %cst_16 = arith.constant 6.400000e+01 : f32
    %28 = vector.broadcast %cst_16 : f32 to vector<16x1xf32>
    %29 = arith.divf %27, %28 : vector<16x1xf32>
    %30 = vector.broadcast %29 : vector<16x1xf32> to vector<16x64xf32>
    %31 = arith.subf %22, %30 : vector<16x64xf32>
    %32 = arith.mulf %31, %31 : vector<16x64xf32>
    %cst_17 = arith.constant dense<0.000000e+00> : vector<16xf32>
    %33 = vector.multi_reduction <add>, %32, %cst_17 [1] : vector<16x64xf32> to vector<16xf32>
    %34 = vector.shape_cast %33 : vector<16xf32> to vector<16x1xf32>
    %cst_18 = arith.constant 6.400000e+01 : f32
    %35 = vector.broadcast %cst_18 : f32 to vector<16x1xf32>
    %36 = arith.divf %34, %35 : vector<16x1xf32>
    %cst_19 = arith.constant 9.99999974E-6 : f32
    %37 = vector.broadcast %cst_19 : f32 to vector<16x1xf32>
    %38 = arith.addf %36, %37 : vector<16x1xf32>
    %39 = math.rsqrt %38 : vector<16x1xf32>
    %40 = vector.broadcast %39 : vector<16x1xf32> to vector<16x64xf32>
    %41 = arith.mulf %31, %40 : vector<16x64xf32>
    %42 = vector.broadcast %24 : vector<1x64xf32> to vector<16x64xf32>
    %43 = arith.mulf %41, %42 : vector<16x64xf32>
    %44 = vector.broadcast %25 : vector<1x64xf32> to vector<16x64xf32>
    %45 = arith.addf %43, %44 : vector<16x64xf32>
    %c0_20 = arith.constant 0 : index
    %c0_21 = arith.constant 0 : index
    %46 = vector.load %arg7[%c0_20, %c0_21] : memref<16x64xf32, #tpu.memory_space<vmem>>, vector<16x64xf32>
    tpu.vector_store %arg7[%c0_20, %c0_21], %45 {strides = array<i32>} : memref<16x64xf32, #tpu.memory_space<vmem>>, vector<16x64xf32>,
    return
  }
  func.func @transform_0(%arg0: i32) -> (i32, i32) {
    %c0_i32 = arith.constant 0 : i32
    %c0_i32_0 = arith.constant 0 : i32
    return %arg0, %c0_i32 : i32, i32
  }
  func.func @transform_1(%arg0: i32) -> (i32, i32) {
    %c0_i32 = arith.constant 0 : i32
    %c0_i32_0 = arith.constant 0 : i32
    %c0_i32_1 = arith.constant 0 : i32
    return %c0_i32, %c0_i32_0 : i32, i32
  }
  func.func @transform_2(%arg0: i32) -> (i32, i32) {
    %c0_i32 = arith.constant 0 : i32
    %c0_i32_0 = arith.constant 0 : i32
    %c0_i32_1 = arith.constant 0 : i32
    return %c0_i32, %c0_i32_0 : i32, i32
  }
  func.func @transform_3(%arg0: i32) -> (i32, i32) {
    %c0_i32 = arith.constant 0 : i32
    %c0_i32_0 = arith.constant 0 : i32
    %c0_i32_1 = arith.constant 0 : i32
    return %c0_i32, %c0_i32_0 : i32, i32
  }
  func.func @transform_4(%arg0: i32) -> (i32, i32) {
    %c0_i32 = arith.constant 0 : i32
    %c0_i32_0 = arith.constant 0 : i32
    %c0_i32_1 = arith.constant 0 : i32
    return %c0_i32, %c0_i32_0 : i32, i32
  }
  func.func @transform_5(%arg0: i32) -> (i32, i32) {
    %c0_i32 = arith.constant 0 : i32
    %c0_i32_0 = arith.constant 0 : i32
    return %arg0, %c0_i32 : i32, i32
  }
  func.func @transform_6(%arg0: i32) -> (i32, i32) {
    %c0_i32 = arith.constant 0 : i32
    %c0_i32_0 = arith.constant 0 : i32
    return %arg0, %c0_i32 : i32, i32
  }
}

module attributes {stable_mosaic.version = 11 : i64} {
  func.func @_attn_proj_kernel(%arg0: i32, %arg1: memref<16x64xf32, #tpu.memory_space<vmem>>, %arg2: memref<16x64xf32, #tpu.memory_space<vmem>>, %arg3: memref<1x64xf32, #tpu.memory_space<vmem>>, %arg4: memref<64x40xbf16, #tpu.memory_space<vmem>>, %arg5: memref<5x8x64xbf16, #tpu.memory_space<vmem>>, %arg6: memref<5x64xf32, #tpu.memory_space<vmem>>, %arg7: memref<64x32xbf16, #tpu.memory_space<vmem>>, %arg8: memref<64x32xbf16, #tpu.memory_space<vmem>>, %arg9: memref<64x64xbf16, #tpu.memory_space<vmem>>, %arg10: memref<64x16xbf16, #tpu.memory_space<vmem>>, %arg11: memref<16x32xbf16, #tpu.memory_space<vmem>>, %arg12: memref<1x32xf32, #tpu.memory_space<vmem>>, %arg13: memref<64x16xbf16, #tpu.memory_space<vmem>>, %arg14: memref<16x64xbf16, #tpu.memory_space<vmem>>, %arg15: memref<1x64xf32, #tpu.memory_space<vmem>>, %arg16: memref<16x32xf32, #tpu.memory_space<vmem>>, %arg17: memref<16x32xf32, #tpu.memory_space<vmem>>, %arg18: memref<16x32xf32, #tpu.memory_space<vmem>>, %arg19: memref<16x64xf32, #tpu.memory_space<vmem>>, %arg20: memref<16x64xf32, #tpu.memory_space<vmem>>) attributes {dimension_semantics = [#tpu.dimension_semantics<parallel>], iteration_bounds = array<i64: 1>, scalar_prefetch = 0 : i64, scratch_operands = 0 : i64, tpu.core_type = #tpu.core_type<tc>, window_params = [{transform_indices = @transform_0, window_bounds = array<i64: 16, 64>}, {transform_indices = @transform_1, window_bounds = array<i64: 16, 64>}, {pipeline_mode = #tpu.pipeline_mode<synchronous>, transform_indices = @transform_2, window_bounds = array<i64: 1, 64>}, {pipeline_mode = #tpu.pipeline_mode<synchronous>, transform_indices = @transform_3, window_bounds = array<i64: 64, 40>}, {pipeline_mode = #tpu.pipeline_mode<synchronous>, transform_indices = @transform_4, window_bounds = array<i64: 5, 8, 64>}, {pipeline_mode = #tpu.pipeline_mode<synchronous>, transform_indices = @transform_5, window_bounds = array<i64: 5, 64>}, {pipeline_mode = #tpu.pipeline_mode<synchronous>, transform_indices = @transform_6, window_bounds = array<i64: 64, 32>}, {pipeline_mode = #tpu.pipeline_mode<synchronous>, transform_indices = @transform_7, window_bounds = array<i64: 64, 32>}, {pipeline_mode = #tpu.pipeline_mode<synchronous>, transform_indices = @transform_8, window_bounds = array<i64: 64, 64>}, {pipeline_mode = #tpu.pipeline_mode<synchronous>, transform_indices = @transform_9, window_bounds = array<i64: 64, 16>}, {pipeline_mode = #tpu.pipeline_mode<synchronous>, transform_indices = @transform_10, window_bounds = array<i64: 16, 32>}, {pipeline_mode = #tpu.pipeline_mode<synchronous>, transform_indices = @transform_11, window_bounds = array<i64: 1, 32>}, {pipeline_mode = #tpu.pipeline_mode<synchronous>, transform_indices = @transform_12, window_bounds = array<i64: 64, 16>}, {pipeline_mode = #tpu.pipeline_mode<synchronous>, transform_indices = @transform_13, window_bounds = array<i64: 16, 64>}, {pipeline_mode = #tpu.pipeline_mode<synchronous>, transform_indices = @transform_14, window_bounds = array<i64: 1, 64>}, {transform_indices = @transform_15, window_bounds = array<i64: 16, 32>}, {transform_indices = @transform_16, window_bounds = array<i64: 16, 32>}, {transform_indices = @transform_17, window_bounds = array<i64: 16, 32>}, {transform_indices = @transform_18, window_bounds = array<i64: 16, 64>}, {transform_indices = @transform_19, window_bounds = array<i64: 16, 64>}]} {
    %c0 = arith.constant 0 : index
    %c0_0 = arith.constant 0 : index
    %0 = vector.load %arg1[%c0, %c0_0] : memref<16x64xf32, #tpu.memory_space<vmem>>, vector<16x64xf32>
    %c0_1 = arith.constant 0 : index
    %c0_2 = arith.constant 0 : index
    %1 = vector.load %arg2[%c0_1, %c0_2] : memref<16x64xf32, #tpu.memory_space<vmem>>, vector<16x64xf32>
    %c0_3 = arith.constant 0 : index
    %c0_4 = arith.constant 0 : index
    %2 = vector.load %arg3[%c0_3, %c0_4] : memref<1x64xf32, #tpu.memory_space<vmem>>, vector<1x64xf32>
    %3 = vector.broadcast %2 : vector<1x64xf32> to vector<16x64xf32>
    %4 = arith.mulf %1, %3 : vector<16x64xf32>
    %5 = arith.addf %0, %4 : vector<16x64xf32>
    %6 = arith.truncf %5 : vector<16x64xf32> to vector<16x64xbf16>
    %c0_5 = arith.constant 0 : index
    %c0_6 = arith.constant 0 : index
    %7 = vector.load %arg4[%c0_5, %c0_6] : memref<64x40xbf16, #tpu.memory_space<vmem>>, vector<64x40xbf16>
    %cst = arith.constant dense<0.000000e+00> : vector<16x40xf32>
    %8 = tpu.matmul %6, %7, %cst {dimension_numbers = #tpu.dot_dimension_numbers<[1], [0], [0], [1], [0, 0, 1, 1], [], []>} : vector<16x64xbf16>, vector<64x40xbf16>, vector<16x40xf32> -> vector<16x40xf32>
    %9 = math.tanh %8 : vector<16x40xf32>
    %c0_7 = arith.constant 0 : index
    %c0_8 = arith.constant 0 : index
    %c0_9 = arith.constant 0 : index
    %10 = vector.load %arg5[%c0_7, %c0_8, %c0_9] : memref<5x8x64xbf16, #tpu.memory_space<vmem>>, vector<5x8x64xbf16>
    %c0_10 = arith.constant 0 : index
    %c0_11 = arith.constant 0 : index
    %11 = vector.load %arg6[%c0_10, %c0_11] : memref<5x64xf32, #tpu.memory_space<vmem>>, vector<5x64xf32>
    %12 = vector.extract_strided_slice %9 {offsets = [0, 0], sizes = [16, 8], strides = [1, 1]} : vector<16x40xf32> to vector<16x8xf32>
    %13 = arith.truncf %12 : vector<16x8xf32> to vector<16x8xbf16>
    %14 = vector.extract_strided_slice %10 {offsets = [0, 0, 0], sizes = [1, 8, 64], strides = [1, 1, 1]} : vector<5x8x64xbf16> to vector<1x8x64xbf16>
    %15 = vector.shape_cast %14 : vector<1x8x64xbf16> to vector<8x64xbf16>
    %cst_12 = arith.constant dense<0.000000e+00> : vector<16x64xf32>
    %16 = tpu.matmul %13, %15, %cst_12 {dimension_numbers = #tpu.dot_dimension_numbers<[1], [0], [0], [1], [0, 0, 1, 1], [], []>} : vector<16x8xbf16>, vector<8x64xbf16>, vector<16x64xf32> -> vector<16x64xf32>
    %17 = vector.extract_strided_slice %11 {offsets = [0, 0], sizes = [1, 64], strides = [1, 1]} : vector<5x64xf32> to vector<1x64xf32>
    %18 = vector.broadcast %17 : vector<1x64xf32> to vector<16x64xf32>
    %19 = arith.addf %16, %18 : vector<16x64xf32>
    %20 = vector.extract_strided_slice %9 {offsets = [0, 8], sizes = [16, 8], strides = [1, 1]} : vector<16x40xf32> to vector<16x8xf32>
    %21 = arith.truncf %20 : vector<16x8xf32> to vector<16x8xbf16>
    %22 = vector.extract_strided_slice %10 {offsets = [1, 0, 0], sizes = [1, 8, 64], strides = [1, 1, 1]} : vector<5x8x64xbf16> to vector<1x8x64xbf16>
    %23 = vector.shape_cast %22 : vector<1x8x64xbf16> to vector<8x64xbf16>
    %cst_13 = arith.constant dense<0.000000e+00> : vector<16x64xf32>
    %24 = tpu.matmul %21, %23, %cst_13 {dimension_numbers = #tpu.dot_dimension_numbers<[1], [0], [0], [1], [0, 0, 1, 1], [], []>} : vector<16x8xbf16>, vector<8x64xbf16>, vector<16x64xf32> -> vector<16x64xf32>
    %25 = vector.extract_strided_slice %11 {offsets = [1, 0], sizes = [1, 64], strides = [1, 1]} : vector<5x64xf32> to vector<1x64xf32>
    %26 = vector.broadcast %25 : vector<1x64xf32> to vector<16x64xf32>
    %27 = arith.addf %24, %26 : vector<16x64xf32>
    %28 = vector.extract_strided_slice %9 {offsets = [0, 16], sizes = [16, 8], strides = [1, 1]} : vector<16x40xf32> to vector<16x8xf32>
    %29 = arith.truncf %28 : vector<16x8xf32> to vector<16x8xbf16>
    %30 = vector.extract_strided_slice %10 {offsets = [2, 0, 0], sizes = [1, 8, 64], strides = [1, 1, 1]} : vector<5x8x64xbf16> to vector<1x8x64xbf16>
    %31 = vector.shape_cast %30 : vector<1x8x64xbf16> to vector<8x64xbf16>
    %cst_14 = arith.constant dense<0.000000e+00> : vector<16x64xf32>
    %32 = tpu.matmul %29, %31, %cst_14 {dimension_numbers = #tpu.dot_dimension_numbers<[1], [0], [0], [1], [0, 0, 1, 1], [], []>} : vector<16x8xbf16>, vector<8x64xbf16>, vector<16x64xf32> -> vector<16x64xf32>
    %33 = vector.extract_strided_slice %11 {offsets = [2, 0], sizes = [1, 64], strides = [1, 1]} : vector<5x64xf32> to vector<1x64xf32>
    %34 = vector.broadcast %33 : vector<1x64xf32> to vector<16x64xf32>
    %35 = arith.addf %32, %34 : vector<16x64xf32>
    %36 = vector.extract_strided_slice %9 {offsets = [0, 24], sizes = [16, 8], strides = [1, 1]} : vector<16x40xf32> to vector<16x8xf32>
    %37 = arith.truncf %36 : vector<16x8xf32> to vector<16x8xbf16>
    %38 = vector.extract_strided_slice %10 {offsets = [3, 0, 0], sizes = [1, 8, 64], strides = [1, 1, 1]} : vector<5x8x64xbf16> to vector<1x8x64xbf16>
    %39 = vector.shape_cast %38 : vector<1x8x64xbf16> to vector<8x64xbf16>
    %cst_15 = arith.constant dense<0.000000e+00> : vector<16x64xf32>
    %40 = tpu.matmul %37, %39, %cst_15 {dimension_numbers = #tpu.dot_dimension_numbers<[1], [0], [0], [1], [0, 0, 1, 1], [], []>} : vector<16x8xbf16>, vector<8x64xbf16>, vector<16x64xf32> -> vector<16x64xf32>
    %41 = vector.extract_strided_slice %11 {offsets = [3, 0], sizes = [1, 64], strides = [1, 1]} : vector<5x64xf32> to vector<1x64xf32>
    %42 = vector.broadcast %41 : vector<1x64xf32> to vector<16x64xf32>
    %43 = arith.addf %40, %42 : vector<16x64xf32>
    %44 = vector.extract_strided_slice %9 {offsets = [0, 32], sizes = [16, 8], strides = [1, 1]} : vector<16x40xf32> to vector<16x8xf32>
    %45 = arith.truncf %44 : vector<16x8xf32> to vector<16x8xbf16>
    %46 = vector.extract_strided_slice %10 {offsets = [4, 0, 0], sizes = [1, 8, 64], strides = [1, 1, 1]} : vector<5x8x64xbf16> to vector<1x8x64xbf16>
    %47 = vector.shape_cast %46 : vector<1x8x64xbf16> to vector<8x64xbf16>
    %cst_16 = arith.constant dense<0.000000e+00> : vector<16x64xf32>
    %48 = tpu.matmul %45, %47, %cst_16 {dimension_numbers = #tpu.dot_dimension_numbers<[1], [0], [0], [1], [0, 0, 1, 1], [], []>} : vector<16x8xbf16>, vector<8x64xbf16>, vector<16x64xf32> -> vector<16x64xf32>
    %49 = vector.extract_strided_slice %11 {offsets = [4, 0], sizes = [1, 64], strides = [1, 1]} : vector<5x64xf32> to vector<1x64xf32>
    %50 = vector.broadcast %49 : vector<1x64xf32> to vector<16x64xf32>
    %51 = arith.addf %48, %50 : vector<16x64xf32>
    %52 = arith.mulf %1, %19 : vector<16x64xf32>
    %53 = arith.addf %0, %52 : vector<16x64xf32>
    %54 = arith.truncf %53 : vector<16x64xf32> to vector<16x64xbf16>
    %c0_17 = arith.constant 0 : index
    %c0_18 = arith.constant 0 : index
    %55 = vector.load %arg7[%c0_17, %c0_18] : memref<64x32xbf16, #tpu.memory_space<vmem>>, vector<64x32xbf16>
    %cst_19 = arith.constant dense<0.000000e+00> : vector<16x32xf32>
    %56 = tpu.matmul %54, %55, %cst_19 {dimension_numbers = #tpu.dot_dimension_numbers<[1], [0], [0], [1], [0, 0, 1, 1], [], []>} : vector<16x64xbf16>, vector<64x32xbf16>, vector<16x32xf32> -> vector<16x32xf32>
    %c0_20 = arith.constant 0 : index
    %c0_21 = arith.constant 0 : index
    %57 = vector.load %arg16[%c0_20, %c0_21] : memref<16x32xf32, #tpu.memory_space<vmem>>, vector<16x32xf32>
    tpu.vector_store %arg16[%c0_20, %c0_21], %56 {strides = array<i32>} : memref<16x32xf32, #tpu.memory_space<vmem>>, vector<16x32xf32>,
    %58 = arith.mulf %1, %35 : vector<16x64xf32>
    %59 = arith.addf %0, %58 : vector<16x64xf32>
    %60 = arith.truncf %59 : vector<16x64xf32> to vector<16x64xbf16>
    %c0_22 = arith.constant 0 : index
    %c0_23 = arith.constant 0 : index
    %61 = vector.load %arg8[%c0_22, %c0_23] : memref<64x32xbf16, #tpu.memory_space<vmem>>, vector<64x32xbf16>
    %cst_24 = arith.constant dense<0.000000e+00> : vector<16x32xf32>
    %62 = tpu.matmul %60, %61, %cst_24 {dimension_numbers = #tpu.dot_dimension_numbers<[1], [0], [0], [1], [0, 0, 1, 1], [], []>} : vector<16x64xbf16>, vector<64x32xbf16>, vector<16x32xf32> -> vector<16x32xf32>
    %c0_25 = arith.constant 0 : index
    %c0_26 = arith.constant 0 : index
    %63 = vector.load %arg17[%c0_25, %c0_26] : memref<16x32xf32, #tpu.memory_space<vmem>>, vector<16x32xf32>
    tpu.vector_store %arg17[%c0_25, %c0_26], %62 {strides = array<i32>} : memref<16x32xf32, #tpu.memory_space<vmem>>, vector<16x32xf32>,
    %64 = arith.mulf %1, %43 : vector<16x64xf32>
    %65 = arith.addf %0, %64 : vector<16x64xf32>
    %66 = arith.truncf %65 : vector<16x64xf32> to vector<16x64xbf16>
    %c0_27 = arith.constant 0 : index
    %c0_28 = arith.constant 0 : index
    %67 = vector.load %arg9[%c0_27, %c0_28] : memref<64x64xbf16, #tpu.memory_space<vmem>>, vector<64x64xbf16>
    %cst_29 = arith.constant dense<0.000000e+00> : vector<16x64xf32>
    %68 = tpu.matmul %66, %67, %cst_29 {dimension_numbers = #tpu.dot_dimension_numbers<[1], [0], [0], [1], [0, 0, 1, 1], [], []>} : vector<16x64xbf16>, vector<64x64xbf16>, vector<16x64xf32> -> vector<16x64xf32>
    %c0_30 = arith.constant 0 : index
    %c0_31 = arith.constant 0 : index
    %69 = vector.load %arg19[%c0_30, %c0_31] : memref<16x64xf32, #tpu.memory_space<vmem>>, vector<16x64xf32>
    tpu.vector_store %arg19[%c0_30, %c0_31], %68 {strides = array<i32>} : memref<16x64xf32, #tpu.memory_space<vmem>>, vector<16x64xf32>,
    %70 = arith.mulf %1, %27 : vector<16x64xf32>
    %71 = arith.addf %0, %70 : vector<16x64xf32>
    %72 = arith.truncf %71 : vector<16x64xf32> to vector<16x64xbf16>
    %c0_32 = arith.constant 0 : index
    %c0_33 = arith.constant 0 : index
    %73 = vector.load %arg10[%c0_32, %c0_33] : memref<64x16xbf16, #tpu.memory_space<vmem>>, vector<64x16xbf16>
    %cst_34 = arith.constant dense<0.000000e+00> : vector<16x16xf32>
    %74 = tpu.matmul %72, %73, %cst_34 {dimension_numbers = #tpu.dot_dimension_numbers<[1], [0], [0], [1], [0, 0, 1, 1], [], []>} : vector<16x64xbf16>, vector<64x16xbf16>, vector<16x16xf32> -> vector<16x16xf32>
    %75 = math.tanh %74 : vector<16x16xf32>
    %76 = arith.truncf %75 : vector<16x16xf32> to vector<16x16xbf16>
    %c0_35 = arith.constant 0 : index
    %c0_36 = arith.constant 0 : index
    %77 = vector.load %arg11[%c0_35, %c0_36] : memref<16x32xbf16, #tpu.memory_space<vmem>>, vector<16x32xbf16>
    %cst_37 = arith.constant dense<0.000000e+00> : vector<16x32xf32>
    %78 = tpu.matmul %76, %77, %cst_37 {dimension_numbers = #tpu.dot_dimension_numbers<[1], [0], [0], [1], [0, 0, 1, 1], [], []>} : vector<16x16xbf16>, vector<16x32xbf16>, vector<16x32xf32> -> vector<16x32xf32>
    %c0_38 = arith.constant 0 : index
    %c0_39 = arith.constant 0 : index
    %79 = vector.load %arg12[%c0_38, %c0_39] : memref<1x32xf32, #tpu.memory_space<vmem>>, vector<1x32xf32>
    %80 = vector.broadcast %79 : vector<1x32xf32> to vector<16x32xf32>
    %81 = arith.addf %78, %80 : vector<16x32xf32>
    %82 = math.exp %81 : vector<16x32xf32>
    %cst_40 = arith.constant 0.000000e+00 : f32
    %83 = vector.broadcast %cst_40 : f32 to vector<16x32xf32>
    %84 = arith.subf %83, %82 : vector<16x32xf32>
    %85 = math.exp %84 : vector<16x32xf32>
    %c0_41 = arith.constant 0 : index
    %c0_42 = arith.constant 0 : index
    %86 = vector.load %arg18[%c0_41, %c0_42] : memref<16x32xf32, #tpu.memory_space<vmem>>, vector<16x32xf32>
    tpu.vector_store %arg18[%c0_41, %c0_42], %85 {strides = array<i32>} : memref<16x32xf32, #tpu.memory_space<vmem>>, vector<16x32xf32>,
    %87 = arith.mulf %1, %51 : vector<16x64xf32>
    %88 = arith.addf %0, %87 : vector<16x64xf32>
    %89 = arith.truncf %88 : vector<16x64xf32> to vector<16x64xbf16>
    %c0_43 = arith.constant 0 : index
    %c0_44 = arith.constant 0 : index
    %90 = vector.load %arg13[%c0_43, %c0_44] : memref<64x16xbf16, #tpu.memory_space<vmem>>, vector<64x16xbf16>
    %cst_45 = arith.constant dense<0.000000e+00> : vector<16x16xf32>
    %91 = tpu.matmul %89, %90, %cst_45 {dimension_numbers = #tpu.dot_dimension_numbers<[1], [0], [0], [1], [0, 0, 1, 1], [], []>} : vector<16x64xbf16>, vector<64x16xbf16>, vector<16x16xf32> -> vector<16x16xf32>
    %92 = math.tanh %91 : vector<16x16xf32>
    %93 = arith.truncf %92 : vector<16x16xf32> to vector<16x16xbf16>
    %c0_46 = arith.constant 0 : index
    %c0_47 = arith.constant 0 : index
    %94 = vector.load %arg14[%c0_46, %c0_47] : memref<16x64xbf16, #tpu.memory_space<vmem>>, vector<16x64xbf16>
    %cst_48 = arith.constant dense<0.000000e+00> : vector<16x64xf32>
    %95 = tpu.matmul %93, %94, %cst_48 {dimension_numbers = #tpu.dot_dimension_numbers<[1], [0], [0], [1], [0, 0, 1, 1], [], []>} : vector<16x16xbf16>, vector<16x64xbf16>, vector<16x64xf32> -> vector<16x64xf32>
    %c0_49 = arith.constant 0 : index
    %c0_50 = arith.constant 0 : index
    %96 = vector.load %arg15[%c0_49, %c0_50] : memref<1x64xf32, #tpu.memory_space<vmem>>, vector<1x64xf32>
    %97 = vector.broadcast %96 : vector<1x64xf32> to vector<16x64xf32>
    %98 = arith.addf %95, %97 : vector<16x64xf32>
    %c0_51 = arith.constant 0 : index
    %c0_52 = arith.constant 0 : index
    %99 = vector.load %arg20[%c0_51, %c0_52] : memref<16x64xf32, #tpu.memory_space<vmem>>, vector<16x64xf32>
    tpu.vector_store %arg20[%c0_51, %c0_52], %98 {strides = array<i32>} : memref<16x64xf32, #tpu.memory_space<vmem>>, vector<16x64xf32>,
    return
  }
  func.func @transform_0(%arg0: i32) -> (i32, i32) {
    %c0_i32 = arith.constant 0 : i32
    %c0_i32_0 = arith.constant 0 : i32
    return %arg0, %c0_i32 : i32, i32
  }
  func.func @transform_1(%arg0: i32) -> (i32, i32) {
    %c0_i32 = arith.constant 0 : i32
    %c0_i32_0 = arith.constant 0 : i32
    return %arg0, %c0_i32 : i32, i32
  }
  func.func @transform_2(%arg0: i32) -> (i32, i32) {
    %c0_i32 = arith.constant 0 : i32
    %c0_i32_0 = arith.constant 0 : i32
    %c0_i32_1 = arith.constant 0 : i32
    return %c0_i32, %c0_i32_0 : i32, i32
  }
  func.func @transform_3(%arg0: i32) -> (i32, i32) {
    %c0_i32 = arith.constant 0 : i32
    %c0_i32_0 = arith.constant 0 : i32
    %c0_i32_1 = arith.constant 0 : i32
    return %c0_i32, %c0_i32_0 : i32, i32
  }
  func.func @transform_4(%arg0: i32) -> (i32, i32, i32) {
    %c0_i32 = arith.constant 0 : i32
    %c0_i32_0 = arith.constant 0 : i32
    %c0_i32_1 = arith.constant 0 : i32
    %c0_i32_2 = arith.constant 0 : i32
    return %c0_i32, %c0_i32_0, %c0_i32_1 : i32, i32, i32
  }
  func.func @transform_5(%arg0: i32) -> (i32, i32) {
    %c0_i32 = arith.constant 0 : i32
    %c0_i32_0 = arith.constant 0 : i32
    %c0_i32_1 = arith.constant 0 : i32
    return %c0_i32, %c0_i32_0 : i32, i32
  }
  func.func @transform_6(%arg0: i32) -> (i32, i32) {
    %c0_i32 = arith.constant 0 : i32
    %c0_i32_0 = arith.constant 0 : i32
    %c0_i32_1 = arith.constant 0 : i32
    return %c0_i32, %c0_i32_0 : i32, i32
  }
  func.func @transform_7(%arg0: i32) -> (i32, i32) {
    %c0_i32 = arith.constant 0 : i32
    %c0_i32_0 = arith.constant 0 : i32
    %c0_i32_1 = arith.constant 0 : i32
    return %c0_i32, %c0_i32_0 : i32, i32
  }
  func.func @transform_8(%arg0: i32) -> (i32, i32) {
    %c0_i32 = arith.constant 0 : i32
    %c0_i32_0 = arith.constant 0 : i32
    %c0_i32_1 = arith.constant 0 : i32
    return %c0_i32, %c0_i32_0 : i32, i32
  }
  func.func @transform_9(%arg0: i32) -> (i32, i32) {
    %c0_i32 = arith.constant 0 : i32
    %c0_i32_0 = arith.constant 0 : i32
    %c0_i32_1 = arith.constant 0 : i32
    return %c0_i32, %c0_i32_0 : i32, i32
  }
  func.func @transform_10(%arg0: i32) -> (i32, i32) {
    %c0_i32 = arith.constant 0 : i32
    %c0_i32_0 = arith.constant 0 : i32
    %c0_i32_1 = arith.constant 0 : i32
    return %c0_i32, %c0_i32_0 : i32, i32
  }
  func.func @transform_11(%arg0: i32) -> (i32, i32) {
    %c0_i32 = arith.constant 0 : i32
    %c0_i32_0 = arith.constant 0 : i32
    %c0_i32_1 = arith.constant 0 : i32
    return %c0_i32, %c0_i32_0 : i32, i32
  }
  func.func @transform_12(%arg0: i32) -> (i32, i32) {
    %c0_i32 = arith.constant 0 : i32
    %c0_i32_0 = arith.constant 0 : i32
    %c0_i32_1 = arith.constant 0 : i32
    return %c0_i32, %c0_i32_0 : i32, i32
  }
  func.func @transform_13(%arg0: i32) -> (i32, i32) {
    %c0_i32 = arith.constant 0 : i32
    %c0_i32_0 = arith.constant 0 : i32
    %c0_i32_1 = arith.constant 0 : i32
    return %c0_i32, %c0_i32_0 : i32, i32
  }
  func.func @transform_14(%arg0: i32) -> (i32, i32) {
    %c0_i32 = arith.constant 0 : i32
    %c0_i32_0 = arith.constant 0 : i32
    %c0_i32_1 = arith.constant 0 : i32
    return %c0_i32, %c0_i32_0 : i32, i32
  }
  func.func @transform_15(%arg0: i32) -> (i32, i32) {
    %c0_i32 = arith.constant 0 : i32
    %c0_i32_0 = arith.constant 0 : i32
    return %arg0, %c0_i32 : i32, i32
  }
  func.func @transform_16(%arg0: i32) -> (i32, i32) {
    %c0_i32 = arith.constant 0 : i32
    %c0_i32_0 = arith.constant 0 : i32
    return %arg0, %c0_i32 : i32, i32
  }
  func.func @transform_17(%arg0: i32) -> (i32, i32) {
    %c0_i32 = arith.constant 0 : i32
    %c0_i32_0 = arith.constant 0 : i32
    return %arg0, %c0_i32 : i32, i32
  }
  func.func @transform_18(%arg0: i32) -> (i32, i32) {
    %c0_i32 = arith.constant 0 : i32
    %c0_i32_0 = arith.constant 0 : i32
    return %arg0, %c0_i32 : i32, i32
  }
  func.func @transform_19(%arg0: i32) -> (i32, i32) {
    %c0_i32 = arith.constant 0 : i32
    %c0_i32_0 = arith.constant 0 : i32
    return %arg0, %c0_i32 : i32, i32
  }
}

module attributes {stable_mosaic.version = 11 : i64} {
  func.func @_rwkv6_recurrent_kernel(%arg0: i32, %arg1: i32, %arg2: memref<2x8x16xf32, #tpu.memory_space<vmem>>, %arg3: memref<2x8x16xf32, #tpu.memory_space<vmem>>, %arg4: memref<2x8x16xf32, #tpu.memory_space<vmem>>, %arg5: memref<2x8x32xf32, #tpu.memory_space<vmem>>, %arg6: memref<2x1x16xf32, #tpu.memory_space<vmem>>, %arg7: memref<2x8x32xf32, #tpu.memory_space<vmem>>, %arg8: memref<2x16x32xf32, #tpu.memory_space<vmem>>) attributes {dimension_semantics = [#tpu.dimension_semantics<parallel>, #tpu.dimension_semantics<arbitrary>], iteration_bounds = array<i64: 2, 1>, scalar_prefetch = 0 : i64, scratch_operands = 1 : i64, tpu.core_type = #tpu.core_type<tc>, window_params = [{transform_indices = @transform_0, window_bounds = array<i64: 2, 8, 16>}, {transform_indices = @transform_1, window_bounds = array<i64: 2, 8, 16>}, {transform_indices = @transform_2, window_bounds = array<i64: 2, 8, 16>}, {transform_indices = @transform_3, window_bounds = array<i64: 2, 8, 32>}, {transform_indices = @transform_4, window_bounds = array<i64: 2, 1, 16>}, {transform_indices = @transform_5, window_bounds = array<i64: 2, 8, 32>}]} {
    %c0_i32 = arith.constant 0 : i32
    %0 = arith.cmpi eq, %arg1, %c0_i32 : i32
    %1 = arith.extui %0 : i1 to i32
    %c0_i32_0 = arith.constant 0 : i32
    %2 = arith.cmpi ne, %1, %c0_i32_0 : i32
    scf.if %2 {
      %cst_137 = arith.constant 0.000000e+00 : f32
      %247 = vector.broadcast %cst_137 : f32 to vector<2x16x32xf32>
      %c0_138 = arith.constant 0 : index
      %c0_139 = arith.constant 0 : index
      %c0_140 = arith.constant 0 : index
      %248 = vector.load %arg8[%c0_138, %c0_139, %c0_140] : memref<2x16x32xf32, #tpu.memory_space<vmem>>, vector<2x16x32xf32>
      tpu.vector_store %arg8[%c0_138, %c0_139, %c0_140], %247 {strides = array<i32>} : memref<2x16x32xf32, #tpu.memory_space<vmem>>, vector<2x16x32xf32>,
    } else {
    }
    %c0 = arith.constant 0 : index
    %c0_1 = arith.constant 0 : index
    %c0_2 = arith.constant 0 : index
    %3 = vector.load %arg6[%c0, %c0_1, %c0_2] : memref<2x1x16xf32, #tpu.memory_space<vmem>>, vector<2x1x16xf32>
    %4 = vector.shape_cast %3 : vector<2x1x16xf32> to vector<2x16xf32>
    %c0_3 = arith.constant 0 : index
    %c0_4 = arith.constant 0 : index
    %c0_5 = arith.constant 0 : index
    %5 = vector.load %arg8[%c0_3, %c0_4, %c0_5] : memref<2x16x32xf32, #tpu.memory_space<vmem>>, vector<2x16x32xf32>
    %c0_6 = arith.constant 0 : index
    %c0_7 = arith.constant 0 : index
    %c0_8 = arith.constant 0 : index
    %6 = vector.load %arg2[%c0_6, %c0_7, %c0_8] : memref<2x8x16xf32, #tpu.memory_space<vmem>>, vector<2x1x16xf32>
    %7 = vector.shape_cast %6 : vector<2x1x16xf32> to vector<2x16xf32>
    %c0_9 = arith.constant 0 : index
    %c0_10 = arith.constant 0 : index
    %c0_11 = arith.constant 0 : index
    %8 = vector.load %arg3[%c0_9, %c0_10, %c0_11] : memref<2x8x16xf32, #tpu.memory_space<vmem>>, vector<2x1x16xf32>
    %9 = vector.shape_cast %8 : vector<2x1x16xf32> to vector<2x16xf32>
    %c0_12 = arith.constant 0 : index
    %c0_13 = arith.constant 0 : index
    %c0_14 = arith.constant 0 : index
    %10 = vector.load %arg4[%c0_12, %c0_13, %c0_14] : memref<2x8x16xf32, #tpu.memory_space<vmem>>, vector<2x1x16xf32>
    %11 = vector.shape_cast %10 : vector<2x1x16xf32> to vector<2x16xf32>
    %c0_15 = arith.constant 0 : index
    %c0_16 = arith.constant 0 : index
    %c0_17 = arith.constant 0 : index
    %12 = vector.load %arg5[%c0_15, %c0_16, %c0_17] : memref<2x8x32xf32, #tpu.memory_space<vmem>>, vector<2x1x32xf32>
    %13 = vector.shape_cast %12 : vector<2x1x32xf32> to vector<2x32xf32>
    %14 = arith.mulf %7, %4 : vector<2x16xf32>
    %15 = arith.mulf %14, %9 : vector<2x16xf32>
    %cst = arith.constant dense<0.000000e+00> : vector<2xf32>
    %16 = vector.multi_reduction <add>, %15, %cst [1] : vector<2x16xf32> to vector<2xf32>
    %17 = vector.shape_cast %16 : vector<2xf32> to vector<2x1xf32>
    %18 = vector.shape_cast %7 : vector<2x16xf32> to vector<2x16x1xf32>
    %19 = vector.broadcast %18 : vector<2x16x1xf32> to vector<2x16x32xf32>
    %20 = arith.mulf %19, %5 : vector<2x16x32xf32>
    %cst_18 = arith.constant dense<0.000000e+00> : vector<2x32xf32>
    %21 = vector.multi_reduction <add>, %20, %cst_18 [1] : vector<2x16x32xf32> to vector<2x32xf32>
    %22 = vector.broadcast %17 : vector<2x1xf32> to vector<2x32xf32>
    %23 = arith.mulf %22, %13 : vector<2x32xf32>
    %24 = arith.addf %21, %23 : vector<2x32xf32>
    %25 = vector.shape_cast %24 : vector<2x32xf32> to vector<2x1x32xf32>
    %c0_19 = arith.constant 0 : index
    %c0_20 = arith.constant 0 : index
    %c0_21 = arith.constant 0 : index
    %26 = vector.load %arg7[%c0_19, %c0_20, %c0_21] : memref<2x8x32xf32, #tpu.memory_space<vmem>>, vector<2x1x32xf32>
    tpu.vector_store %arg7[%c0_19, %c0_20, %c0_21], %25 {strides = array<i32>} : memref<2x8x32xf32, #tpu.memory_space<vmem>>, vector<2x1x32xf32>,
    %27 = vector.shape_cast %11 : vector<2x16xf32> to vector<2x16x1xf32>
    %28 = vector.broadcast %27 : vector<2x16x1xf32> to vector<2x16x32xf32>
    %29 = arith.mulf %28, %5 : vector<2x16x32xf32>
    %30 = vector.shape_cast %9 : vector<2x16xf32> to vector<2x16x1xf32>
    %31 = vector.shape_cast %13 : vector<2x32xf32> to vector<2x1x32xf32>
    %32 = vector.broadcast %30 : vector<2x16x1xf32> to vector<2x16x32xf32>
    %33 = vector.broadcast %31 : vector<2x1x32xf32> to vector<2x16x32xf32>
    %34 = arith.mulf %32, %33 : vector<2x16x32xf32>
    %35 = arith.addf %29, %34 : vector<2x16x32xf32>
    %c0_22 = arith.constant 0 : index
    %c1 = arith.constant 1 : index
    %c0_23 = arith.constant 0 : index
    %36 = vector.load %arg2[%c0_22, %c1, %c0_23] : memref<2x8x16xf32, #tpu.memory_space<vmem>>, vector<2x1x16xf32>
    %37 = vector.shape_cast %36 : vector<2x1x16xf32> to vector<2x16xf32>
    %c0_24 = arith.constant 0 : index
    %c1_25 = arith.constant 1 : index
    %c0_26 = arith.constant 0 : index
    %38 = vector.load %arg3[%c0_24, %c1_25, %c0_26] : memref<2x8x16xf32, #tpu.memory_space<vmem>>, vector<2x1x16xf32>
    %39 = vector.shape_cast %38 : vector<2x1x16xf32> to vector<2x16xf32>
    %c0_27 = arith.constant 0 : index
    %c1_28 = arith.constant 1 : index
    %c0_29 = arith.constant 0 : index
    %40 = vector.load %arg4[%c0_27, %c1_28, %c0_29] : memref<2x8x16xf32, #tpu.memory_space<vmem>>, vector<2x1x16xf32>
    %41 = vector.shape_cast %40 : vector<2x1x16xf32> to vector<2x16xf32>
    %c0_30 = arith.constant 0 : index
    %c1_31 = arith.constant 1 : index
    %c0_32 = arith.constant 0 : index
    %42 = vector.load %arg5[%c0_30, %c1_31, %c0_32] : memref<2x8x32xf32, #tpu.memory_space<vmem>>, vector<2x1x32xf32>
    %43 = vector.shape_cast %42 : vector<2x1x32xf32> to vector<2x32xf32>
    %44 = arith.mulf %37, %4 : vector<2x16xf32>
    %45 = arith.mulf %44, %39 : vector<2x16xf32>
    %cst_33 = arith.constant dense<0.000000e+00> : vector<2xf32>
    %46 = vector.multi_reduction <add>, %45, %cst_33 [1] : vector<2x16xf32> to vector<2xf32>
    %47 = vector.shape_cast %46 : vector<2xf32> to vector<2x1xf32>
    %48 = vector.shape_cast %37 : vector<2x16xf32> to vector<2x16x1xf32>
    %49 = vector.broadcast %48 : vector<2x16x1xf32> to vector<2x16x32xf32>
    %50 = arith.mulf %49, %35 : vector<2x16x32xf32>
    %cst_34 = arith.constant dense<0.000000e+00> : vector<2x32xf32>
    %51 = vector.multi_reduction <add>, %50, %cst_34 [1] : vector<2x16x32xf32> to vector<2x32xf32>
    %52 = vector.broadcast %47 : vector<2x1xf32> to vector<2x32xf32>
    %53 = arith.mulf %52, %43 : vector<2x32xf32>
    %54 = arith.addf %51, %53 : vector<2x32xf32>
    %55 = vector.shape_cast %54 : vector<2x32xf32> to vector<2x1x32xf32>
    %c0_35 = arith.constant 0 : index
    %c1_36 = arith.constant 1 : index
    %c0_37 = arith.constant 0 : index
    %56 = vector.load %arg7[%c0_35, %c1_36, %c0_37] : memref<2x8x32xf32, #tpu.memory_space<vmem>>, vector<2x1x32xf32>
    tpu.vector_store %arg7[%c0_35, %c1_36, %c0_37], %55 {strides = array<i32>} : memref<2x8x32xf32, #tpu.memory_space<vmem>>, vector<2x1x32xf32>,
    %57 = vector.shape_cast %41 : vector<2x16xf32> to vector<2x16x1xf32>
    %58 = vector.broadcast %57 : vector<2x16x1xf32> to vector<2x16x32xf32>
    %59 = arith.mulf %58, %35 : vector<2x16x32xf32>
    %60 = vector.shape_cast %39 : vector<2x16xf32> to vector<2x16x1xf32>
    %61 = vector.shape_cast %43 : vector<2x32xf32> to vector<2x1x32xf32>
    %62 = vector.broadcast %60 : vector<2x16x1xf32> to vector<2x16x32xf32>
    %63 = vector.broadcast %61 : vector<2x1x32xf32> to vector<2x16x32xf32>
    %64 = arith.mulf %62, %63 : vector<2x16x32xf32>
    %65 = arith.addf %59, %64 : vector<2x16x32xf32>
    %c0_38 = arith.constant 0 : index
    %c2 = arith.constant 2 : index
    %c0_39 = arith.constant 0 : index
    %66 = vector.load %arg2[%c0_38, %c2, %c0_39] : memref<2x8x16xf32, #tpu.memory_space<vmem>>, vector<2x1x16xf32>
    %67 = vector.shape_cast %66 : vector<2x1x16xf32> to vector<2x16xf32>
    %c0_40 = arith.constant 0 : index
    %c2_41 = arith.constant 2 : index
    %c0_42 = arith.constant 0 : index
    %68 = vector.load %arg3[%c0_40, %c2_41, %c0_42] : memref<2x8x16xf32, #tpu.memory_space<vmem>>, vector<2x1x16xf32>
    %69 = vector.shape_cast %68 : vector<2x1x16xf32> to vector<2x16xf32>
    %c0_43 = arith.constant 0 : index
    %c2_44 = arith.constant 2 : index
    %c0_45 = arith.constant 0 : index
    %70 = vector.load %arg4[%c0_43, %c2_44, %c0_45] : memref<2x8x16xf32, #tpu.memory_space<vmem>>, vector<2x1x16xf32>
    %71 = vector.shape_cast %70 : vector<2x1x16xf32> to vector<2x16xf32>
    %c0_46 = arith.constant 0 : index
    %c2_47 = arith.constant 2 : index
    %c0_48 = arith.constant 0 : index
    %72 = vector.load %arg5[%c0_46, %c2_47, %c0_48] : memref<2x8x32xf32, #tpu.memory_space<vmem>>, vector<2x1x32xf32>
    %73 = vector.shape_cast %72 : vector<2x1x32xf32> to vector<2x32xf32>
    %74 = arith.mulf %67, %4 : vector<2x16xf32>
    %75 = arith.mulf %74, %69 : vector<2x16xf32>
    %cst_49 = arith.constant dense<0.000000e+00> : vector<2xf32>
    %76 = vector.multi_reduction <add>, %75, %cst_49 [1] : vector<2x16xf32> to vector<2xf32>
    %77 = vector.shape_cast %76 : vector<2xf32> to vector<2x1xf32>
    %78 = vector.shape_cast %67 : vector<2x16xf32> to vector<2x16x1xf32>
    %79 = vector.broadcast %78 : vector<2x16x1xf32> to vector<2x16x32xf32>
    %80 = arith.mulf %79, %65 : vector<2x16x32xf32>
    %cst_50 = arith.constant dense<0.000000e+00> : vector<2x32xf32>
    %81 = vector.multi_reduction <add>, %80, %cst_50 [1] : vector<2x16x32xf32> to vector<2x32xf32>
    %82 = vector.broadcast %77 : vector<2x1xf32> to vector<2x32xf32>
    %83 = arith.mulf %82, %73 : vector<2x32xf32>
    %84 = arith.addf %81, %83 : vector<2x32xf32>
    %85 = vector.shape_cast %84 : vector<2x32xf32> to vector<2x1x32xf32>
    %c0_51 = arith.constant 0 : index
    %c2_52 = arith.constant 2 : index
    %c0_53 = arith.constant 0 : index
    %86 = vector.load %arg7[%c0_51, %c2_52, %c0_53] : memref<2x8x32xf32, #tpu.memory_space<vmem>>, vector<2x1x32xf32>
    tpu.vector_store %arg7[%c0_51, %c2_52, %c0_53], %85 {strides = array<i32>} : memref<2x8x32xf32, #tpu.memory_space<vmem>>, vector<2x1x32xf32>,
    %87 = vector.shape_cast %71 : vector<2x16xf32> to vector<2x16x1xf32>
    %88 = vector.broadcast %87 : vector<2x16x1xf32> to vector<2x16x32xf32>
    %89 = arith.mulf %88, %65 : vector<2x16x32xf32>
    %90 = vector.shape_cast %69 : vector<2x16xf32> to vector<2x16x1xf32>
    %91 = vector.shape_cast %73 : vector<2x32xf32> to vector<2x1x32xf32>
    %92 = vector.broadcast %90 : vector<2x16x1xf32> to vector<2x16x32xf32>
    %93 = vector.broadcast %91 : vector<2x1x32xf32> to vector<2x16x32xf32>
    %94 = arith.mulf %92, %93 : vector<2x16x32xf32>
    %95 = arith.addf %89, %94 : vector<2x16x32xf32>
    %c0_54 = arith.constant 0 : index
    %c3 = arith.constant 3 : index
    %c0_55 = arith.constant 0 : index
    %96 = vector.load %arg2[%c0_54, %c3, %c0_55] : memref<2x8x16xf32, #tpu.memory_space<vmem>>, vector<2x1x16xf32>
    %97 = vector.shape_cast %96 : vector<2x1x16xf32> to vector<2x16xf32>
    %c0_56 = arith.constant 0 : index
    %c3_57 = arith.constant 3 : index
    %c0_58 = arith.constant 0 : index
    %98 = vector.load %arg3[%c0_56, %c3_57, %c0_58] : memref<2x8x16xf32, #tpu.memory_space<vmem>>, vector<2x1x16xf32>
    %99 = vector.shape_cast %98 : vector<2x1x16xf32> to vector<2x16xf32>
    %c0_59 = arith.constant 0 : index
    %c3_60 = arith.constant 3 : index
    %c0_61 = arith.constant 0 : index
    %100 = vector.load %arg4[%c0_59, %c3_60, %c0_61] : memref<2x8x16xf32, #tpu.memory_space<vmem>>, vector<2x1x16xf32>
    %101 = vector.shape_cast %100 : vector<2x1x16xf32> to vector<2x16xf32>
    %c0_62 = arith.constant 0 : index
    %c3_63 = arith.constant 3 : index
    %c0_64 = arith.constant 0 : index
    %102 = vector.load %arg5[%c0_62, %c3_63, %c0_64] : memref<2x8x32xf32, #tpu.memory_space<vmem>>, vector<2x1x32xf32>
    %103 = vector.shape_cast %102 : vector<2x1x32xf32> to vector<2x32xf32>
    %104 = arith.mulf %97, %4 : vector<2x16xf32>
    %105 = arith.mulf %104, %99 : vector<2x16xf32>
    %cst_65 = arith.constant dense<0.000000e+00> : vector<2xf32>
    %106 = vector.multi_reduction <add>, %105, %cst_65 [1] : vector<2x16xf32> to vector<2xf32>
    %107 = vector.shape_cast %106 : vector<2xf32> to vector<2x1xf32>
    %108 = vector.shape_cast %97 : vector<2x16xf32> to vector<2x16x1xf32>
    %109 = vector.broadcast %108 : vector<2x16x1xf32> to vector<2x16x32xf32>
    %110 = arith.mulf %109, %95 : vector<2x16x32xf32>
    %cst_66 = arith.constant dense<0.000000e+00> : vector<2x32xf32>
    %111 = vector.multi_reduction <add>, %110, %cst_66 [1] : vector<2x16x32xf32> to vector<2x32xf32>
    %112 = vector.broadcast %107 : vector<2x1xf32> to vector<2x32xf32>
    %113 = arith.mulf %112, %103 : vector<2x32xf32>
    %114 = arith.addf %111, %113 : vector<2x32xf32>
    %115 = vector.shape_cast %114 : vector<2x32xf32> to vector<2x1x32xf32>
    %c0_67 = arith.constant 0 : index
    %c3_68 = arith.constant 3 : index
    %c0_69 = arith.constant 0 : index
    %116 = vector.load %arg7[%c0_67, %c3_68, %c0_69] : memref<2x8x32xf32, #tpu.memory_space<vmem>>, vector<2x1x32xf32>
    tpu.vector_store %arg7[%c0_67, %c3_68, %c0_69], %115 {strides = array<i32>} : memref<2x8x32xf32, #tpu.memory_space<vmem>>, vector<2x1x32xf32>,
    %117 = vector.shape_cast %101 : vector<2x16xf32> to vector<2x16x1xf32>
    %118 = vector.broadcast %117 : vector<2x16x1xf32> to vector<2x16x32xf32>
    %119 = arith.mulf %118, %95 : vector<2x16x32xf32>
    %120 = vector.shape_cast %99 : vector<2x16xf32> to vector<2x16x1xf32>
    %121 = vector.shape_cast %103 : vector<2x32xf32> to vector<2x1x32xf32>
    %122 = vector.broadcast %120 : vector<2x16x1xf32> to vector<2x16x32xf32>
    %123 = vector.broadcast %121 : vector<2x1x32xf32> to vector<2x16x32xf32>
    %124 = arith.mulf %122, %123 : vector<2x16x32xf32>
    %125 = arith.addf %119, %124 : vector<2x16x32xf32>
    %c0_70 = arith.constant 0 : index
    %c4 = arith.constant 4 : index
    %c0_71 = arith.constant 0 : index
    %126 = vector.load %arg2[%c0_70, %c4, %c0_71] : memref<2x8x16xf32, #tpu.memory_space<vmem>>, vector<2x1x16xf32>
    %127 = vector.shape_cast %126 : vector<2x1x16xf32> to vector<2x16xf32>
    %c0_72 = arith.constant 0 : index
    %c4_73 = arith.constant 4 : index
    %c0_74 = arith.constant 0 : index
    %128 = vector.load %arg3[%c0_72, %c4_73, %c0_74] : memref<2x8x16xf32, #tpu.memory_space<vmem>>, vector<2x1x16xf32>
    %129 = vector.shape_cast %128 : vector<2x1x16xf32> to vector<2x16xf32>
    %c0_75 = arith.constant 0 : index
    %c4_76 = arith.constant 4 : index
    %c0_77 = arith.constant 0 : index
    %130 = vector.load %arg4[%c0_75, %c4_76, %c0_77] : memref<2x8x16xf32, #tpu.memory_space<vmem>>, vector<2x1x16xf32>
    %131 = vector.shape_cast %130 : vector<2x1x16xf32> to vector<2x16xf32>
    %c0_78 = arith.constant 0 : index
    %c4_79 = arith.constant 4 : index
    %c0_80 = arith.constant 0 : index
    %132 = vector.load %arg5[%c0_78, %c4_79, %c0_80] : memref<2x8x32xf32, #tpu.memory_space<vmem>>, vector<2x1x32xf32>
    %133 = vector.shape_cast %132 : vector<2x1x32xf32> to vector<2x32xf32>
    %134 = arith.mulf %127, %4 : vector<2x16xf32>
    %135 = arith.mulf %134, %129 : vector<2x16xf32>
    %cst_81 = arith.constant dense<0.000000e+00> : vector<2xf32>
    %136 = vector.multi_reduction <add>, %135, %cst_81 [1] : vector<2x16xf32> to vector<2xf32>
    %137 = vector.shape_cast %136 : vector<2xf32> to vector<2x1xf32>
    %138 = vector.shape_cast %127 : vector<2x16xf32> to vector<2x16x1xf32>
    %139 = vector.broadcast %138 : vector<2x16x1xf32> to vector<2x16x32xf32>
    %140 = arith.mulf %139, %125 : vector<2x16x32xf32>
    %cst_82 = arith.constant dense<0.000000e+00> : vector<2x32xf32>
    %141 = vector.multi_reduction <add>, %140, %cst_82 [1] : vector<2x16x32xf32> to vector<2x32xf32>
    %142 = vector.broadcast %137 : vector<2x1xf32> to vector<2x32xf32>
    %143 = arith.mulf %142, %133 : vector<2x32xf32>
    %144 = arith.addf %141, %143 : vector<2x32xf32>
    %145 = vector.shape_cast %144 : vector<2x32xf32> to vector<2x1x32xf32>
    %c0_83 = arith.constant 0 : index
    %c4_84 = arith.constant 4 : index
    %c0_85 = arith.constant 0 : index
    %146 = vector.load %arg7[%c0_83, %c4_84, %c0_85] : memref<2x8x32xf32, #tpu.memory_space<vmem>>, vector<2x1x32xf32>
    tpu.vector_store %arg7[%c0_83, %c4_84, %c0_85], %145 {strides = array<i32>} : memref<2x8x32xf32, #tpu.memory_space<vmem>>, vector<2x1x32xf32>,
    %147 = vector.shape_cast %131 : vector<2x16xf32> to vector<2x16x1xf32>
    %148 = vector.broadcast %147 : vector<2x16x1xf32> to vector<2x16x32xf32>
    %149 = arith.mulf %148, %125 : vector<2x16x32xf32>
    %150 = vector.shape_cast %129 : vector<2x16xf32> to vector<2x16x1xf32>
    %151 = vector.shape_cast %133 : vector<2x32xf32> to vector<2x1x32xf32>
    %152 = vector.broadcast %150 : vector<2x16x1xf32> to vector<2x16x32xf32>
    %153 = vector.broadcast %151 : vector<2x1x32xf32> to vector<2x16x32xf32>
    %154 = arith.mulf %152, %153 : vector<2x16x32xf32>
    %155 = arith.addf %149, %154 : vector<2x16x32xf32>
    %c0_86 = arith.constant 0 : index
    %c5 = arith.constant 5 : index
    %c0_87 = arith.constant 0 : index
    %156 = vector.load %arg2[%c0_86, %c5, %c0_87] : memref<2x8x16xf32, #tpu.memory_space<vmem>>, vector<2x1x16xf32>
    %157 = vector.shape_cast %156 : vector<2x1x16xf32> to vector<2x16xf32>
    %c0_88 = arith.constant 0 : index
    %c5_89 = arith.constant 5 : index
    %c0_90 = arith.constant 0 : index
    %158 = vector.load %arg3[%c0_88, %c5_89, %c0_90] : memref<2x8x16xf32, #tpu.memory_space<vmem>>, vector<2x1x16xf32>
    %159 = vector.shape_cast %158 : vector<2x1x16xf32> to vector<2x16xf32>
    %c0_91 = arith.constant 0 : index
    %c5_92 = arith.constant 5 : index
    %c0_93 = arith.constant 0 : index
    %160 = vector.load %arg4[%c0_91, %c5_92, %c0_93] : memref<2x8x16xf32, #tpu.memory_space<vmem>>, vector<2x1x16xf32>
    %161 = vector.shape_cast %160 : vector<2x1x16xf32> to vector<2x16xf32>
    %c0_94 = arith.constant 0 : index
    %c5_95 = arith.constant 5 : index
    %c0_96 = arith.constant 0 : index
    %162 = vector.load %arg5[%c0_94, %c5_95, %c0_96] : memref<2x8x32xf32, #tpu.memory_space<vmem>>, vector<2x1x32xf32>
    %163 = vector.shape_cast %162 : vector<2x1x32xf32> to vector<2x32xf32>
    %164 = arith.mulf %157, %4 : vector<2x16xf32>
    %165 = arith.mulf %164, %159 : vector<2x16xf32>
    %cst_97 = arith.constant dense<0.000000e+00> : vector<2xf32>
    %166 = vector.multi_reduction <add>, %165, %cst_97 [1] : vector<2x16xf32> to vector<2xf32>
    %167 = vector.shape_cast %166 : vector<2xf32> to vector<2x1xf32>
    %168 = vector.shape_cast %157 : vector<2x16xf32> to vector<2x16x1xf32>
    %169 = vector.broadcast %168 : vector<2x16x1xf32> to vector<2x16x32xf32>
    %170 = arith.mulf %169, %155 : vector<2x16x32xf32>
    %cst_98 = arith.constant dense<0.000000e+00> : vector<2x32xf32>
    %171 = vector.multi_reduction <add>, %170, %cst_98 [1] : vector<2x16x32xf32> to vector<2x32xf32>
    %172 = vector.broadcast %167 : vector<2x1xf32> to vector<2x32xf32>
    %173 = arith.mulf %172, %163 : vector<2x32xf32>
    %174 = arith.addf %171, %173 : vector<2x32xf32>
    %175 = vector.shape_cast %174 : vector<2x32xf32> to vector<2x1x32xf32>
    %c0_99 = arith.constant 0 : index
    %c5_100 = arith.constant 5 : index
    %c0_101 = arith.constant 0 : index
    %176 = vector.load %arg7[%c0_99, %c5_100, %c0_101] : memref<2x8x32xf32, #tpu.memory_space<vmem>>, vector<2x1x32xf32>
    tpu.vector_store %arg7[%c0_99, %c5_100, %c0_101], %175 {strides = array<i32>} : memref<2x8x32xf32, #tpu.memory_space<vmem>>, vector<2x1x32xf32>,
    %177 = vector.shape_cast %161 : vector<2x16xf32> to vector<2x16x1xf32>
    %178 = vector.broadcast %177 : vector<2x16x1xf32> to vector<2x16x32xf32>
    %179 = arith.mulf %178, %155 : vector<2x16x32xf32>
    %180 = vector.shape_cast %159 : vector<2x16xf32> to vector<2x16x1xf32>
    %181 = vector.shape_cast %163 : vector<2x32xf32> to vector<2x1x32xf32>
    %182 = vector.broadcast %180 : vector<2x16x1xf32> to vector<2x16x32xf32>
    %183 = vector.broadcast %181 : vector<2x1x32xf32> to vector<2x16x32xf32>
    %184 = arith.mulf %182, %183 : vector<2x16x32xf32>
    %185 = arith.addf %179, %184 : vector<2x16x32xf32>
    %c0_102 = arith.constant 0 : index
    %c6 = arith.constant 6 : index
    %c0_103 = arith.constant 0 : index
    %186 = vector.load %arg2[%c0_102, %c6, %c0_103] : memref<2x8x16xf32, #tpu.memory_space<vmem>>, vector<2x1x16xf32>
    %187 = vector.shape_cast %186 : vector<2x1x16xf32> to vector<2x16xf32>
    %c0_104 = arith.constant 0 : index
    %c6_105 = arith.constant 6 : index
    %c0_106 = arith.constant 0 : index
    %188 = vector.load %arg3[%c0_104, %c6_105, %c0_106] : memref<2x8x16xf32, #tpu.memory_space<vmem>>, vector<2x1x16xf32>
    %189 = vector.shape_cast %188 : vector<2x1x16xf32> to vector<2x16xf32>
    %c0_107 = arith.constant 0 : index
    %c6_108 = arith.constant 6 : index
    %c0_109 = arith.constant 0 : index
    %190 = vector.load %arg4[%c0_107, %c6_108, %c0_109] : memref<2x8x16xf32, #tpu.memory_space<vmem>>, vector<2x1x16xf32>
    %191 = vector.shape_cast %190 : vector<2x1x16xf32> to vector<2x16xf32>
    %c0_110 = arith.constant 0 : index
    %c6_111 = arith.constant 6 : index
    %c0_112 = arith.constant 0 : index
    %192 = vector.load %arg5[%c0_110, %c6_111, %c0_112] : memref<2x8x32xf32, #tpu.memory_space<vmem>>, vector<2x1x32xf32>
    %193 = vector.shape_cast %192 : vector<2x1x32xf32> to vector<2x32xf32>
    %194 = arith.mulf %187, %4 : vector<2x16xf32>
    %195 = arith.mulf %194, %189 : vector<2x16xf32>
    %cst_113 = arith.constant dense<0.000000e+00> : vector<2xf32>
    %196 = vector.multi_reduction <add>, %195, %cst_113 [1] : vector<2x16xf32> to vector<2xf32>
    %197 = vector.shape_cast %196 : vector<2xf32> to vector<2x1xf32>
    %198 = vector.shape_cast %187 : vector<2x16xf32> to vector<2x16x1xf32>
    %199 = vector.broadcast %198 : vector<2x16x1xf32> to vector<2x16x32xf32>
    %200 = arith.mulf %199, %185 : vector<2x16x32xf32>
    %cst_114 = arith.constant dense<0.000000e+00> : vector<2x32xf32>
    %201 = vector.multi_reduction <add>, %200, %cst_114 [1] : vector<2x16x32xf32> to vector<2x32xf32>
    %202 = vector.broadcast %197 : vector<2x1xf32> to vector<2x32xf32>
    %203 = arith.mulf %202, %193 : vector<2x32xf32>
    %204 = arith.addf %201, %203 : vector<2x32xf32>
    %205 = vector.shape_cast %204 : vector<2x32xf32> to vector<2x1x32xf32>
    %c0_115 = arith.constant 0 : index
    %c6_116 = arith.constant 6 : index
    %c0_117 = arith.constant 0 : index
    %206 = vector.load %arg7[%c0_115, %c6_116, %c0_117] : memref<2x8x32xf32, #tpu.memory_space<vmem>>, vector<2x1x32xf32>
    tpu.vector_store %arg7[%c0_115, %c6_116, %c0_117], %205 {strides = array<i32>} : memref<2x8x32xf32, #tpu.memory_space<vmem>>, vector<2x1x32xf32>,
    %207 = vector.shape_cast %191 : vector<2x16xf32> to vector<2x16x1xf32>
    %208 = vector.broadcast %207 : vector<2x16x1xf32> to vector<2x16x32xf32>
    %209 = arith.mulf %208, %185 : vector<2x16x32xf32>
    %210 = vector.shape_cast %189 : vector<2x16xf32> to vector<2x16x1xf32>
    %211 = vector.shape_cast %193 : vector<2x32xf32> to vector<2x1x32xf32>
    %212 = vector.broadcast %210 : vector<2x16x1xf32> to vector<2x16x32xf32>
    %213 = vector.broadcast %211 : vector<2x1x32xf32> to vector<2x16x32xf32>
    %214 = arith.mulf %212, %213 : vector<2x16x32xf32>
    %215 = arith.addf %209, %214 : vector<2x16x32xf32>
    %c0_118 = arith.constant 0 : index
    %c7 = arith.constant 7 : index
    %c0_119 = arith.constant 0 : index
    %216 = vector.load %arg2[%c0_118, %c7, %c0_119] : memref<2x8x16xf32, #tpu.memory_space<vmem>>, vector<2x1x16xf32>
    %217 = vector.shape_cast %216 : vector<2x1x16xf32> to vector<2x16xf32>
    %c0_120 = arith.constant 0 : index
    %c7_121 = arith.constant 7 : index
    %c0_122 = arith.constant 0 : index
    %218 = vector.load %arg3[%c0_120, %c7_121, %c0_122] : memref<2x8x16xf32, #tpu.memory_space<vmem>>, vector<2x1x16xf32>
    %219 = vector.shape_cast %218 : vector<2x1x16xf32> to vector<2x16xf32>
    %c0_123 = arith.constant 0 : index
    %c7_124 = arith.constant 7 : index
    %c0_125 = arith.constant 0 : index
    %220 = vector.load %arg4[%c0_123, %c7_124, %c0_125] : memref<2x8x16xf32, #tpu.memory_space<vmem>>, vector<2x1x16xf32>
    %221 = vector.shape_cast %220 : vector<2x1x16xf32> to vector<2x16xf32>
    %c0_126 = arith.constant 0 : index
    %c7_127 = arith.constant 7 : index
    %c0_128 = arith.constant 0 : index
    %222 = vector.load %arg5[%c0_126, %c7_127, %c0_128] : memref<2x8x32xf32, #tpu.memory_space<vmem>>, vector<2x1x32xf32>
    %223 = vector.shape_cast %222 : vector<2x1x32xf32> to vector<2x32xf32>
    %224 = arith.mulf %217, %4 : vector<2x16xf32>
    %225 = arith.mulf %224, %219 : vector<2x16xf32>
    %cst_129 = arith.constant dense<0.000000e+00> : vector<2xf32>
    %226 = vector.multi_reduction <add>, %225, %cst_129 [1] : vector<2x16xf32> to vector<2xf32>
    %227 = vector.shape_cast %226 : vector<2xf32> to vector<2x1xf32>
    %228 = vector.shape_cast %217 : vector<2x16xf32> to vector<2x16x1xf32>
    %229 = vector.broadcast %228 : vector<2x16x1xf32> to vector<2x16x32xf32>
    %230 = arith.mulf %229, %215 : vector<2x16x32xf32>
    %cst_130 = arith.constant dense<0.000000e+00> : vector<2x32xf32>
    %231 = vector.multi_reduction <add>, %230, %cst_130 [1] : vector<2x16x32xf32> to vector<2x32xf32>
    %232 = vector.broadcast %227 : vector<2x1xf32> to vector<2x32xf32>
    %233 = arith.mulf %232, %223 : vector<2x32xf32>
    %234 = arith.addf %231, %233 : vector<2x32xf32>
    %235 = vector.shape_cast %234 : vector<2x32xf32> to vector<2x1x32xf32>
    %c0_131 = arith.constant 0 : index
    %c7_132 = arith.constant 7 : index
    %c0_133 = arith.constant 0 : index
    %236 = vector.load %arg7[%c0_131, %c7_132, %c0_133] : memref<2x8x32xf32, #tpu.memory_space<vmem>>, vector<2x1x32xf32>
    tpu.vector_store %arg7[%c0_131, %c7_132, %c0_133], %235 {strides = array<i32>} : memref<2x8x32xf32, #tpu.memory_space<vmem>>, vector<2x1x32xf32>,
    %237 = vector.shape_cast %221 : vector<2x16xf32> to vector<2x16x1xf32>
    %238 = vector.broadcast %237 : vector<2x16x1xf32> to vector<2x16x32xf32>
    %239 = arith.mulf %238, %215 : vector<2x16x32xf32>
    %240 = vector.shape_cast %219 : vector<2x16xf32> to vector<2x16x1xf32>
    %241 = vector.shape_cast %223 : vector<2x32xf32> to vector<2x1x32xf32>
    %242 = vector.broadcast %240 : vector<2x16x1xf32> to vector<2x16x32xf32>
    %243 = vector.broadcast %241 : vector<2x1x32xf32> to vector<2x16x32xf32>
    %244 = arith.mulf %242, %243 : vector<2x16x32xf32>
    %245 = arith.addf %239, %244 : vector<2x16x32xf32>
    %c0_134 = arith.constant 0 : index
    %c0_135 = arith.constant 0 : index
    %c0_136 = arith.constant 0 : index
    %246 = vector.load %arg8[%c0_134, %c0_135, %c0_136] : memref<2x16x32xf32, #tpu.memory_space<vmem>>, vector<2x16x32xf32>
    tpu.vector_store %arg8[%c0_134, %c0_135, %c0_136], %245 {strides = array<i32>} : memref<2x16x32xf32, #tpu.memory_space<vmem>>, vector<2x16x32xf32>,
    return
  }
  func.func @transform_0(%arg0: i32, %arg1: i32) -> (i32, i32, i32) {
    %c0_i32 = arith.constant 0 : i32
    %c0_i32_0 = arith.constant 0 : i32
    return %arg0, %arg1, %c0_i32 : i32, i32, i32
  }
  func.func @transform_1(%arg0: i32, %arg1: i32) -> (i32, i32, i32) {
    %c0_i32 = arith.constant 0 : i32
    %c0_i32_0 = arith.constant 0 : i32
    return %arg0, %arg1, %c0_i32 : i32, i32, i32
  }
  func.func @transform_2(%arg0: i32, %arg1: i32) -> (i32, i32, i32) {
    %c0_i32 = arith.constant 0 : i32
    %c0_i32_0 = arith.constant 0 : i32
    return %arg0, %arg1, %c0_i32 : i32, i32, i32
  }
  func.func @transform_3(%arg0: i32, %arg1: i32) -> (i32, i32, i32) {
    %c0_i32 = arith.constant 0 : i32
    %c0_i32_0 = arith.constant 0 : i32
    return %arg0, %arg1, %c0_i32 : i32, i32, i32
  }
  func.func @transform_4(%arg0: i32, %arg1: i32) -> (i32, i32, i32) {
    %c0_i32 = arith.constant 0 : i32
    %c0_i32_0 = arith.constant 0 : i32
    %c0_i32_1 = arith.constant 0 : i32
    return %arg0, %c0_i32, %c0_i32_0 : i32, i32, i32
  }
  func.func @transform_5(%arg0: i32, %arg1: i32) -> (i32, i32, i32) {
    %c0_i32 = arith.constant 0 : i32
    %c0_i32_0 = arith.constant 0 : i32
    return %arg0, %arg1, %c0_i32 : i32, i32, i32
  }
}

module attributes {stable_mosaic.version = 11 : i64} {
  func.func @_ln_kernel(%arg0: i32, %arg1: memref<16x64xf32, #tpu.memory_space<vmem>>, %arg2: memref<1x64xf32, #tpu.memory_space<vmem>>, %arg3: memref<1x64xf32, #tpu.memory_space<vmem>>, %arg4: memref<16x64xf32, #tpu.memory_space<vmem>>) attributes {dimension_semantics = [#tpu.dimension_semantics<parallel>], iteration_bounds = array<i64: 1>, scalar_prefetch = 0 : i64, scratch_operands = 0 : i64, tpu.core_type = #tpu.core_type<tc>, window_params = [{transform_indices = @transform_0, window_bounds = array<i64: 16, 64>}, {pipeline_mode = #tpu.pipeline_mode<synchronous>, transform_indices = @transform_1, window_bounds = array<i64: 1, 64>}, {pipeline_mode = #tpu.pipeline_mode<synchronous>, transform_indices = @transform_2, window_bounds = array<i64: 1, 64>}, {transform_indices = @transform_3, window_bounds = array<i64: 16, 64>}]} {
    %c0 = arith.constant 0 : index
    %c0_0 = arith.constant 0 : index
    %0 = vector.load %arg1[%c0, %c0_0] : memref<16x64xf32, #tpu.memory_space<vmem>>, vector<16x64xf32>
    %c0_1 = arith.constant 0 : index
    %c0_2 = arith.constant 0 : index
    %1 = vector.load %arg2[%c0_1, %c0_2] : memref<1x64xf32, #tpu.memory_space<vmem>>, vector<1x64xf32>
    %c0_3 = arith.constant 0 : index
    %c0_4 = arith.constant 0 : index
    %2 = vector.load %arg3[%c0_3, %c0_4] : memref<1x64xf32, #tpu.memory_space<vmem>>, vector<1x64xf32>
    %cst = arith.constant dense<0.000000e+00> : vector<16xf32>
    %3 = vector.multi_reduction <add>, %0, %cst [1] : vector<16x64xf32> to vector<16xf32>
    %4 = vector.shape_cast %3 : vector<16xf32> to vector<16x1xf32>
    %cst_5 = arith.constant 6.400000e+01 : f32
    %5 = vector.broadcast %cst_5 : f32 to vector<16x1xf32>
    %6 = arith.divf %4, %5 : vector<16x1xf32>
    %7 = vector.broadcast %6 : vector<16x1xf32> to vector<16x64xf32>
    %8 = arith.subf %0, %7 : vector<16x64xf32>
    %9 = arith.mulf %8, %8 : vector<16x64xf32>
    %cst_6 = arith.constant dense<0.000000e+00> : vector<16xf32>
    %10 = vector.multi_reduction <add>, %9, %cst_6 [1] : vector<16x64xf32> to vector<16xf32>
    %11 = vector.shape_cast %10 : vector<16xf32> to vector<16x1xf32>
    %cst_7 = arith.constant 6.400000e+01 : f32
    %12 = vector.broadcast %cst_7 : f32 to vector<16x1xf32>
    %13 = arith.divf %11, %12 : vector<16x1xf32>
    %cst_8 = arith.constant 9.99999974E-6 : f32
    %14 = vector.broadcast %cst_8 : f32 to vector<16x1xf32>
    %15 = arith.addf %13, %14 : vector<16x1xf32>
    %16 = math.rsqrt %15 : vector<16x1xf32>
    %17 = vector.broadcast %16 : vector<16x1xf32> to vector<16x64xf32>
    %18 = arith.mulf %8, %17 : vector<16x64xf32>
    %19 = vector.broadcast %1 : vector<1x64xf32> to vector<16x64xf32>
    %20 = arith.mulf %18, %19 : vector<16x64xf32>
    %21 = vector.broadcast %2 : vector<1x64xf32> to vector<16x64xf32>
    %22 = arith.addf %20, %21 : vector<16x64xf32>
    %c0_9 = arith.constant 0 : index
    %c0_10 = arith.constant 0 : index
    %23 = vector.load %arg4[%c0_9, %c0_10] : memref<16x64xf32, #tpu.memory_space<vmem>>, vector<16x64xf32>
    tpu.vector_store %arg4[%c0_9, %c0_10], %22 {strides = array<i32>} : memref<16x64xf32, #tpu.memory_space<vmem>>, vector<16x64xf32>,
    return
  }
  func.func @transform_0(%arg0: i32) -> (i32, i32) {
    %c0_i32 = arith.constant 0 : i32
    %c0_i32_0 = arith.constant 0 : i32
    return %arg0, %c0_i32 : i32, i32
  }
  func.func @transform_1(%arg0: i32) -> (i32, i32) {
    %c0_i32 = arith.constant 0 : i32
    %c0_i32_0 = arith.constant 0 : i32
    %c0_i32_1 = arith.constant 0 : i32
    return %c0_i32, %c0_i32_0 : i32, i32
  }
  func.func @transform_2(%arg0: i32) -> (i32, i32) {
    %c0_i32 = arith.constant 0 : i32
    %c0_i32_0 = arith.constant 0 : i32
    %c0_i32_1 = arith.constant 0 : i32
    return %c0_i32, %c0_i32_0 : i32, i32
  }
  func.func @transform_3(%arg0: i32) -> (i32, i32) {
    %c0_i32 = arith.constant 0 : i32
    %c0_i32_0 = arith.constant 0 : i32
    return %arg0, %c0_i32 : i32, i32
  }
}

module attributes {stable_mosaic.version = 11 : i64} {
  func.func @_gn_gate_oproj_kernel(%arg0: i32, %arg1: memref<16x64xf32, #tpu.memory_space<vmem>>, %arg2: memref<16x64xf32, #tpu.memory_space<vmem>>, %arg3: memref<16x64xf32, #tpu.memory_space<vmem>>, %arg4: memref<1x64xf32, #tpu.memory_space<vmem>>, %arg5: memref<1x64xf32, #tpu.memory_space<vmem>>, %arg6: memref<64x2xf32, #tpu.memory_space<vmem>>, %arg7: memref<2x64xf32, #tpu.memory_space<vmem>>, %arg8: memref<64x64xbf16, #tpu.memory_space<vmem>>, %arg9: memref<16x64xf32, #tpu.memory_space<vmem>>) attributes {dimension_semantics = [#tpu.dimension_semantics<parallel>], iteration_bounds = array<i64: 1>, scalar_prefetch = 0 : i64, scratch_operands = 0 : i64, tpu.core_type = #tpu.core_type<tc>, window_params = [{transform_indices = @transform_0, window_bounds = array<i64: 16, 64>}, {transform_indices = @transform_1, window_bounds = array<i64: 16, 64>}, {transform_indices = @transform_2, window_bounds = array<i64: 16, 64>}, {pipeline_mode = #tpu.pipeline_mode<synchronous>, transform_indices = @transform_3, window_bounds = array<i64: 1, 64>}, {pipeline_mode = #tpu.pipeline_mode<synchronous>, transform_indices = @transform_4, window_bounds = array<i64: 1, 64>}, {pipeline_mode = #tpu.pipeline_mode<synchronous>, transform_indices = @transform_5, window_bounds = array<i64: 64, 2>}, {pipeline_mode = #tpu.pipeline_mode<synchronous>, transform_indices = @transform_6, window_bounds = array<i64: 2, 64>}, {pipeline_mode = #tpu.pipeline_mode<synchronous>, transform_indices = @transform_7, window_bounds = array<i64: 64, 64>}, {transform_indices = @transform_8, window_bounds = array<i64: 16, 64>}]} {
    %c0 = arith.constant 0 : index
    %c0_0 = arith.constant 0 : index
    %0 = vector.load %arg1[%c0, %c0_0] : memref<16x64xf32, #tpu.memory_space<vmem>>, vector<16x64xf32>
    %c0_1 = arith.constant 0 : index
    %c0_2 = arith.constant 0 : index
    %1 = vector.load %arg6[%c0_1, %c0_2] : memref<64x2xf32, #tpu.memory_space<vmem>>, vector<64x2xf32>
    %c0_3 = arith.constant 0 : index
    %c0_4 = arith.constant 0 : index
    %2 = vector.load %arg7[%c0_3, %c0_4] : memref<2x64xf32, #tpu.memory_space<vmem>>, vector<2x64xf32>
    %cst = arith.constant dense<0.000000e+00> : vector<16x2xf32>
    %3 = tpu.matmul %0, %1, %cst {dimension_numbers = #tpu.dot_dimension_numbers<[1], [0], [0], [1], [0, 0, 1, 1], [], []>} : vector<16x64xf32>, vector<64x2xf32>, vector<16x2xf32> -> vector<16x2xf32>
    %cst_5 = arith.constant dense<0.000000e+00> : vector<16x64xf32>
    %4 = tpu.matmul %3, %2, %cst_5 {dimension_numbers = #tpu.dot_dimension_numbers<[1], [0], [0], [1], [0, 0, 1, 1], [], []>} : vector<16x2xf32>, vector<2x64xf32>, vector<16x64xf32> -> vector<16x64xf32>
    %5 = arith.subf %0, %4 : vector<16x64xf32>
    %6 = arith.mulf %5, %5 : vector<16x64xf32>
    %cst_6 = arith.constant dense<0.000000e+00> : vector<16x2xf32>
    %7 = tpu.matmul %6, %1, %cst_6 {dimension_numbers = #tpu.dot_dimension_numbers<[1], [0], [0], [1], [0, 0, 1, 1], [], []>} : vector<16x64xf32>, vector<64x2xf32>, vector<16x2xf32> -> vector<16x2xf32>
    %cst_7 = arith.constant dense<0.000000e+00> : vector<16x64xf32>
    %8 = tpu.matmul %7, %2, %cst_7 {dimension_numbers = #tpu.dot_dimension_numbers<[1], [0], [0], [1], [0, 0, 1, 1], [], []>} : vector<16x2xf32>, vector<2x64xf32>, vector<16x64xf32> -> vector<16x64xf32>
    %cst_8 = arith.constant 9.99999974E-6 : f32
    %9 = vector.broadcast %cst_8 : f32 to vector<16x64xf32>
    %10 = arith.addf %8, %9 : vector<16x64xf32>
    %11 = math.rsqrt %10 : vector<16x64xf32>
    %12 = arith.mulf %5, %11 : vector<16x64xf32>
    %c0_9 = arith.constant 0 : index
    %c0_10 = arith.constant 0 : index
    %13 = vector.load %arg4[%c0_9, %c0_10] : memref<1x64xf32, #tpu.memory_space<vmem>>, vector<1x64xf32>
    %14 = vector.broadcast %13 : vector<1x64xf32> to vector<16x64xf32>
    %15 = arith.mulf %12, %14 : vector<16x64xf32>
    %c0_11 = arith.constant 0 : index
    %c0_12 = arith.constant 0 : index
    %16 = vector.load %arg5[%c0_11, %c0_12] : memref<1x64xf32, #tpu.memory_space<vmem>>, vector<1x64xf32>
    %17 = vector.broadcast %16 : vector<1x64xf32> to vector<16x64xf32>
    %18 = arith.addf %15, %17 : vector<16x64xf32>
    %c0_13 = arith.constant 0 : index
    %c0_14 = arith.constant 0 : index
    %19 = vector.load %arg2[%c0_13, %c0_14] : memref<16x64xf32, #tpu.memory_space<vmem>>, vector<16x64xf32>
    %20 = arith.negf %19 : vector<16x64xf32>
    %21 = math.exp %20 : vector<16x64xf32>
    %cst_15 = arith.constant 1.000000e+00 : f32
    %22 = vector.broadcast %cst_15 : f32 to vector<16x64xf32>
    %23 = arith.addf %22, %21 : vector<16x64xf32>
    %24 = arith.divf %22, %23 : vector<16x64xf32>
    %25 = arith.mulf %19, %24 : vector<16x64xf32>
    %26 = arith.mulf %18, %25 : vector<16x64xf32>
    %c0_16 = arith.constant 0 : index
    %c0_17 = arith.constant 0 : index
    %27 = vector.load %arg3[%c0_16, %c0_17] : memref<16x64xf32, #tpu.memory_space<vmem>>, vector<16x64xf32>
    %28 = arith.truncf %26 : vector<16x64xf32> to vector<16x64xbf16>
    %c0_18 = arith.constant 0 : index
    %c0_19 = arith.constant 0 : index
    %29 = vector.load %arg8[%c0_18, %c0_19] : memref<64x64xbf16, #tpu.memory_space<vmem>>, vector<64x64xbf16>
    %cst_20 = arith.constant dense<0.000000e+00> : vector<16x64xf32>
    %30 = tpu.matmul %28, %29, %cst_20 {dimension_numbers = #tpu.dot_dimension_numbers<[1], [0], [0], [1], [0, 0, 1, 1], [], []>} : vector<16x64xbf16>, vector<64x64xbf16>, vector<16x64xf32> -> vector<16x64xf32>
    %31 = arith.addf %27, %30 : vector<16x64xf32>
    %c0_21 = arith.constant 0 : index
    %c0_22 = arith.constant 0 : index
    %32 = vector.load %arg9[%c0_21, %c0_22] : memref<16x64xf32, #tpu.memory_space<vmem>>, vector<16x64xf32>
    tpu.vector_store %arg9[%c0_21, %c0_22], %31 {strides = array<i32>} : memref<16x64xf32, #tpu.memory_space<vmem>>, vector<16x64xf32>,
    return
  }
  func.func @transform_0(%arg0: i32) -> (i32, i32) {
    %c0_i32 = arith.constant 0 : i32
    %c0_i32_0 = arith.constant 0 : i32
    return %arg0, %c0_i32 : i32, i32
  }
  func.func @transform_1(%arg0: i32) -> (i32, i32) {
    %c0_i32 = arith.constant 0 : i32
    %c0_i32_0 = arith.constant 0 : i32
    return %arg0, %c0_i32 : i32, i32
  }
  func.func @transform_2(%arg0: i32) -> (i32, i32) {
    %c0_i32 = arith.constant 0 : i32
    %c0_i32_0 = arith.constant 0 : i32
    return %arg0, %c0_i32 : i32, i32
  }
  func.func @transform_3(%arg0: i32) -> (i32, i32) {
    %c0_i32 = arith.constant 0 : i32
    %c0_i32_0 = arith.constant 0 : i32
    %c0_i32_1 = arith.constant 0 : i32
    return %c0_i32, %c0_i32_0 : i32, i32
  }
  func.func @transform_4(%arg0: i32) -> (i32, i32) {
    %c0_i32 = arith.constant 0 : i32
    %c0_i32_0 = arith.constant 0 : i32
    %c0_i32_1 = arith.constant 0 : i32
    return %c0_i32, %c0_i32_0 : i32, i32
  }
  func.func @transform_5(%arg0: i32) -> (i32, i32) {
    %c0_i32 = arith.constant 0 : i32
    %c0_i32_0 = arith.constant 0 : i32
    %c0_i32_1 = arith.constant 0 : i32
    return %c0_i32, %c0_i32_0 : i32, i32
  }
  func.func @transform_6(%arg0: i32) -> (i32, i32) {
    %c0_i32 = arith.constant 0 : i32
    %c0_i32_0 = arith.constant 0 : i32
    %c0_i32_1 = arith.constant 0 : i32
    return %c0_i32, %c0_i32_0 : i32, i32
  }
  func.func @transform_7(%arg0: i32) -> (i32, i32) {
    %c0_i32 = arith.constant 0 : i32
    %c0_i32_0 = arith.constant 0 : i32
    %c0_i32_1 = arith.constant 0 : i32
    return %c0_i32, %c0_i32_0 : i32, i32
  }
  func.func @transform_8(%arg0: i32) -> (i32, i32) {
    %c0_i32 = arith.constant 0 : i32
    %c0_i32_0 = arith.constant 0 : i32
    return %arg0, %c0_i32 : i32, i32
  }
}

module attributes {stable_mosaic.version = 11 : i64} {
  func.func @_ffn_kernel(%arg0: i32, %arg1: memref<16x64xf32, #tpu.memory_space<vmem>>, %arg2: memref<16x64xf32, #tpu.memory_space<vmem>>, %arg3: memref<16x64xf32, #tpu.memory_space<vmem>>, %arg4: memref<1x64xf32, #tpu.memory_space<vmem>>, %arg5: memref<1x64xf32, #tpu.memory_space<vmem>>, %arg6: memref<64x224xbf16, #tpu.memory_space<vmem>>, %arg7: memref<224x64xbf16, #tpu.memory_space<vmem>>, %arg8: memref<64x64xbf16, #tpu.memory_space<vmem>>, %arg9: memref<16x64xf32, #tpu.memory_space<vmem>>) attributes {dimension_semantics = [#tpu.dimension_semantics<parallel>], iteration_bounds = array<i64: 1>, scalar_prefetch = 0 : i64, scratch_operands = 0 : i64, tpu.core_type = #tpu.core_type<tc>, window_params = [{transform_indices = @transform_0, window_bounds = array<i64: 16, 64>}, {transform_indices = @transform_1, window_bounds = array<i64: 16, 64>}, {transform_indices = @transform_2, window_bounds = array<i64: 16, 64>}, {pipeline_mode = #tpu.pipeline_mode<synchronous>, transform_indices = @transform_3, window_bounds = array<i64: 1, 64>}, {pipeline_mode = #tpu.pipeline_mode<synchronous>, transform_indices = @transform_4, window_bounds = array<i64: 1, 64>}, {pipeline_mode = #tpu.pipeline_mode<synchronous>, transform_indices = @transform_5, window_bounds = array<i64: 64, 224>}, {pipeline_mode = #tpu.pipeline_mode<synchronous>, transform_indices = @transform_6, window_bounds = array<i64: 224, 64>}, {pipeline_mode = #tpu.pipeline_mode<synchronous>, transform_indices = @transform_7, window_bounds = array<i64: 64, 64>}, {transform_indices = @transform_8, window_bounds = array<i64: 16, 64>}]} {
    %c0 = arith.constant 0 : index
    %c0_0 = arith.constant 0 : index
    %0 = vector.load %arg1[%c0, %c0_0] : memref<16x64xf32, #tpu.memory_space<vmem>>, vector<16x64xf32>
    %c0_1 = arith.constant 0 : index
    %c0_2 = arith.constant 0 : index
    %1 = vector.load %arg2[%c0_1, %c0_2] : memref<16x64xf32, #tpu.memory_space<vmem>>, vector<16x64xf32>
    %c0_3 = arith.constant 0 : index
    %c0_4 = arith.constant 0 : index
    %2 = vector.load %arg4[%c0_3, %c0_4] : memref<1x64xf32, #tpu.memory_space<vmem>>, vector<1x64xf32>
    %3 = vector.broadcast %2 : vector<1x64xf32> to vector<16x64xf32>
    %4 = arith.mulf %1, %3 : vector<16x64xf32>
    %5 = arith.addf %0, %4 : vector<16x64xf32>
    %6 = arith.truncf %5 : vector<16x64xf32> to vector<16x64xbf16>
    %c0_5 = arith.constant 0 : index
    %c0_6 = arith.constant 0 : index
    %7 = vector.load %arg6[%c0_5, %c0_6] : memref<64x224xbf16, #tpu.memory_space<vmem>>, vector<64x224xbf16>
    %cst = arith.constant dense<0.000000e+00> : vector<16x224xf32>
    %8 = tpu.matmul %6, %7, %cst {dimension_numbers = #tpu.dot_dimension_numbers<[1], [0], [0], [1], [0, 0, 1, 1], [], []>} : vector<16x64xbf16>, vector<64x224xbf16>, vector<16x224xf32> -> vector<16x224xf32>
    %cst_7 = arith.constant 0.000000e+00 : f32
    %9 = vector.broadcast %cst_7 : f32 to vector<16x224xf32>
    %10 = arith.maximumf %8, %9 : vector<16x224xf32>
    %11 = arith.mulf %10, %10 : vector<16x224xf32>
    %12 = arith.truncf %11 : vector<16x224xf32> to vector<16x224xbf16>
    %c0_8 = arith.constant 0 : index
    %c0_9 = arith.constant 0 : index
    %13 = vector.load %arg7[%c0_8, %c0_9] : memref<224x64xbf16, #tpu.memory_space<vmem>>, vector<224x64xbf16>
    %cst_10 = arith.constant dense<0.000000e+00> : vector<16x64xf32>
    %14 = tpu.matmul %12, %13, %cst_10 {dimension_numbers = #tpu.dot_dimension_numbers<[1], [0], [0], [1], [0, 0, 1, 1], [], []>} : vector<16x224xbf16>, vector<224x64xbf16>, vector<16x64xf32> -> vector<16x64xf32>
    %c0_11 = arith.constant 0 : index
    %c0_12 = arith.constant 0 : index
    %15 = vector.load %arg5[%c0_11, %c0_12] : memref<1x64xf32, #tpu.memory_space<vmem>>, vector<1x64xf32>
    %16 = vector.broadcast %15 : vector<1x64xf32> to vector<16x64xf32>
    %17 = arith.mulf %1, %16 : vector<16x64xf32>
    %18 = arith.addf %0, %17 : vector<16x64xf32>
    %19 = arith.truncf %18 : vector<16x64xf32> to vector<16x64xbf16>
    %c0_13 = arith.constant 0 : index
    %c0_14 = arith.constant 0 : index
    %20 = vector.load %arg8[%c0_13, %c0_14] : memref<64x64xbf16, #tpu.memory_space<vmem>>, vector<64x64xbf16>
    %cst_15 = arith.constant dense<0.000000e+00> : vector<16x64xf32>
    %21 = tpu.matmul %19, %20, %cst_15 {dimension_numbers = #tpu.dot_dimension_numbers<[1], [0], [0], [1], [0, 0, 1, 1], [], []>} : vector<16x64xbf16>, vector<64x64xbf16>, vector<16x64xf32> -> vector<16x64xf32>
    %c0_16 = arith.constant 0 : index
    %c0_17 = arith.constant 0 : index
    %22 = vector.load %arg3[%c0_16, %c0_17] : memref<16x64xf32, #tpu.memory_space<vmem>>, vector<16x64xf32>
    %23 = arith.negf %21 : vector<16x64xf32>
    %24 = math.exp %23 : vector<16x64xf32>
    %cst_18 = arith.constant 1.000000e+00 : f32
    %25 = vector.broadcast %cst_18 : f32 to vector<16x64xf32>
    %26 = arith.addf %25, %24 : vector<16x64xf32>
    %27 = arith.divf %25, %26 : vector<16x64xf32>
    %28 = arith.mulf %27, %14 : vector<16x64xf32>
    %29 = arith.addf %22, %28 : vector<16x64xf32>
    %c0_19 = arith.constant 0 : index
    %c0_20 = arith.constant 0 : index
    %30 = vector.load %arg9[%c0_19, %c0_20] : memref<16x64xf32, #tpu.memory_space<vmem>>, vector<16x64xf32>
    tpu.vector_store %arg9[%c0_19, %c0_20], %29 {strides = array<i32>} : memref<16x64xf32, #tpu.memory_space<vmem>>, vector<16x64xf32>,
    return
  }
  func.func @transform_0(%arg0: i32) -> (i32, i32) {
    %c0_i32 = arith.constant 0 : i32
    %c0_i32_0 = arith.constant 0 : i32
    return %arg0, %c0_i32 : i32, i32
  }
  func.func @transform_1(%arg0: i32) -> (i32, i32) {
    %c0_i32 = arith.constant 0 : i32
    %c0_i32_0 = arith.constant 0 : i32
    return %arg0, %c0_i32 : i32, i32
  }
  func.func @transform_2(%arg0: i32) -> (i32, i32) {
    %c0_i32 = arith.constant 0 : i32
    %c0_i32_0 = arith.constant 0 : i32
    return %arg0, %c0_i32 : i32, i32
  }
  func.func @transform_3(%arg0: i32) -> (i32, i32) {
    %c0_i32 = arith.constant 0 : i32
    %c0_i32_0 = arith.constant 0 : i32
    %c0_i32_1 = arith.constant 0 : i32
    return %c0_i32, %c0_i32_0 : i32, i32
  }
  func.func @transform_4(%arg0: i32) -> (i32, i32) {
    %c0_i32 = arith.constant 0 : i32
    %c0_i32_0 = arith.constant 0 : i32
    %c0_i32_1 = arith.constant 0 : i32
    return %c0_i32, %c0_i32_0 : i32, i32
  }
  func.func @transform_5(%arg0: i32) -> (i32, i32) {
    %c0_i32 = arith.constant 0 : i32
    %c0_i32_0 = arith.constant 0 : i32
    %c0_i32_1 = arith.constant 0 : i32
    return %c0_i32, %c0_i32_0 : i32, i32
  }
  func.func @transform_6(%arg0: i32) -> (i32, i32) {
    %c0_i32 = arith.constant 0 : i32
    %c0_i32_0 = arith.constant 0 : i32
    %c0_i32_1 = arith.constant 0 : i32
    return %c0_i32, %c0_i32_0 : i32, i32
  }
  func.func @transform_7(%arg0: i32) -> (i32, i32) {
    %c0_i32 = arith.constant 0 : i32
    %c0_i32_0 = arith.constant 0 : i32
    %c0_i32_1 = arith.constant 0 : i32
    return %c0_i32, %c0_i32_0 : i32, i32
  }
  func.func @transform_8(%arg0: i32) -> (i32, i32) {
    %c0_i32 = arith.constant 0 : i32
    %c0_i32_0 = arith.constant 0 : i32
    return %arg0, %c0_i32 : i32, i32
  }
}

</mosaic_0001>

<llo_original>
// kernel: rwkv6_block.6
$region0: #{rwkv6_block.6}
  #allocation0 [shape = 'u32[]', space=smem, size = 0x4, offset = 0x4, fixed_abs, tag = 'smem constant byte address 0x4 - core index']
  #allocation1 [shape = 'u32[144,128]{1,0:T(1,128)}', space=vmem, size = 0x12000, scoped, tag = 'internal scratch']
  %s0 = inlined_call_operand.vmem [shape: f32[16,64], index: 0, kind: input, shape index: {}]
  %s1 = inlined_call_operand.vmem [shape: f32[1,64], index: 1, kind: input, shape index: {}]
  %s2 = inlined_call_operand.vmem [shape: f32[1,64], index: 2, kind: input, shape index: {}]
  %s3 = inlined_call_operand.vmem [shape: f32[1,64], index: 3, kind: input, shape index: {}]
  %s4 = inlined_call_operand.vmem [shape: f32[1,64], index: 4, kind: input, shape index: {}]
  %s5 = inlined_call_operand.vmem [shape: f32[16,64], index: 5, kind: output, shape index: {0}]
  %s6 = inlined_call_operand.vmem [shape: f32[16,64], index: 6, kind: output, shape index: {1}]
  %7 = xla_tuple %s5, %s6
  %s8 = sld [smem:[#allocation0]]
  $region38: #{rwkv6_block.6} parent=0
    _
  %s10 = ssub.s32 1, %s8
  %s11 = scalar_select 0, %s10, %s8
  // Predicated region
  $region2: #{rwkv6_block.6} parent=0 // pred_check
    _
  $region3: #{rwkv6_block.6} parent=0 // pred_check_branch
    %13 = sbr.rel (0) target = $region5
  $region4: #{rwkv6_block.6} parent=0 // pred_region
    _
  $region5: #{rwkv6_block.6} parent=0 // pred_fallthru
    _
  // Predicated region
  $region6: #{rwkv6_block.6} parent=0 // pred_check
    _
  $region7: #{rwkv6_block.6} parent=0 // pred_check_branch
    %15 = sbr.rel (0) target = $region9
  $region8: #{rwkv6_block.6} parent=0 // pred_region
    _
  $region9: #{rwkv6_block.6} parent=0 // pred_fallthru
    _
  // Predicated region
  $region10: #{rwkv6_block.6} parent=0 // pred_check
    _
  $region11: #{rwkv6_block.6} parent=0 // pred_check_branch
    %17 = sbr.rel (0) target = $region13
  $region12: #{rwkv6_block.6} parent=0 // pred_region
    _
  $region13: #{rwkv6_block.6} parent=0 // pred_fallthru
    _
  // Predicated region
  $region14: #{rwkv6_block.6} parent=0 // pred_check
    _
  $region15: #{rwkv6_block.6} parent=0 // pred_check_branch
    %19 = sbr.rel (0) target = $region17
  $region16: #{rwkv6_block.6} parent=0 // pred_region
    _
  $region17: #{rwkv6_block.6} parent=0 // pred_fallthru
    _
  // Predicated region
  $region18: #{rwkv6_block.6} parent=0 // pred_check
    _
  $region19: #{rwkv6_block.6} parent=0 // pred_check_branch
    %21 = sbr.rel (0) target = $region21
  $region20: #{rwkv6_block.6} parent=0 // pred_region
    _
  $region21: #{rwkv6_block.6} parent=0 // pred_fallthru
    _
  %v22 = vld [vmem:[%s0] sm:$0xff]
  %v23 = vld [vmem:[%s0 + $0x8] sm:$0xff]
  %v24 = vld [vmem:[%s1] sm:$0x1]
  %v25 = vld [vmem:[%s2] sm:$0x1]
  %vm26 = vcmask 523264
  %v27 = vsel %vm26, %v22, 0.0
  %28 = vadd.xlane.f32.xlu0 %v27
  %v29 = vpop.xlane.xlu0 %28
  %v30 = vsel %vm26, %v23, 0.0
  %31 = vadd.xlane.f32.xlu0 %v30
  %v32 = vpop.xlane.xlu0 %31
  %v33 = vrcp.pop 64.0
  %v34 = vmul.f32 %v29, %v33
  %v35 = vmul.f32 %v32, %v33
  %v36 = vsub.f32 %v22, %v34
  %v37 = vsub.f32 %v23, %v35
  %v38 = vmul.f32 %v36, %v36
  %v39 = vmul.f32 %v37, %v37
  %v40 = vsel %vm26, %v38, 0.0
  %41 = vadd.xlane.f32.xlu0 %v40
  %v42 = vpop.xlane.xlu0 %41
  %v43 = vsel %vm26, %v39, 0.0
  %44 = vadd.xlane.f32.xlu0 %v43
  %v45 = vpop.xlane.xlu0 %44
  %v46 = vmul.f32 %v42, %v33
  %v47 = vmul.f32 %v45, %v33
  %v48 = vadd.f32 %v46, 1e-05
  %v49 = vadd.f32 %v47, 1e-05
  %v50 = vrsqrt.pop %v48
  %v51 = vrsqrt.pop %v49
  %v52 = vmul.f32 %v36, %v50
  %v53 = vmul.f32 %v37, %v51
  %v55 = vlaneseq
  %v56 = vshrl.u32 %v55, 7
  %v57 = vsub.s32 0, %v56
  %v58 = vrot.slane %v24, %v57
  %v60 = vmul.f32 %v52, %v58
  %v61 = vmul.f32 %v53, %v58
  %v63 = vlaneseq
  %v64 = vshrl.u32 %v63, 7
  %v65 = vsub.s32 0, %v64
  %v66 = vrot.slane %v25, %v65
  %v68 = vadd.f32 %v60, %v66
  %v69 = vadd.f32 %v61, %v66
  %70 = vst.msk [vmem:[%s5] sm:$0xff] %vm26, %v68
  %71 = vst.msk [vmem:[%s5 + $0x8] sm:$0xff] %vm26, %v69
  %v72 = vld [vmem:[%s3] sm:$0x1]
  %v73 = vld [vmem:[%s4] sm:$0x1]
  %v74 = vsel %vm26, %v68, 0.0
  %75 = vadd.xlane.f32.xlu0 %v74
  %v76 = vpop.xlane.xlu0 %75
  %v77 = vsel %vm26, %v69, 0.0
  %78 = vadd.xlane.f32.xlu0 %v77
  %v79 = vpop.xlane.xlu0 %78
  %v80 = vmul.f32 %v76, %v33
  %v81 = vmul.f32 %v79, %v33
  %v82 = vsub.f32 %v68, %v80
  %v83 = vsub.f32 %v69, %v81
  %v84 = vmul.f32 %v82, %v82
  %v85 = vmul.f32 %v83, %v83
  %v86 = vsel %vm26, %v84, 0.0
  %87 = vadd.xlane.f32.xlu0 %v86
  %v88 = vpop.xlane.xlu0 %87
  %v89 = vsel %vm26, %v85, 0.0
  %90 = vadd.xlane.f32.xlu0 %v89
  %v91 = vpop.xlane.xlu0 %90
  %v92 = vmul.f32 %v88, %v33
  %v93 = vmul.f32 %v91, %v33
  %v94 = vadd.f32 %v92, 1e-05
  %v95 = vadd.f32 %v93, 1e-05
  %v96 = vrsqrt.pop %v94
  %v97 = vrsqrt.pop %v95
  %v98 = vmul.f32 %v82, %v96
  %v99 = vmul.f32 %v83, %v97
  %v101 = vlaneseq
  %v102 = vshrl.u32 %v101, 7
  %v103 = vsub.s32 0, %v102
  %v104 = vrot.slane %v72, %v103
  %v106 = vmul.f32 %v98, %v104
  %v107 = vmul.f32 %v99, %v104
  %v109 = vlaneseq
  %v110 = vshrl.u32 %v109, 7
  %v111 = vsub.s32 0, %v110
  %v112 = vrot.slane %v73, %v111
  %v114 = vadd.f32 %v106, %v112
  %v115 = vadd.f32 %v107, %v112
  %116 = vst.msk [vmem:[%s6] sm:$0xff] %vm26, %v114
  %117 = vst.msk [vmem:[%s6 + $0x8] sm:$0xff] %vm26, %v115
  // Predicated region
  $region22: #{rwkv6_block.6} parent=0 // pred_check
    _
  $region23: #{rwkv6_block.6} parent=0 // pred_check_branch
    %119 = sbr.rel (0) target = $region25
  $region24: #{rwkv6_block.6} parent=0 // pred_region
    _
  $region25: #{rwkv6_block.6} parent=0 // pred_fallthru
    _
  // Predicated region
  $region26: #{rwkv6_block.6} parent=0 // pred_check
    _
  $region27: #{rwkv6_block.6} parent=0 // pred_check_branch
    %121 = sbr.rel (0) target = $region29
  $region28: #{rwkv6_block.6} parent=0 // pred_region
    _
  $region29: #{rwkv6_block.6} parent=0 // pred_fallthru
    _
  // Predicated region
  $region30: #{rwkv6_block.6} parent=0 // pred_check
    _
  $region31: #{rwkv6_block.6} parent=0 // pred_check_branch
    %123 = sbr.rel (0) target = $region33
  $region32: #{rwkv6_block.6} parent=0 // pred_region
    _
  $region33: #{rwkv6_block.6} parent=0 // pred_fallthru
    _
  // Predicated region
  $region34: #{rwkv6_block.6} parent=0 // pred_check
    _
  $region35: #{rwkv6_block.6} parent=0 // pred_check_branch
    %125 = sbr.rel (0) target = $region37
  $region36: #{rwkv6_block.6} parent=0 // pred_region
    _
  $region37: #{rwkv6_block.6} parent=0 // pred_fallthru
    _

// kernel: rwkv6_block.10
$region0: #{rwkv6_block.10}
  #allocation0 [shape = 'u32[]', space=smem, size = 0x4, offset = 0x4, fixed_abs, tag = 'smem constant byte address 0x4 - core index']
  #allocation1 [shape = 'u32[144,128]{1,0:T(1,128)}', space=vmem, size = 0x12000, scoped, tag = 'internal scratch']
  %s0 = inlined_call_operand.vmem [shape: f32[16,64], index: 0, kind: input, shape index: {}]
  %s1 = inlined_call_operand.vmem [shape: f32[1,64], index: 1, kind: input, shape index: {}]
  %s2 = inlined_call_operand.vmem [shape: f32[1,64], index: 2, kind: input, shape index: {}]
  %s3 = inlined_call_operand.vmem [shape: f32[16,64], index: 3, kind: output, shape index: {}]
  %s4 = sld [smem:[#allocation0]]
  $region22: #{rwkv6_block.10} parent=0
    _
  %s6 = ssub.s32 1, %s4
  %s7 = scalar_select 0, %s6, %s4
  // Predicated region
  $region2: #{rwkv6_block.10} parent=0 // pred_check
    _
  $region3: #{rwkv6_block.10} parent=0 // pred_check_branch
    %9 = sbr.rel (0) target = $region5
  $region4: #{rwkv6_block.10} parent=0 // pred_region
    _
  $region5: #{rwkv6_block.10} parent=0 // pred_fallthru
    _
  // Predicated region
  $region6: #{rwkv6_block.10} parent=0 // pred_check
    _
  $region7: #{rwkv6_block.10} parent=0 // pred_check_branch
    %11 = sbr.rel (0) target = $region9
  $region8: #{rwkv6_block.10} parent=0 // pred_region
    _
  $region9: #{rwkv6_block.10} parent=0 // pred_fallthru
    _
  // Predicated region
  $region10: #{rwkv6_block.10} parent=0 // pred_check
    _
  $region11: #{rwkv6_block.10} parent=0 // pred_check_branch
    %13 = sbr.rel (0) target = $region13
  $region12: #{rwkv6_block.10} parent=0 // pred_region
    _
  $region13: #{rwkv6_block.10} parent=0 // pred_fallthru
    _
  %v14 = vld [vmem:[%s0] sm:$0xff]
  %v15 = vld [vmem:[%s0 + $0x8] sm:$0xff]
  %v16 = vld [vmem:[%s1] sm:$0x1]
  %v17 = vld [vmem:[%s2] sm:$0x1]
  %vm18 = vcmask 523264
  %v19 = vsel %vm18, %v14, 0.0
  %20 = vadd.xlane.f32.xlu0 %v19
  %v21 = vpop.xlane.xlu0 %20
  %v22 = vsel %vm18, %v15, 0.0
  %23 = vadd.xlane.f32.xlu0 %v22
  %v24 = vpop.xlane.xlu0 %23
  %v25 = vrcp.pop 64.0
  %v26 = vmul.f32 %v21, %v25
  %v27 = vmul.f32 %v24, %v25
  %v28 = vsub.f32 %v14, %v26
  %v29 = vsub.f32 %v15, %v27
  %v30 = vmul.f32 %v28, %v28
  %v31 = vmul.f32 %v29, %v29
  %v32 = vsel %vm18, %v30, 0.0
  %33 = vadd.xlane.f32.xlu0 %v32
  %v34 = vpop.xlane.xlu0 %33
  %v35 = vsel %vm18, %v31, 0.0
  %36 = vadd.xlane.f32.xlu0 %v35
  %v37 = vpop.xlane.xlu0 %36
  %v38 = vmul.f32 %v34, %v25
  %v39 = vmul.f32 %v37, %v25
  %v40 = vadd.f32 %v38, 1e-05
  %v41 = vadd.f32 %v39, 1e-05
  %v42 = vrsqrt.pop %v40
  %v43 = vrsqrt.pop %v41
  %v44 = vmul.f32 %v28, %v42
  %v45 = vmul.f32 %v29, %v43
  %v47 = vlaneseq
  %v48 = vshrl.u32 %v47, 7
  %v49 = vsub.s32 0, %v48
  %v50 = vrot.slane %v16, %v49
  %v52 = vmul.f32 %v44, %v50
  %v53 = vmul.f32 %v45, %v50
  %v55 = vlaneseq
  %v56 = vshrl.u32 %v55, 7
  %v57 = vsub.s32 0, %v56
  %v58 = vrot.slane %v17, %v57
  %v60 = vadd.f32 %v52, %v58
  %v61 = vadd.f32 %v53, %v58
  %62 = vst.msk [vmem:[%s3] sm:$0xff] %vm18, %v60
  %63 = vst.msk [vmem:[%s3 + $0x8] sm:$0xff] %vm18, %v61
  // Predicated region
  $region14: #{rwkv6_block.10} parent=0 // pred_check
    _
  $region15: #{rwkv6_block.10} parent=0 // pred_check_branch
    %65 = sbr.rel (0) target = $region17
  $region16: #{rwkv6_block.10} parent=0 // pred_region
    _
  $region17: #{rwkv6_block.10} parent=0 // pred_fallthru
    _
  // Predicated region
  $region18: #{rwkv6_block.10} parent=0 // pred_check
    _
  $region19: #{rwkv6_block.10} parent=0 // pred_check_branch
    %67 = sbr.rel (0) target = $region21
  $region20: #{rwkv6_block.10} parent=0 // pred_region
    _
  $region21: #{rwkv6_block.10} parent=0 // pred_fallthru
    _

// kernel: rwkv6_block.7
$region0: #{rwkv6_block.7}
  #allocation0 [shape = 'u32[]', space=smem, size = 0x4, offset = 0x4, fixed_abs, tag = 'smem constant byte address 0x4 - core index']
  #allocation1 [shape = 'u32[144,128]{1,0:T(1,128)}', space=vmem, size = 0x12000, scoped, tag = 'internal scratch']
  %s0 = inlined_call_operand.vmem [shape: f32[16,64], index: 0, kind: input, shape index: {}]
  %s1 = inlined_call_operand.vmem [shape: f32[16,64], index: 1, kind: input, shape index: {}]
  %s2 = inlined_call_operand.vmem [shape: f32[1,64], index: 2, kind: input, shape index: {}]
  %s3 = inlined_call_operand.vmem [shape: bf16[64,40], index: 3, kind: input, shape index: {}]
  %s4 = inlined_call_operand.vmem [shape: bf16[5,8,64], index: 4, kind: input, shape index: {}]
  %s5 = inlined_call_operand.vmem [shape: f32[5,64], index: 5, kind: input, shape index: {}]
  %s6 = inlined_call_operand.vmem [shape: bf16[64,32], index: 6, kind: input, shape index: {}]
  %s7 = inlined_call_operand.vmem [shape: bf16[64,32], index: 7, kind: input, shape index: {}]
  %s8 = inlined_call_operand.vmem [shape: bf16[64,64], index: 8, kind: input, shape index: {}]
  %s9 = inlined_call_operand.vmem [shape: bf16[64,16], index: 9, kind: input, shape index: {}]
  %s10 = inlined_call_operand.vmem [shape: bf16[16,32], index: 10, kind: input, shape index: {}]
  %s11 = inlined_call_operand.vmem [shape: f32[1,32], index: 11, kind: input, shape index: {}]
  %s12 = inlined_call_operand.vmem [shape: bf16[64,16], index: 12, kind: input, shape index: {}]
  %s13 = inlined_call_operand.vmem [shape: bf16[16,64], index: 13, kind: input, shape index: {}]
  %s14 = inlined_call_operand.vmem [shape: f32[1,64], index: 14, kind: input, shape index: {}]
  %s15 = inlined_call_operand.vmem [shape: f32[16,32], index: 15, kind: output, shape index: {0}]
  %s16 = inlined_call_operand.vmem [shape: f32[16,32], index: 16, kind: output, shape index: {1}]
  %s17 = inlined_call_operand.vmem [shape: f32[16,32], index: 17, kind: output, shape index: {2}]
  %s18 = inlined_call_operand.vmem [shape: f32[16,64], index: 18, kind: output, shape index: {3}]
  %s19 = inlined_call_operand.vmem [shape: f32[16,64], index: 19, kind: output, shape index: {4}]
  %20 = xla_tuple %s15, %s16, %s17, %s18, %s19
  %s21 = sld [smem:[#allocation0]]
  $region102: #{rwkv6_block.7} parent=0
    _
  %s23 = ssub.s32 1, %s21
  %s24 = scalar_select 0, %s23, %s21
  // Predicated region
  $region2: #{rwkv6_block.7} parent=0 // pred_check
    _
  $region3: #{rwkv6_block.7} parent=0 // pred_check_branch
    %26 = sbr.rel (0) target = $region5
  $region4: #{rwkv6_block.7} parent=0 // pred_region
    _
  $region5: #{rwkv6_block.7} parent=0 // pred_fallthru
    _
  // Predicated region
  $region6: #{rwkv6_block.7} parent=0 // pred_check
    _
  $region7: #{rwkv6_block.7} parent=0 // pred_check_branch
    %28 = sbr.rel (0) target = $region9
  $region8: #{rwkv6_block.7} parent=0 // pred_region
    _
  $region9: #{rwkv6_block.7} parent=0 // pred_fallthru
    _
  // Predicated region
  $region10: #{rwkv6_block.7} parent=0 // pred_check
    _
  $region11: #{rwkv6_block.7} parent=0 // pred_check_branch
    %30 = sbr.rel (0) target = $region13
  $region12: #{rwkv6_block.7} parent=0 // pred_region
    _
  $region13: #{rwkv6_block.7} parent=0 // pred_fallthru
    _
  // Predicated region
  $region14: #{rwkv6_block.7} parent=0 // pred_check
    _
  $region15: #{rwkv6_block.7} parent=0 // pred_check_branch
    %32 = sbr.rel (0) target = $region17
  $region16: #{rwkv6_block.7} parent=0 // pred_region
    _
  $region17: #{rwkv6_block.7} parent=0 // pred_fallthru
    _
  // Predicated region
  $region18: #{rwkv6_block.7} parent=0 // pred_check
    _
  $region19: #{rwkv6_block.7} parent=0 // pred_check_branch
    %34 = sbr.rel (0) target = $region21
  $region20: #{rwkv6_block.7} parent=0 // pred_region
    _
  $region21: #{rwkv6_block.7} parent=0 // pred_fallthru
    _
  // Predicated region
  $region22: #{rwkv6_block.7} parent=0 // pred_check
    _
  $region23: #{rwkv6_block.7} parent=0 // pred_check_branch
    %36 = sbr.rel (0) target = $region25
  $region24: #{rwkv6_block.7} parent=0 // pred_region
    _
  $region25: #{rwkv6_block.7} parent=0 // pred_fallthru
    _
  // Predicated region
  $region26: #{rwkv6_block.7} parent=0 // pred_check
    _
  $region27: #{rwkv6_block.7} parent=0 // pred_check_branch
    %38 = sbr.rel (0) target = $region29
  $region28: #{rwkv6_block.7} parent=0 // pred_region
    _
  $region29: #{rwkv6_block.7} parent=0 // pred_fallthru
    _
  // Predicated region
  $region30: #{rwkv6_block.7} parent=0 // pred_check
    _
  $region31: #{rwkv6_block.7} parent=0 // pred_check_branch
    %40 = sbr.rel (0) target = $region33
  $region32: #{rwkv6_block.7} parent=0 // pred_region
    _
  $region33: #{rwkv6_block.7} parent=0 // pred_fallthru
    _
  // Predicated region
  $region34: #{rwkv6_block.7} parent=0 // pred_check
    _
  $region35: #{rwkv6_block.7} parent=0 // pred_check_branch
    %42 = sbr.rel (0) target = $region37
  $region36: #{rwkv6_block.7} parent=0 // pred_region
    _
  $region37: #{rwkv6_block.7} parent=0 // pred_fallthru
    _
  // Predicated region
  $region38: #{rwkv6_block.7} parent=0 // pred_check
    _
  $region39: #{rwkv6_block.7} parent=0 // pred_check_branch
    %44 = sbr.rel (0) target = $region41
  $region40: #{rwkv6_block.7} parent=0 // pred_region
    _
  $region41: #{rwkv6_block.7} parent=0 // pred_fallthru
    _
  // Predicated region
  $region42: #{rwkv6_block.7} parent=0 // pred_check
    _
  $region43: #{rwkv6_block.7} parent=0 // pred_check_branch
    %46 = sbr.rel (0) target = $region45
  $region44: #{rwkv6_block.7} parent=0 // pred_region
    _
  $region45: #{rwkv6_block.7} parent=0 // pred_fallthru
    _
  // Predicated region
  $region46: #{rwkv6_block.7} parent=0 // pred_check
    _
  $region47: #{rwkv6_block.7} parent=0 // pred_check_branch
    %48 = sbr.rel (0) target = $region49
  $region48: #{rwkv6_block.7} parent=0 // pred_region
    _
  $region49: #{rwkv6_block.7} parent=0 // pred_fallthru
    _
  // Predicated region
  $region50: #{rwkv6_block.7} parent=0 // pred_check
    _
  $region51: #{rwkv6_block.7} parent=0 // pred_check_branch
    %50 = sbr.rel (0) target = $region53
  $region52: #{rwkv6_block.7} parent=0 // pred_region
    _
  $region53: #{rwkv6_block.7} parent=0 // pred_fallthru
    _
  // Predicated region
  $region54: #{rwkv6_block.7} parent=0 // pred_check
    _
  $region55: #{rwkv6_block.7} parent=0 // pred_check_branch
    %52 = sbr.rel (0) target = $region57
  $region56: #{rwkv6_block.7} parent=0 // pred_region
    _
  $region57: #{rwkv6_block.7} parent=0 // pred_fallthru
    _
  // Predicated region
  $region58: #{rwkv6_block.7} parent=0 // pred_check
    _
  $region59: #{rwkv6_block.7} parent=0 // pred_check_branch
    %54 = sbr.rel (0) target = $region61
  $region60: #{rwkv6_block.7} parent=0 // pred_region
    _
  $region61: #{rwkv6_block.7} parent=0 // pred_fallthru
    _
  %v56 = vld [vmem:[%s0] sm:$0xff]
  %v57 = vld [vmem:[%s0 + $0x8] sm:$0xff]
  %v58 = vld [vmem:[%s1] sm:$0xff]
  %v59 = vld [vmem:[%s1 + $0x8] sm:$0xff]
  %v60 = vld [vmem:[%s2] sm:$0x1]
  %v62 = vlaneseq
  %v63 = vshrl.u32 %v62, 7
  %v64 = vsub.s32 0, %v63
  %v65 = vrot.slane %v60, %v64
  %v67 = vmul.f32 %v58, %v65
  %v68 = vmul.f32 %v59, %v65
  %v69 = vadd.f32 %v56, %v67
  %v70 = vadd.f32 %v57, %v68
  %v71 = vpack.c.bf16 %v70, %v69
  %v72 = vld [vmem:[%s3] sm:$0xf]
  %v73 = vld [vmem:[%s3 + $0x4] sm:$0xf]
  %v74 = vld [vmem:[%s3 + $0x8] sm:$0xf]
  %v75 = vld [vmem:[%s3 + $0xc] sm:$0xf]
  %v76 = vld [vmem:[%s3 + $0x10] sm:$0xf]
  %v77 = vld [vmem:[%s3 + $0x14] sm:$0xf]
  %v78 = vld [vmem:[%s3 + $0x18] sm:$0xf]
  %v79 = vld [vmem:[%s3 + $0x1c] sm:$0xf]
  %v88 = vunpack.c.l.b16 %v72
  %v89 = vunpack.c.l.b16 %v73
  %v90 = vunpack.c.l.b16 %v74
  %v91 = vunpack.c.l.b16 %v75
  %v92 = vunpack.c.l.b16 %v76
  %v93 = vunpack.c.l.b16 %v77
  %v94 = vunpack.c.l.b16 %v78
  %v95 = vunpack.c.l.b16 %v79
  %v96 = vpack.c.b16 %v89, %v88
  %v97 = vpack.c.b16 %v91, %v90
  %v98 = vpack.c.b16 %v93, %v92
  %v99 = vpack.c.b16 %v95, %v94
  %vm104 = vcmask 523264
  %v106 = vsel %vm104, %v71, 0
  %108 = vmatprep.subr.bf16.mxu0 0
  %109 = vmatpush1.bf16.msra.mxu0 0
  %110 = vmatprep.subr.bf16.mxu0 0
  %111 = vmatpush1.bf16.msra.mxu0 0
  %112 = vmatprep.subr.bf16.mxu0 0
  %113 = vmatpush1.bf16.msra.mxu0 0
  %114 = vmatprep.subr.bf16.mxu0 0
  %115 = vmatpush1.bf16.msra.mxu0 0
  %116 = vmatprep.subr.bf16.mxu0 0
  %117 = vmatpush1.bf16.msra.mxu0 %v99
  %118 = vmatprep.subr.bf16.mxu0 0
  %119 = vmatpush1.bf16.msra.mxu0 %v98
  %120 = vmatprep.subr.bf16.mxu0 0
  %121 = vmatpush1.bf16.msra.mxu0 %v97
  %122 = vmatprep.subr.bf16.mxu0 0
  %123 = vmatpush1.bf16.msra.mxu0 %v96
  %124 = vmatprep.subr.bf16.mxu0 0
  %125 = vmatpush2.bf16.msra.mxu0 0
  %126 = vmatprep.subr.bf16.mxu0 0
  %127 = vmatpush2.bf16.msra.mxu0 0
  %128 = vmatprep.subr.bf16.mxu0 0
  %129 = vmatpush2.bf16.msra.mxu0 0
  %130 = vmatprep.subr.bf16.mxu0 0
  %131 = vmatpush2.bf16.msra.mxu0 0
  %132 = vmatprep.subr.bf16.mxu0 0
  %133 = vmatpush2.bf16.msra.mxu0 0
  %134 = vmatprep.subr.bf16.mxu0 0
  %135 = vmatpush2.bf16.msra.mxu0 0
  %136 = vmatprep.subr.bf16.mxu0 0
  %137 = vmatpush2.bf16.msra.mxu0 0
  %138 = vmatprep.subr.bf16.mxu0 0
  %139 = vmatpush2.bf16.msra.mxu0 0
  %140 = vmatprep.mubr.bf16.mxu0 0
  %141 = vmatmul.mubr.bf16.gmra.mxu0 %v106
  %v142 = vpop.f32.mrf.mxu0
  %v143 = vadd.f32 0.0, %v142
  %v144 = vpop.f32.mrf.mxu0
  %v145 = vpop.f32.mrf.mxu0
  %v146 = vadd.f32 0.0, %v145
  %v147 = vpop.f32.mrf.mxu0
  %148 = vdwg.mxu0
  %v149 = vtanh.pop %v143
  %v150 = vtanh.pop %v146
  %v151 = vld [vmem:[%s4] sm:$0xf]
  %v152 = vld [vmem:[%s4 + $0x4] sm:$0xf]
  %v153 = vld [vmem:[%s4 + $0x8] sm:$0xf]
  %v154 = vld [vmem:[%s4 + $0xc] sm:$0xf]
  %v155 = vld [vmem:[%s4 + $0x10] sm:$0xf]
  %v156 = vld [vmem:[%s5] sm:$0x1f]
  %v157 = vpack.c.bf16 %v150, %v149
  %v158 = vlaneseq
  %v159 = vshrl.u32 %v158, 7
  %v160 = vsub.s32 0, %v159
  %v161 = vrot.slane %v156, %v160
  %vm162 = vcmask 64512
  %v164 = vsel %vm162, %v157, 0
  %vm166 = vcmask 1043456
  %v168 = vsel %vm166, %v151, 0
  %170 = vmatprep.subr.bf16.mxu0 0
  %171 = vmatpush1.bf16.msra.mxu0 0
  %172 = vmatprep.subr.bf16.mxu0 0
  %173 = vmatpush1.bf16.msra.mxu0 0
  %174 = vmatprep.subr.bf16.mxu0 0
  %175 = vmatpush1.bf16.msra.mxu0 0
  %176 = vmatprep.subr.bf16.mxu0 0
  %177 = vmatpush1.bf16.msra.mxu0 0
  %178 = vmatprep.subr.bf16.mxu0 0
  %179 = vmatpush1.bf16.msra.mxu0 0
  %180 = vmatprep.subr.bf16.mxu0 0
  %181 = vmatpush1.bf16.msra.mxu0 0
  %182 = vmatprep.subr.bf16.mxu0 0
  %183 = vmatpush1.bf16.msra.mxu0 0
  %184 = vmatprep.subr.bf16.mxu0 0
  %185 = vmatpush1.bf16.msra.mxu0 %v168
  %186 = vmatprep.subr.bf16.mxu0 0
  %187 = vmatpush2.bf16.msra.mxu0 0
  %188 = vmatprep.subr.bf16.mxu0 0
  %189 = vmatpush2.bf16.msra.mxu0 0
  %190 = vmatprep.subr.bf16.mxu0 0
  %191 = vmatpush2.bf16.msra.mxu0 0
  %192 = vmatprep.subr.bf16.mxu0 0
  %193 = vmatpush2.bf16.msra.mxu0 0
  %194 = vmatprep.subr.bf16.mxu0 0
  %195 = vmatpush2.bf16.msra.mxu0 0
  %196 = vmatprep.subr.bf16.mxu0 0
  %197 = vmatpush2.bf16.msra.mxu0 0
  %198 = vmatprep.subr.bf16.mxu0 0
  %199 = vmatpush2.bf16.msra.mxu0 0
  %200 = vmatprep.subr.bf16.mxu0 0
  %201 = vmatpush2.bf16.msra.mxu0 0
  %202 = vmatprep.mubr.bf16.mxu0 0
  %203 = vmatmul.mubr.bf16.gmra.mxu0 %v164
  %v204 = vpop.f32.mrf.mxu0
  %v205 = vadd.f32 %v161, %v204
  %v206 = vpop.f32.mrf.mxu0
  %v207 = vpop.f32.mrf.mxu0
  %v208 = vadd.f32 %v161, %v207
  %v209 = vpop.f32.mrf.mxu0
  %210 = vdwg.mxu0
  %v211 = vlaneseq
  %v212 = vshrl.u32 %v211, 7
  %v213 = vsub.s32 1, %v212
  %v214 = vrot.slane %v156, %v213
  %216 = vrot.lane.b32.xlu0 %v157, 120
  %v217 = vpop.permute.xlu0 %216
  %v219 = vsel %vm162, %v217, 0
  %v222 = vsel %vm166, %v152, 0
  %224 = vmatprep.subr.bf16.mxu0 0
  %225 = vmatpush1.bf16.msra.mxu0 0
  %226 = vmatprep.subr.bf16.mxu0 0
  %227 = vmatpush1.bf16.msra.mxu0 0
  %228 = vmatprep.subr.bf16.mxu0 0
  %229 = vmatpush1.bf16.msra.mxu0 0
  %230 = vmatprep.subr.bf16.mxu0 0
  %231 = vmatpush1.bf16.msra.mxu0 0
  %232 = vmatprep.subr.bf16.mxu0 0
  %233 = vmatpush1.bf16.msra.mxu0 0
  %234 = vmatprep.subr.bf16.mxu0 0
  %235 = vmatpush1.bf16.msra.mxu0 0
  %236 = vmatprep.subr.bf16.mxu0 0
  %237 = vmatpush1.bf16.msra.mxu0 0
  %238 = vmatprep.subr.bf16.mxu0 0
  %239 = vmatpush1.bf16.msra.mxu0 %v222
  %240 = vmatprep.subr.bf16.mxu0 0
  %241 = vmatpush2.bf16.msra.mxu0 0
  %242 = vmatprep.subr.bf16.mxu0 0
  %243 = vmatpush2.bf16.msra.mxu0 0
  %244 = vmatprep.subr.bf16.mxu0 0
  %245 = vmatpush2.bf16.msra.mxu0 0
  %246 = vmatprep.subr.bf16.mxu0 0
  %247 = vmatpush2.bf16.msra.mxu0 0
  %248 = vmatprep.subr.bf16.mxu0 0
  %249 = vmatpush2.bf16.msra.mxu0 0
  %250 = vmatprep.subr.bf16.mxu0 0
  %251 = vmatpush2.bf16.msra.mxu0 0
  %252 = vmatprep.subr.bf16.mxu0 0
  %253 = vmatpush2.bf16.msra.mxu0 0
  %254 = vmatprep.subr.bf16.mxu0 0
  %255 = vmatpush2.bf16.msra.mxu0 0
  %256 = vmatprep.mubr.bf16.mxu0 0
  %257 = vmatmul.mubr.bf16.gmra.mxu0 %v219
  %v258 = vpop.f32.mrf.mxu0
  %v259 = vadd.f32 %v214, %v258
  %v260 = vpop.f32.mrf.mxu0
  %v261 = vpop.f32.mrf.mxu0
  %v262 = vadd.f32 %v214, %v261
  %v263 = vpop.f32.mrf.mxu0
  %264 = vdwg.mxu0
  %v265 = vlaneseq
  %v266 = vshrl.u32 %v265, 7
  %v267 = vsub.s32 2, %v266
  %v268 = vrot.slane %v156, %v267
  %269 = vrot.lane.b32.xlu0 %v157, 112
  %v270 = vpop.permute.xlu0 %269
  %v272 = vsel %vm162, %v270, 0
  %v275 = vsel %vm166, %v153, 0
  %277 = vmatprep.subr.bf16.mxu0 0
  %278 = vmatpush1.bf16.msra.mxu0 0
  %279 = vmatprep.subr.bf16.mxu0 0
  %280 = vmatpush1.bf16.msra.mxu0 0
  %281 = vmatprep.subr.bf16.mxu0 0
  %282 = vmatpush1.bf16.msra.mxu0 0
  %283 = vmatprep.subr.bf16.mxu0 0
  %284 = vmatpush1.bf16.msra.mxu0 0
  %285 = vmatprep.subr.bf16.mxu0 0
  %286 = vmatpush1.bf16.msra.mxu0 0
  %287 = vmatprep.subr.bf16.mxu0 0
  %288 = vmatpush1.bf16.msra.mxu0 0
  %289 = vmatprep.subr.bf16.mxu0 0
  %290 = vmatpush1.bf16.msra.mxu0 0
  %291 = vmatprep.subr.bf16.mxu0 0
  %292 = vmatpush1.bf16.msra.mxu0 %v275
  %293 = vmatprep.subr.bf16.mxu0 0
  %294 = vmatpush2.bf16.msra.mxu0 0
  %295 = vmatprep.subr.bf16.mxu0 0
  %296 = vmatpush2.bf16.msra.mxu0 0
  %297 = vmatprep.subr.bf16.mxu0 0
  %298 = vmatpush2.bf16.msra.mxu0 0
  %299 = vmatprep.subr.bf16.mxu0 0
  %300 = vmatpush2.bf16.msra.mxu0 0
  %301 = vmatprep.subr.bf16.mxu0 0
  %302 = vmatpush2.bf16.msra.mxu0 0
  %303 = vmatprep.subr.bf16.mxu0 0
  %304 = vmatpush2.bf16.msra.mxu0 0
  %305 = vmatprep.subr.bf16.mxu0 0
  %306 = vmatpush2.bf16.msra.mxu0 0
  %307 = vmatprep.subr.bf16.mxu0 0
  %308 = vmatpush2.bf16.msra.mxu0 0
  %309 = vmatprep.mubr.bf16.mxu0 0
  %310 = vmatmul.mubr.bf16.gmra.mxu0 %v272
  %v311 = vpop.f32.mrf.mxu0
  %v312 = vadd.f32 %v268, %v311
  %v313 = vpop.f32.mrf.mxu0
  %v314 = vpop.f32.mrf.mxu0
  %v315 = vadd.f32 %v268, %v314
  %v316 = vpop.f32.mrf.mxu0
  %317 = vdwg.mxu0
  %v318 = vlaneseq
  %v319 = vshrl.u32 %v318, 7
  %v320 = vsub.s32 3, %v319
  %v321 = vrot.slane %v156, %v320
  %322 = vrot.lane.b32.xlu0 %v157, 104
  %v323 = vpop.permute.xlu0 %322
  %v325 = vsel %vm162, %v323, 0
  %v328 = vsel %vm166, %v154, 0
  %330 = vmatprep.subr.bf16.mxu0 0
  %331 = vmatpush1.bf16.msra.mxu0 0
  %332 = vmatprep.subr.bf16.mxu0 0
  %333 = vmatpush1.bf16.msra.mxu0 0
  %334 = vmatprep.subr.bf16.mxu0 0
  %335 = vmatpush1.bf16.msra.mxu0 0
  %336 = vmatprep.subr.bf16.mxu0 0
  %337 = vmatpush1.bf16.msra.mxu0 0
  %338 = vmatprep.subr.bf16.mxu0 0
  %339 = vmatpush1.bf16.msra.mxu0 0
  %340 = vmatprep.subr.bf16.mxu0 0
  %341 = vmatpush1.bf16.msra.mxu0 0
  %342 = vmatprep.subr.bf16.mxu0 0
  %343 = vmatpush1.bf16.msra.mxu0 0
  %344 = vmatprep.subr.bf16.mxu0 0
  %345 = vmatpush1.bf16.msra.mxu0 %v328
  %346 = vmatprep.subr.bf16.mxu0 0
  %347 = vmatpush2.bf16.msra.mxu0 0
  %348 = vmatprep.subr.bf16.mxu0 0
  %349 = vmatpush2.bf16.msra.mxu0 0
  %350 = vmatprep.subr.bf16.mxu0 0
  %351 = vmatpush2.bf16.msra.mxu0 0
  %352 = vmatprep.subr.bf16.mxu0 0
  %353 = vmatpush2.bf16.msra.mxu0 0
  %354 = vmatprep.subr.bf16.mxu0 0
  %355 = vmatpush2.bf16.msra.mxu0 0
  %356 = vmatprep.subr.bf16.mxu0 0
  %357 = vmatpush2.bf16.msra.mxu0 0
  %358 = vmatprep.subr.bf16.mxu0 0
  %359 = vmatpush2.bf16.msra.mxu0 0
  %360 = vmatprep.subr.bf16.mxu0 0
  %361 = vmatpush2.bf16.msra.mxu0 0
  %362 = vmatprep.mubr.bf16.mxu0 0
  %363 = vmatmul.mubr.bf16.gmra.mxu0 %v325
  %v364 = vpop.f32.mrf.mxu0
  %v365 = vadd.f32 %v321, %v364
  %v366 = vpop.f32.mrf.mxu0
  %v367 = vpop.f32.mrf.mxu0
  %v368 = vadd.f32 %v321, %v367
  %v369 = vpop.f32.mrf.mxu0
  %370 = vdwg.mxu0
  %v371 = vlaneseq
  %v372 = vshrl.u32 %v371, 7
  %v373 = vsub.s32 4, %v372
  %v374 = vrot.slane %v156, %v373
  %375 = vrot.lane.b32.xlu0 %v157, 96
  %v376 = vpop.permute.xlu0 %375
  %v378 = vsel %vm162, %v376, 0
  %v381 = vsel %vm166, %v155, 0
  %383 = vmatprep.subr.bf16.mxu0 0
  %384 = vmatpush1.bf16.msra.mxu0 0
  %385 = vmatprep.subr.bf16.mxu0 0
  %386 = vmatpush1.bf16.msra.mxu0 0
  %387 = vmatprep.subr.bf16.mxu0 0
  %388 = vmatpush1.bf16.msra.mxu0 0
  %389 = vmatprep.subr.bf16.mxu0 0
  %390 = vmatpush1.bf16.msra.mxu0 0
  %391 = vmatprep.subr.bf16.mxu0 0
  %392 = vmatpush1.bf16.msra.mxu0 0
  %393 = vmatprep.subr.bf16.mxu0 0
  %394 = vmatpush1.bf16.msra.mxu0 0
  %395 = vmatprep.subr.bf16.mxu0 0
  %396 = vmatpush1.bf16.msra.mxu0 0
  %397 = vmatprep.subr.bf16.mxu0 0
  %398 = vmatpush1.bf16.msra.mxu0 %v381
  %399 = vmatprep.subr.bf16.mxu0 0
  %400 = vmatpush2.bf16.msra.mxu0 0
  %401 = vmatprep.subr.bf16.mxu0 0
  %402 = vmatpush2.bf16.msra.mxu0 0
  %403 = vmatprep.subr.bf16.mxu0 0
  %404 = vmatpush2.bf16.msra.mxu0 0
  %405 = vmatprep.subr.bf16.mxu0 0
  %406 = vmatpush2.bf16.msra.mxu0 0
  %407 = vmatprep.subr.bf16.mxu0 0
  %408 = vmatpush2.bf16.msra.mxu0 0
  %409 = vmatprep.subr.bf16.mxu0 0
  %410 = vmatpush2.bf16.msra.mxu0 0
  %411 = vmatprep.subr.bf16.mxu0 0
  %412 = vmatpush2.bf16.msra.mxu0 0
  %413 = vmatprep.subr.bf16.mxu0 0
  %414 = vmatpush2.bf16.msra.mxu0 0
  %415 = vmatprep.mubr.bf16.mxu0 0
  %416 = vmatmul.mubr.bf16.gmra.mxu0 %v378
  %v417 = vpop.f32.mrf.mxu0
  %v418 = vadd.f32 %v374, %v417
  %v419 = vpop.f32.mrf.mxu0
  %v420 = vpop.f32.mrf.mxu0
  %v421 = vadd.f32 %v374, %v420
  %v422 = vpop.f32.mrf.mxu0
  %423 = vdwg.mxu0
  %v424 = vmul.f32 %v58, %v205
  %v425 = vmul.f32 %v59, %v208
  %v426 = vadd.f32 %v56, %v424
  %v427 = vadd.f32 %v57, %v425
  %v428 = vpack.c.bf16 %v427, %v426
  %v429 = vld [vmem:[%s6] sm:$0xf]
  %v430 = vld [vmem:[%s6 + $0x4] sm:$0xf]
  %v431 = vld [vmem:[%s6 + $0x8] sm:$0xf]
  %v432 = vld [vmem:[%s6 + $0xc] sm:$0xf]
  %v433 = vld [vmem:[%s6 + $0x10] sm:$0xf]
  %v434 = vld [vmem:[%s6 + $0x14] sm:$0xf]
  %v435 = vld [vmem:[%s6 + $0x18] sm:$0xf]
  %v436 = vld [vmem:[%s6 + $0x1c] sm:$0xf]
  %v445 = vunpack.c.l.b16 %v429
  %v446 = vunpack.c.l.b16 %v430
  %v447 = vunpack.c.l.b16 %v431
  %v448 = vunpack.c.l.b16 %v432
  %v449 = vunpack.c.l.b16 %v433
  %v450 = vunpack.c.l.b16 %v434
  %v451 = vunpack.c.l.b16 %v435
  %v452 = vunpack.c.l.b16 %v436
  %v453 = vpack.c.b16 %v446, %v445
  %v454 = vpack.c.b16 %v448, %v447
  %v455 = vpack.c.b16 %v450, %v449
  %v456 = vpack.c.b16 %v452, %v451
  %v462 = vsel %vm104, %v428, 0
  %464 = vmatprep.subr.bf16.mxu0 0
  %465 = vmatpush1.bf16.msra.mxu0 0
  %466 = vmatprep.subr.bf16.mxu0 0
  %467 = vmatpush1.bf16.msra.mxu0 0
  %468 = vmatprep.subr.bf16.mxu0 0
  %469 = vmatpush1.bf16.msra.mxu0 0
  %470 = vmatprep.subr.bf16.mxu0 0
  %471 = vmatpush1.bf16.msra.mxu0 0
  %472 = vmatprep.subr.bf16.mxu0 0
  %473 = vmatpush1.bf16.msra.mxu0 %v456
  %474 = vmatprep.subr.bf16.mxu0 0
  %475 = vmatpush1.bf16.msra.mxu0 %v455
  %476 = vmatprep.subr.bf16.mxu0 0
  %477 = vmatpush1.bf16.msra.mxu0 %v454
  %478 = vmatprep.subr.bf16.mxu0 0
  %479 = vmatpush1.bf16.msra.mxu0 %v453
  %480 = vmatprep.subr.bf16.mxu0 0
  %481 = vmatpush2.bf16.msra.mxu0 0
  %482 = vmatprep.subr.bf16.mxu0 0
  %483 = vmatpush2.bf16.msra.mxu0 0
  %484 = vmatprep.subr.bf16.mxu0 0
  %485 = vmatpush2.bf16.msra.mxu0 0
  %486 = vmatprep.subr.bf16.mxu0 0
  %487 = vmatpush2.bf16.msra.mxu0 0
  %488 = vmatprep.subr.bf16.mxu0 0
  %489 = vmatpush2.bf16.msra.mxu0 0
  %490 = vmatprep.subr.bf16.mxu0 0
  %491 = vmatpush2.bf16.msra.mxu0 0
  %492 = vmatprep.subr.bf16.mxu0 0
  %493 = vmatpush2.bf16.msra.mxu0 0
  %494 = vmatprep.subr.bf16.mxu0 0
  %495 = vmatpush2.bf16.msra.mxu0 0
  %496 = vmatprep.mubr.bf16.mxu0 0
  %497 = vmatmul.mubr.bf16.gmra.mxu0 %v462
  %v498 = vpop.f32.mrf.mxu0
  %v499 = vadd.f32 0.0, %v498
  %v500 = vpop.f32.mrf.mxu0
  %v501 = vpop.f32.mrf.mxu0
  %v502 = vadd.f32 0.0, %v501
  %v503 = vpop.f32.mrf.mxu0
  %504 = vdwg.mxu0
  %vm505 = vcmask 261120
  %506 = vst.msk [vmem:[%s15] sm:$0xff] %vm505, %v499
  %507 = vst.msk [vmem:[%s15 + $0x8] sm:$0xff] %vm505, %v502
  %v508 = vmul.f32 %v58, %v312
  %v509 = vmul.f32 %v59, %v315
  %v510 = vadd.f32 %v56, %v508
  %v511 = vadd.f32 %v57, %v509
  %v512 = vpack.c.bf16 %v511, %v510
  %v513 = vld [vmem:[%s7] sm:$0xf]
  %v514 = vld [vmem:[%s7 + $0x4] sm:$0xf]
  %v515 = vld [vmem:[%s7 + $0x8] sm:$0xf]
  %v516 = vld [vmem:[%s7 + $0xc] sm:$0xf]
  %v517 = vld [vmem:[%s7 + $0x10] sm:$0xf]
  %v518 = vld [vmem:[%s7 + $0x14] sm:$0xf]
  %v519 = vld [vmem:[%s7 + $0x18] sm:$0xf]
  %v520 = vld [vmem:[%s7 + $0x1c] sm:$0xf]
  %v529 = vunpack.c.l.b16 %v513
  %v530 = vunpack.c.l.b16 %v514
  %v531 = vunpack.c.l.b16 %v515
  %v532 = vunpack.c.l.b16 %v516
  %v533 = vunpack.c.l.b16 %v517
  %v534 = vunpack.c.l.b16 %v518
  %v535 = vunpack.c.l.b16 %v519
  %v536 = vunpack.c.l.b16 %v520
  %v537 = vpack.c.b16 %v530, %v529
  %v538 = vpack.c.b16 %v532, %v531
  %v539 = vpack.c.b16 %v534, %v533
  %v540 = vpack.c.b16 %v536, %v535
  %v546 = vsel %vm104, %v512, 0
  %548 = vmatprep.subr.bf16.mxu0 0
  %549 = vmatpush1.bf16.msra.mxu0 0
  %550 = vmatprep.subr.bf16.mxu0 0
  %551 = vmatpush1.bf16.msra.mxu0 0
  %552 = vmatprep.subr.bf16.mxu0 0
  %553 = vmatpush1.bf16.msra.mxu0 0
  %554 = vmatprep.subr.bf16.mxu0 0
  %555 = vmatpush1.bf16.msra.mxu0 0
  %556 = vmatprep.subr.bf16.mxu0 0
  %557 = vmatpush1.bf16.msra.mxu0 %v540
  %558 = vmatprep.subr.bf16.mxu0 0
  %559 = vmatpush1.bf16.msra.mxu0 %v539
  %560 = vmatprep.subr.bf16.mxu0 0
  %561 = vmatpush1.bf16.msra.mxu0 %v538
  %562 = vmatprep.subr.bf16.mxu0 0
  %563 = vmatpush1.bf16.msra.mxu0 %v537
  %564 = vmatprep.subr.bf16.mxu0 0
  %565 = vmatpush2.bf16.msra.mxu0 0
  %566 = vmatprep.subr.bf16.mxu0 0
  %567 = vmatpush2.bf16.msra.mxu0 0
  %568 = vmatprep.subr.bf16.mxu0 0
  %569 = vmatpush2.bf16.msra.mxu0 0
  %570 = vmatprep.subr.bf16.mxu0 0
  %571 = vmatpush2.bf16.msra.mxu0 0
  %572 = vmatprep.subr.bf16.mxu0 0
  %573 = vmatpush2.bf16.msra.mxu0 0
  %574 = vmatprep.subr.bf16.mxu0 0
  %575 = vmatpush2.bf16.msra.mxu0 0
  %576 = vmatprep.subr.bf16.mxu0 0
  %577 = vmatpush2.bf16.msra.mxu0 0
  %578 = vmatprep.subr.bf16.mxu0 0
  %579 = vmatpush2.bf16.msra.mxu0 0
  %580 = vmatprep.mubr.bf16.mxu0 0
  %581 = vmatmul.mubr.bf16.gmra.mxu0 %v546
  %v582 = vpop.f32.mrf.mxu0
  %v583 = vadd.f32 0.0, %v582
  %v584 = vpop.f32.mrf.mxu0
  %v585 = vpop.f32.mrf.mxu0
  %v586 = vadd.f32 0.0, %v585
  %v587 = vpop.f32.mrf.mxu0
  %588 = vdwg.mxu0
  %589 = vst.msk [vmem:[%s16] sm:$0xff] %vm505, %v583
  %590 = vst.msk [vmem:[%s16 + $0x8] sm:$0xff] %vm505, %v586
  %v591 = vmul.f32 %v58, %v365
  %v592 = vmul.f32 %v59, %v368
  %v593 = vadd.f32 %v56, %v591
  %v594 = vadd.f32 %v57, %v592
  %v595 = vpack.c.bf16 %v594, %v593
  %v596 = vld [vmem:[%s8] sm:$0xf]
  %v597 = vld [vmem:[%s8 + $0x4] sm:$0xf]
  %v598 = vld [vmem:[%s8 + $0x8] sm:$0xf]
  %v599 = vld [vmem:[%s8 + $0xc] sm:$0xf]
  %v600 = vld [vmem:[%s8 + $0x10] sm:$0xf]
  %v601 = vld [vmem:[%s8 + $0x14] sm:$0xf]
  %v602 = vld [vmem:[%s8 + $0x18] sm:$0xf]
  %v603 = vld [vmem:[%s8 + $0x1c] sm:$0xf]
  %v612 = vunpack.c.l.b16 %v596
  %v613 = vunpack.c.l.b16 %v597
  %v614 = vunpack.c.l.b16 %v598
  %v615 = vunpack.c.l.b16 %v599
  %v616 = vunpack.c.l.b16 %v600
  %v617 = vunpack.c.l.b16 %v601
  %v618 = vunpack.c.l.b16 %v602
  %v619 = vunpack.c.l.b16 %v603
  %v620 = vpack.c.b16 %v613, %v612
  %v621 = vpack.c.b16 %v615, %v614
  %v622 = vpack.c.b16 %v617, %v616
  %v623 = vpack.c.b16 %v619, %v618
  %v629 = vsel %vm104, %v595, 0
  %631 = vmatprep.subr.bf16.mxu0 0
  %632 = vmatpush1.bf16.msra.mxu0 0
  %633 = vmatprep.subr.bf16.mxu0 0
  %634 = vmatpush1.bf16.msra.mxu0 0
  %635 = vmatprep.subr.bf16.mxu0 0
  %636 = vmatpush1.bf16.msra.mxu0 0
  %637 = vmatprep.subr.bf16.mxu0 0
  %638 = vmatpush1.bf16.msra.mxu0 0
  %639 = vmatprep.subr.bf16.mxu0 0
  %640 = vmatpush1.bf16.msra.mxu0 %v623
  %641 = vmatprep.subr.bf16.mxu0 0
  %642 = vmatpush1.bf16.msra.mxu0 %v622
  %643 = vmatprep.subr.bf16.mxu0 0
  %644 = vmatpush1.bf16.msra.mxu0 %v621
  %645 = vmatprep.subr.bf16.mxu0 0
  %646 = vmatpush1.bf16.msra.mxu0 %v620
  %647 = vmatprep.subr.bf16.mxu0 0
  %648 = vmatpush2.bf16.msra.mxu0 0
  %649 = vmatprep.subr.bf16.mxu0 0
  %650 = vmatpush2.bf16.msra.mxu0 0
  %651 = vmatprep.subr.bf16.mxu0 0
  %652 = vmatpush2.bf16.msra.mxu0 0
  %653 = vmatprep.subr.bf16.mxu0 0
  %654 = vmatpush2.bf16.msra.mxu0 0
  %655 = vmatprep.subr.bf16.mxu0 0
  %656 = vmatpush2.bf16.msra.mxu0 0
  %657 = vmatprep.subr.bf16.mxu0 0
  %658 = vmatpush2.bf16.msra.mxu0 0
  %659 = vmatprep.subr.bf16.mxu0 0
  %660 = vmatpush2.bf16.msra.mxu0 0
  %661 = vmatprep.subr.bf16.mxu0 0
  %662 = vmatpush2.bf16.msra.mxu0 0
  %663 = vmatprep.mubr.bf16.mxu0 0
  %664 = vmatmul.mubr.bf16.gmra.mxu0 %v629
  %v665 = vpop.f32.mrf.mxu0
  %v666 = vadd.f32 0.0, %v665
  %v667 = vpop.f32.mrf.mxu0
  %v668 = vpop.f32.mrf.mxu0
  %v669 = vadd.f32 0.0, %v668
  %v670 = vpop.f32.mrf.mxu0
  %671 = vdwg.mxu0
  %672 = vst.msk [vmem:[%s18] sm:$0xff] %vm104, %v666
  %673 = vst.msk [vmem:[%s18 + $0x8] sm:$0xff] %vm104, %v669
  %v674 = vmul.f32 %v58, %v259
  %v675 = vmul.f32 %v59, %v262
  %v676 = vadd.f32 %v56, %v674
  %v677 = vadd.f32 %v57, %v675
  %v678 = vpack.c.bf16 %v677, %v676
  %v679 = vld [vmem:[%s9] sm:$0xf]
  %v680 = vld [vmem:[%s9 + $0x4] sm:$0xf]
  %v681 = vld [vmem:[%s9 + $0x8] sm:$0xf]
  %v682 = vld [vmem:[%s9 + $0xc] sm:$0xf]
  %v683 = vld [vmem:[%s9 + $0x10] sm:$0xf]
  %v684 = vld [vmem:[%s9 + $0x14] sm:$0xf]
  %v685 = vld [vmem:[%s9 + $0x18] sm:$0xf]
  %v686 = vld [vmem:[%s9 + $0x1c] sm:$0xf]
  %v695 = vunpack.c.l.b16 %v679
  %v696 = vunpack.c.l.b16 %v680
  %v697 = vunpack.c.l.b16 %v681
  %v698 = vunpack.c.l.b16 %v682
  %v699 = vunpack.c.l.b16 %v683
  %v700 = vunpack.c.l.b16 %v684
  %v701 = vunpack.c.l.b16 %v685
  %v702 = vunpack.c.l.b16 %v686
  %v703 = vpack.c.b16 %v696, %v695
  %v704 = vpack.c.b16 %v698, %v697
  %v705 = vpack.c.b16 %v700, %v699
  %v706 = vpack.c.b16 %v702, %v701
  %v712 = vsel %vm104, %v678, 0
  %714 = vmatprep.subr.bf16.mxu0 0
  %715 = vmatpush1.bf16.msra.mxu0 0
  %716 = vmatprep.subr.bf16.mxu0 0
  %717 = vmatpush1.bf16.msra.mxu0 0
  %718 = vmatprep.subr.bf16.mxu0 0
  %719 = vmatpush1.bf16.msra.mxu0 0
  %720 = vmatprep.subr.bf16.mxu0 0
  %721 = vmatpush1.bf16.msra.mxu0 0
  %722 = vmatprep.subr.bf16.mxu0 0
  %723 = vmatpush1.bf16.msra.mxu0 %v706
  %724 = vmatprep.subr.bf16.mxu0 0
  %725 = vmatpush1.bf16.msra.mxu0 %v705
  %726 = vmatprep.subr.bf16.mxu0 0
  %727 = vmatpush1.bf16.msra.mxu0 %v704
  %728 = vmatprep.subr.bf16.mxu0 0
  %729 = vmatpush1.bf16.msra.mxu0 %v703
  %730 = vmatprep.subr.bf16.mxu0 0
  %731 = vmatpush2.bf16.msra.mxu0 0
  %732 = vmatprep.subr.bf16.mxu0 0
  %733 = vmatpush2.bf16.msra.mxu0 0
  %734 = vmatprep.subr.bf16.mxu0 0
  %735 = vmatpush2.bf16.msra.mxu0 0
  %736 = vmatprep.subr.bf16.mxu0 0
  %737 = vmatpush2.bf16.msra.mxu0 0
  %738 = vmatprep.subr.bf16.mxu0 0
  %739 = vmatpush2.bf16.msra.mxu0 0
  %740 = vmatprep.subr.bf16.mxu0 0
  %741 = vmatpush2.bf16.msra.mxu0 0
  %742 = vmatprep.subr.bf16.mxu0 0
  %743 = vmatpush2.bf16.msra.mxu0 0
  %744 = vmatprep.subr.bf16.mxu0 0
  %745 = vmatpush2.bf16.msra.mxu0 0
  %746 = vmatprep.mubr.bf16.mxu0 0
  %747 = vmatmul.mubr.bf16.gmra.mxu0 %v712
  %v748 = vpop.f32.mrf.mxu0
  %v749 = vadd.f32 0.0, %v748
  %v750 = vpop.f32.mrf.mxu0
  %v751 = vpop.f32.mrf.mxu0
  %v752 = vadd.f32 0.0, %v751
  %v753 = vpop.f32.mrf.mxu0
  %754 = vdwg.mxu0
  %v755 = vtanh.pop %v749
  %v756 = vtanh.pop %v752
  %v757 = vpack.c.bf16 %v756, %v755
  %v758 = vld [vmem:[%s10] sm:$0xf]
  %v759 = vld [vmem:[%s10 + $0x4] sm:$0xf]
  %v760 = vld [vmem:[%s11] sm:$0x1]
  %v762 = vlaneseq
  %v763 = vshrl.u32 %v762, 7
  %v764 = vsub.s32 0, %v763
  %v765 = vrot.slane %v760, %v764
  %v769 = vunpack.c.l.b16 %v758
  %v770 = vunpack.c.l.b16 %v759
  %v771 = vpack.c.b16 %v770, %v769
  %vm773 = vcmask 130048
  %v775 = vsel %vm773, %v757, 0
  %777 = vmatprep.subr.bf16.mxu0 0
  %778 = vmatpush1.bf16.msra.mxu0 0
  %779 = vmatprep.subr.bf16.mxu0 0
  %780 = vmatpush1.bf16.msra.mxu0 0
  %781 = vmatprep.subr.bf16.mxu0 0
  %782 = vmatpush1.bf16.msra.mxu0 0
  %783 = vmatprep.subr.bf16.mxu0 0
  %784 = vmatpush1.bf16.msra.mxu0 0
  %785 = vmatprep.subr.bf16.mxu0 0
  %786 = vmatpush1.bf16.msra.mxu0 0
  %787 = vmatprep.subr.bf16.mxu0 0
  %788 = vmatpush1.bf16.msra.mxu0 0
  %789 = vmatprep.subr.bf16.mxu0 0
  %790 = vmatpush1.bf16.msra.mxu0 0
  %791 = vmatprep.subr.bf16.mxu0 0
  %792 = vmatpush1.bf16.msra.mxu0 %v771
  %793 = vmatprep.subr.bf16.mxu0 0
  %794 = vmatpush2.bf16.msra.mxu0 0
  %795 = vmatprep.subr.bf16.mxu0 0
  %796 = vmatpush2.bf16.msra.mxu0 0
  %797 = vmatprep.subr.bf16.mxu0 0
  %798 = vmatpush2.bf16.msra.mxu0 0
  %799 = vmatprep.subr.bf16.mxu0 0
  %800 = vmatpush2.bf16.msra.mxu0 0
  %801 = vmatprep.subr.bf16.mxu0 0
  %802 = vmatpush2.bf16.msra.mxu0 0
  %803 = vmatprep.subr.bf16.mxu0 0
  %804 = vmatpush2.bf16.msra.mxu0 0
  %805 = vmatprep.subr.bf16.mxu0 0
  %806 = vmatpush2.bf16.msra.mxu0 0
  %807 = vmatprep.subr.bf16.mxu0 0
  %808 = vmatpush2.bf16.msra.mxu0 0
  %809 = vmatprep.mubr.bf16.mxu0 0
  %810 = vmatmul.mubr.bf16.gmra.mxu0 %v775
  %v811 = vpop.f32.mrf.mxu0
  %v812 = vadd.f32 %v765, %v811
  %v813 = vpop.f32.mrf.mxu0
  %v814 = vpop.f32.mrf.mxu0
  %v815 = vadd.f32 %v765, %v814
  %v816 = vpop.f32.mrf.mxu0
  %817 = vdwg.mxu0
  %v818 = vmul.f32 %v812, 1.442695
  %v819 = vpow.pop %v818
  %v820 = vmul.f32 %v815, 1.442695
  %v821 = vpow.pop %v820
  %v822 = vsub.f32 0.0, %v819
  %v823 = vsub.f32 0.0, %v821
  %v824 = vmul.f32 %v822, 1.442695
  %v825 = vpow.pop %v824
  %v826 = vmul.f32 %v823, 1.442695
  %v827 = vpow.pop %v826
  %828 = vst.msk [vmem:[%s17] sm:$0xff] %vm505, %v825
  %829 = vst.msk [vmem:[%s17 + $0x8] sm:$0xff] %vm505, %v827
  %v830 = vmul.f32 %v58, %v418
  %v831 = vmul.f32 %v59, %v421
  %v832 = vadd.f32 %v56, %v830
  %v833 = vadd.f32 %v57, %v831
  %v834 = vpack.c.bf16 %v833, %v832
  %v835 = vld [vmem:[%s12] sm:$0xf]
  %v836 = vld [vmem:[%s12 + $0x4] sm:$0xf]
  %v837 = vld [vmem:[%s12 + $0x8] sm:$0xf]
  %v838 = vld [vmem:[%s12 + $0xc] sm:$0xf]
  %v839 = vld [vmem:[%s12 + $0x10] sm:$0xf]
  %v840 = vld [vmem:[%s12 + $0x14] sm:$0xf]
  %v841 = vld [vmem:[%s12 + $0x18] sm:$0xf]
  %v842 = vld [vmem:[%s12 + $0x1c] sm:$0xf]
  %v851 = vunpack.c.l.b16 %v835
  %v852 = vunpack.c.l.b16 %v836
  %v853 = vunpack.c.l.b16 %v837
  %v854 = vunpack.c.l.b16 %v838
  %v855 = vunpack.c.l.b16 %v839
  %v856 = vunpack.c.l.b16 %v840
  %v857 = vunpack.c.l.b16 %v841
  %v858 = vunpack.c.l.b16 %v842
  %v859 = vpack.c.b16 %v852, %v851
  %v860 = vpack.c.b16 %v854, %v853
  %v861 = vpack.c.b16 %v856, %v855
  %v862 = vpack.c.b16 %v858, %v857
  %v868 = vsel %vm104, %v834, 0
  %870 = vmatprep.subr.bf16.mxu0 0
  %871 = vmatpush1.bf16.msra.mxu0 0
  %872 = vmatprep.subr.bf16.mxu0 0
  %873 = vmatpush1.bf16.msra.mxu0 0
  %874 = vmatprep.subr.bf16.mxu0 0
  %875 = vmatpush1.bf16.msra.mxu0 0
  %876 = vmatprep.subr.bf16.mxu0 0
  %877 = vmatpush1.bf16.msra.mxu0 0
  %878 = vmatprep.subr.bf16.mxu0 0
  %879 = vmatpush1.bf16.msra.mxu0 %v862
  %880 = vmatprep.subr.bf16.mxu0 0
  %881 = vmatpush1.bf16.msra.mxu0 %v861
  %882 = vmatprep.subr.bf16.mxu0 0
  %883 = vmatpush1.bf16.msra.mxu0 %v860
  %884 = vmatprep.subr.bf16.mxu0 0
  %885 = vmatpush1.bf16.msra.mxu0 %v859
  %886 = vmatprep.subr.bf16.mxu0 0
  %887 = vmatpush2.bf16.msra.mxu0 0
  %888 = vmatprep.subr.bf16.mxu0 0
  %889 = vmatpush2.bf16.msra.mxu0 0
  %890 = vmatprep.subr.bf16.mxu0 0
  %891 = vmatpush2.bf16.msra.mxu0 0
  %892 = vmatprep.subr.bf16.mxu0 0
  %893 = vmatpush2.bf16.msra.mxu0 0
  %894 = vmatprep.subr.bf16.mxu0 0
  %895 = vmatpush2.bf16.msra.mxu0 0
  %896 = vmatprep.subr.bf16.mxu0 0
  %897 = vmatpush2.bf16.msra.mxu0 0
  %898 = vmatprep.subr.bf16.mxu0 0
  %899 = vmatpush2.bf16.msra.mxu0 0
  %900 = vmatprep.subr.bf16.mxu0 0
  %901 = vmatpush2.bf16.msra.mxu0 0
  %902 = vmatprep.mubr.bf16.mxu0 0
  %903 = vmatmul.mubr.bf16.gmra.mxu0 %v868
  %v904 = vpop.f32.mrf.mxu0
  %v905 = vadd.f32 0.0, %v904
  %v906 = vpop.f32.mrf.mxu0
  %v907 = vpop.f32.mrf.mxu0
  %v908 = vadd.f32 0.0, %v907
  %v909 = vpop.f32.mrf.mxu0
  %910 = vdwg.mxu0
  %v911 = vtanh.pop %v905
  %v912 = vtanh.pop %v908
  %v913 = vpack.c.bf16 %v912, %v911
  %v914 = vld [vmem:[%s13] sm:$0xf]
  %v915 = vld [vmem:[%s13 + $0x4] sm:$0xf]
  %v916 = vld [vmem:[%s14] sm:$0x1]
  %v918 = vlaneseq
  %v919 = vshrl.u32 %v918, 7
  %v920 = vsub.s32 0, %v919
  %v921 = vrot.slane %v916, %v920
  %v925 = vunpack.c.l.b16 %v914
  %v926 = vunpack.c.l.b16 %v915
  %v927 = vpack.c.b16 %v926, %v925
  %v930 = vsel %vm773, %v913, 0
  %932 = vmatprep.subr.bf16.mxu0 0
  %933 = vmatpush1.bf16.msra.mxu0 0
  %934 = vmatprep.subr.bf16.mxu0 0
  %935 = vmatpush1.bf16.msra.mxu0 0
  %936 = vmatprep.subr.bf16.mxu0 0
  %937 = vmatpush1.bf16.msra.mxu0 0
  %938 = vmatprep.subr.bf16.mxu0 0
  %939 = vmatpush1.bf16.msra.mxu0 0
  %940 = vmatprep.subr.bf16.mxu0 0
  %941 = vmatpush1.bf16.msra.mxu0 0
  %942 = vmatprep.subr.bf16.mxu0 0
  %943 = vmatpush1.bf16.msra.mxu0 0
  %944 = vmatprep.subr.bf16.mxu0 0
  %945 = vmatpush1.bf16.msra.mxu0 0
  %946 = vmatprep.subr.bf16.mxu0 0
  %947 = vmatpush1.bf16.msra.mxu0 %v927
  %948 = vmatprep.subr.bf16.mxu0 0
  %949 = vmatpush2.bf16.msra.mxu0 0
  %950 = vmatprep.subr.bf16.mxu0 0
  %951 = vmatpush2.bf16.msra.mxu0 0
  %952 = vmatprep.subr.bf16.mxu0 0
  %953 = vmatpush2.bf16.msra.mxu0 0
  %954 = vmatprep.subr.bf16.mxu0 0
  %955 = vmatpush2.bf16.msra.mxu0 0
  %956 = vmatprep.subr.bf16.mxu0 0
  %957 = vmatpush2.bf16.msra.mxu0 0
  %958 = vmatprep.subr.bf16.mxu0 0
  %959 = vmatpush2.bf16.msra.mxu0 0
  %960 = vmatprep.subr.bf16.mxu0 0
  %961 = vmatpush2.bf16.msra.mxu0 0
  %962 = vmatprep.subr.bf16.mxu0 0
  %963 = vmatpush2.bf16.msra.mxu0 0
  %964 = vmatprep.mubr.bf16.mxu0 0
  %965 = vmatmul.mubr.bf16.gmra.mxu0 %v930
  %v966 = vpop.f32.mrf.mxu0
  %v967 = vadd.f32 %v921, %v966
  %v968 = vpop.f32.mrf.mxu0
  %v969 = vpop.f32.mrf.mxu0
  %v970 = vadd.f32 %v921, %v969
  %v971 = vpop.f32.mrf.mxu0
  %972 = vdwg.mxu0
  %973 = vst.msk [vmem:[%s19] sm:$0xff] %vm104, %v967
  %974 = vst.msk [vmem:[%s19 + $0x8] sm:$0xff] %vm104, %v970
  // Predicated region
  $region62: #{rwkv6_block.7} parent=0 // pred_check
    _
  $region63: #{rwkv6_block.7} parent=0 // pred_check_branch
    %976 = sbr.rel (0) target = $region65
  $region64: #{rwkv6_block.7} parent=0 // pred_region
    _
  $region65: #{rwkv6_block.7} parent=0 // pred_fallthru
    _
  // Predicated region
  $region66: #{rwkv6_block.7} parent=0 // pred_check
    _
  $region67: #{rwkv6_block.7} parent=0 // pred_check_branch
    %978 = sbr.rel (0) target = $region69
  $region68: #{rwkv6_block.7} parent=0 // pred_region
    _
  $region69: #{rwkv6_block.7} parent=0 // pred_fallthru
    _
  // Predicated region
  $region70: #{rwkv6_block.7} parent=0 // pred_check
    _
  $region71: #{rwkv6_block.7} parent=0 // pred_check_branch
    %980 = sbr.rel (0) target = $region73
  $region72: #{rwkv6_block.7} parent=0 // pred_region
    _
  $region73: #{rwkv6_block.7} parent=0 // pred_fallthru
    _
  // Predicated region
  $region74: #{rwkv6_block.7} parent=0 // pred_check
    _
  $region75: #{rwkv6_block.7} parent=0 // pred_check_branch
    %982 = sbr.rel (0) target = $region77
  $region76: #{rwkv6_block.7} parent=0 // pred_region
    _
  $region77: #{rwkv6_block.7} parent=0 // pred_fallthru
    _
  // Predicated region
  $region78: #{rwkv6_block.7} parent=0 // pred_check
    _
  $region79: #{rwkv6_block.7} parent=0 // pred_check_branch
    %984 = sbr.rel (0) target = $region81
  $region80: #{rwkv6_block.7} parent=0 // pred_region
    _
  $region81: #{rwkv6_block.7} parent=0 // pred_fallthru
    _
  // Predicated region
  $region82: #{rwkv6_block.7} parent=0 // pred_check
    _
  $region83: #{rwkv6_block.7} parent=0 // pred_check_branch
    %986 = sbr.rel (0) target = $region85
  $region84: #{rwkv6_block.7} parent=0 // pred_region
    _
  $region85: #{rwkv6_block.7} parent=0 // pred_fallthru
    _
  // Predicated region
  $region86: #{rwkv6_block.7} parent=0 // pred_check
    _
  $region87: #{rwkv6_block.7} parent=0 // pred_check_branch
    %988 = sbr.rel (0) target = $region89
  $region88: #{rwkv6_block.7} parent=0 // pred_region
    _
  $region89: #{rwkv6_block.7} parent=0 // pred_fallthru
    _
  // Predicated region
  $region90: #{rwkv6_block.7} parent=0 // pred_check
    _
  $region91: #{rwkv6_block.7} parent=0 // pred_check_branch
    %990 = sbr.rel (0) target = $region93
  $region92: #{rwkv6_block.7} parent=0 // pred_region
    _
  $region93: #{rwkv6_block.7} parent=0 // pred_fallthru
    _
  // Predicated region
  $region94: #{rwkv6_block.7} parent=0 // pred_check
    _
  $region95: #{rwkv6_block.7} parent=0 // pred_check_branch
    %992 = sbr.rel (0) target = $region97
  $region96: #{rwkv6_block.7} parent=0 // pred_region
    _
  $region97: #{rwkv6_block.7} parent=0 // pred_fallthru
    _
  // Predicated region
  $region98: #{rwkv6_block.7} parent=0 // pred_check
    _
  $region99: #{rwkv6_block.7} parent=0 // pred_check_branch
    %994 = sbr.rel (0) target = $region101
  $region100: #{rwkv6_block.7} parent=0 // pred_region
    _
  $region101: #{rwkv6_block.7} parent=0 // pred_fallthru
    _

// kernel: rwkv6_block.9
$region0: #{rwkv6_block.9}
  #allocation0 [shape = 'u32[]', space=smem, size = 0x4, offset = 0x4, fixed_abs, tag = 'smem constant byte address 0x4 - core index']
  #allocation1 [shape = 'u32[144,128]{1,0:T(1,128)}', space=vmem, size = 0x12000, scoped, tag = 'internal scratch']
  %s0 = inlined_call_operand.vmem [shape: f32[16,64], index: 0, kind: input, shape index: {}]
  %s1 = inlined_call_operand.vmem [shape: f32[16,64], index: 1, kind: input, shape index: {}]
  %s2 = inlined_call_operand.vmem [shape: f32[16,64], index: 2, kind: input, shape index: {}]
  %s3 = inlined_call_operand.vmem [shape: f32[1,64], index: 3, kind: input, shape index: {}]
  %s4 = inlined_call_operand.vmem [shape: f32[1,64], index: 4, kind: input, shape index: {}]
  %s5 = inlined_call_operand.vmem [shape: f32[64,2], index: 5, kind: input, shape index: {}]
  %s6 = inlined_call_operand.vmem [shape: f32[2,64], index: 6, kind: input, shape index: {}]
  %s7 = inlined_call_operand.vmem [shape: bf16[64,64], index: 7, kind: input, shape index: {}]
  %s8 = inlined_call_operand.vmem [shape: f32[16,64], index: 8, kind: output, shape index: {}]
  %s9 = sld [smem:[#allocation0]]
  $region42: #{rwkv6_block.9} parent=0
    _
  %s11 = ssub.s32 1, %s9
  %s12 = scalar_select 0, %s11, %s9
  // Predicated region
  $region2: #{rwkv6_block.9} parent=0 // pred_check
    _
  $region3: #{rwkv6_block.9} parent=0 // pred_check_branch
    %14 = sbr.rel (0) target = $region5
  $region4: #{rwkv6_block.9} parent=0 // pred_region
    _
  $region5: #{rwkv6_block.9} parent=0 // pred_fallthru
    _
  // Predicated region
  $region6: #{rwkv6_block.9} parent=0 // pred_check
    _
  $region7: #{rwkv6_block.9} parent=0 // pred_check_branch
    %16 = sbr.rel (0) target = $region9
  $region8: #{rwkv6_block.9} parent=0 // pred_region
    _
  $region9: #{rwkv6_block.9} parent=0 // pred_fallthru
    _
  // Predicated region
  $region10: #{rwkv6_block.9} parent=0 // pred_check
    _
  $region11: #{rwkv6_block.9} parent=0 // pred_check_branch
    %18 = sbr.rel (0) target = $region13
  $region12: #{rwkv6_block.9} parent=0 // pred_region
    _
  $region13: #{rwkv6_block.9} parent=0 // pred_fallthru
    _
  // Predicated region
  $region14: #{rwkv6_block.9} parent=0 // pred_check
    _
  $region15: #{rwkv6_block.9} parent=0 // pred_check_branch
    %20 = sbr.rel (0) target = $region17
  $region16: #{rwkv6_block.9} parent=0 // pred_region
    _
  $region17: #{rwkv6_block.9} parent=0 // pred_fallthru
    _
  // Predicated region
  $region18: #{rwkv6_block.9} parent=0 // pred_check
    _
  $region19: #{rwkv6_block.9} parent=0 // pred_check_branch
    %22 = sbr.rel (0) target = $region21
  $region20: #{rwkv6_block.9} parent=0 // pred_region
    _
  $region21: #{rwkv6_block.9} parent=0 // pred_fallthru
    _
  // Predicated region
  $region22: #{rwkv6_block.9} parent=0 // pred_check
    _
  $region23: #{rwkv6_block.9} parent=0 // pred_check_branch
    %24 = sbr.rel (0) target = $region25
  $region24: #{rwkv6_block.9} parent=0 // pred_region
    _
  $region25: #{rwkv6_block.9} parent=0 // pred_fallthru
    _
  // Predicated region
  $region26: #{rwkv6_block.9} parent=0 // pred_check
    _
  $region27: #{rwkv6_block.9} parent=0 // pred_check_branch
    %26 = sbr.rel (0) target = $region29
  $region28: #{rwkv6_block.9} parent=0 // pred_region
    _
  $region29: #{rwkv6_block.9} parent=0 // pred_fallthru
    _
  // Predicated region
  $region30: #{rwkv6_block.9} parent=0 // pred_check
    _
  $region31: #{rwkv6_block.9} parent=0 // pred_check_branch
    %28 = sbr.rel (0) target = $region33
  $region32: #{rwkv6_block.9} parent=0 // pred_region
    _
  $region33: #{rwkv6_block.9} parent=0 // pred_fallthru
    _
  %v30 = vld [vmem:[%s0] sm:$0xff]
  %v31 = vld [vmem:[%s0 + $0x8] sm:$0xff]
  %v32 = vld [vmem:[%s5] sm:$0xff]
  %v33 = vld [vmem:[%s5 + $0x8] sm:$0xff]
  %v34 = vld [vmem:[%s5 + $0x10] sm:$0xff]
  %v35 = vld [vmem:[%s5 + $0x18] sm:$0xff]
  %v36 = vld [vmem:[%s5 + $0x20] sm:$0xff]
  %v37 = vld [vmem:[%s5 + $0x28] sm:$0xff]
  %v38 = vld [vmem:[%s5 + $0x30] sm:$0xff]
  %v39 = vld [vmem:[%s5 + $0x38] sm:$0xff]
  %v40 = vld [vmem:[%s6] sm:$0x3]
  %vm41 = vcmask 523264
  %v43 = vsel %vm41, %v30, 0
  %v46 = vsel %vm41, %v31, 0
  %48 = vmatprep.subr.mxu0 0.0
  %49 = vmatpush1.msra.mxu0 0.0
  %50 = vmatprep.subr.mxu0 0.0
  %51 = vmatpush1.msra.mxu0 0.0
  %52 = vmatprep.subr.mxu0 0.0
  %53 = vmatpush1.msra.mxu0 0.0
  %54 = vmatprep.subr.mxu0 0.0
  %55 = vmatpush1.msra.mxu0 0.0
  %56 = vmatprep.subr.mxu0 0.0
  %57 = vmatpush1.msra.mxu0 0.0
  %58 = vmatprep.subr.mxu0 0.0
  %59 = vmatpush1.msra.mxu0 0.0
  %60 = vmatprep.subr.mxu0 0.0
  %61 = vmatpush1.msra.mxu0 0.0
  %62 = vmatprep.subr.mxu0 0.0
  %63 = vmatpush1.msra.mxu0 0.0
  %64 = vmatprep.subr.mxu0 0.0
  %65 = vmatpush1.msra.mxu0 %v39
  %66 = vmatprep.subr.mxu0 0.0
  %67 = vmatpush1.msra.mxu0 %v38
  %68 = vmatprep.subr.mxu0 0.0
  %69 = vmatpush1.msra.mxu0 %v37
  %70 = vmatprep.subr.mxu0 0.0
  %71 = vmatpush1.msra.mxu0 %v36
  %72 = vmatprep.subr.mxu0 0.0
  %73 = vmatpush1.msra.mxu0 %v35
  %74 = vmatprep.subr.mxu0 0.0
  %75 = vmatpush1.msra.mxu0 %v34
  %76 = vmatprep.subr.mxu0 0.0
  %77 = vmatpush1.msra.mxu0 %v33
  %78 = vmatprep.subr.mxu0 0.0
  %79 = vmatpush1.msra.mxu0 %v32
  %80 = vmatprep.subr.mxu0 0.0
  %81 = vmatpush2.msra.mxu0 0.0
  %82 = vmatprep.subr.mxu0 0.0
  %83 = vmatpush2.msra.mxu0 0.0
  %84 = vmatprep.subr.mxu0 0.0
  %85 = vmatpush2.msra.mxu0 0.0
  %86 = vmatprep.subr.mxu0 0.0
  %87 = vmatpush2.msra.mxu0 0.0
  %88 = vmatprep.subr.mxu0 0.0
  %89 = vmatpush2.msra.mxu0 0.0
  %90 = vmatprep.subr.mxu0 0.0
  %91 = vmatpush2.msra.mxu0 0.0
  %92 = vmatprep.subr.mxu0 0.0
  %93 = vmatpush2.msra.mxu0 0.0
  %94 = vmatprep.subr.mxu0 0.0
  %95 = vmatpush2.msra.mxu0 0.0
  %96 = vmatprep.subr.mxu0 0.0
  %97 = vmatpush2.msra.mxu0 0.0
  %98 = vmatprep.subr.mxu0 0.0
  %99 = vmatpush2.msra.mxu0 0.0
  %100 = vmatprep.subr.mxu0 0.0
  %101 = vmatpush2.msra.mxu0 0.0
  %102 = vmatprep.subr.mxu0 0.0
  %103 = vmatpush2.msra.mxu0 0.0
  %104 = vmatprep.subr.mxu0 0.0
  %105 = vmatpush2.msra.mxu0 0.0
  %106 = vmatprep.subr.mxu0 0.0
  %107 = vmatpush2.msra.mxu0 0.0
  %108 = vmatprep.subr.mxu0 0.0
  %109 = vmatpush2.msra.mxu0 0.0
  %110 = vmatprep.subr.mxu0 0.0
  %111 = vmatpush2.msra.mxu0 0.0
  %112 = vmatprep.mubr.f32.mxu0 0.0
  %113 = vmatmul.mubr.f32.gmra.mxu0 %v43
  %v114 = vpop.f32.mrf.mxu0
  %v115 = vadd.f32 0.0, %v114
  %v116 = vpop.f32.mrf.mxu0
  %117 = vmatprep.mubr.f32.mxu0 0.0
  %118 = vmatmul.mubr.f32.gmra.mxu0 %v46
  %v119 = vpop.f32.mrf.mxu0
  %v120 = vadd.f32 0.0, %v119
  %v121 = vpop.f32.mrf.mxu0
  %122 = vdwg.mxu0
  %vm123 = vcmask 15360
  %v125 = vsel %vm123, %v115, 0
  %v128 = vsel %vm123, %v120, 0
  %vm130 = vcmask 1041408
  %v132 = vsel %vm130, %v40, 0
  %134 = vmatprep.subr.mxu0 0.0
  %135 = vmatpush1.msra.mxu0 0.0
  %136 = vmatprep.subr.mxu0 0.0
  %137 = vmatpush1.msra.mxu0 0.0
  %138 = vmatprep.subr.mxu0 0.0
  %139 = vmatpush1.msra.mxu0 0.0
  %140 = vmatprep.subr.mxu0 0.0
  %141 = vmatpush1.msra.mxu0 0.0
  %142 = vmatprep.subr.mxu0 0.0
  %143 = vmatpush1.msra.mxu0 0.0
  %144 = vmatprep.subr.mxu0 0.0
  %145 = vmatpush1.msra.mxu0 0.0
  %146 = vmatprep.subr.mxu0 0.0
  %147 = vmatpush1.msra.mxu0 0.0
  %148 = vmatprep.subr.mxu0 0.0
  %149 = vmatpush1.msra.mxu0 0.0
  %150 = vmatprep.subr.mxu0 0.0
  %151 = vmatpush1.msra.mxu0 0.0
  %152 = vmatprep.subr.mxu0 0.0
  %153 = vmatpush1.msra.mxu0 0.0
  %154 = vmatprep.subr.mxu0 0.0
  %155 = vmatpush1.msra.mxu0 0.0
  %156 = vmatprep.subr.mxu0 0.0
  %157 = vmatpush1.msra.mxu0 0.0
  %158 = vmatprep.subr.mxu0 0.0
  %159 = vmatpush1.msra.mxu0 0.0
  %160 = vmatprep.subr.mxu0 0.0
  %161 = vmatpush1.msra.mxu0 0.0
  %162 = vmatprep.subr.mxu0 0.0
  %163 = vmatpush1.msra.mxu0 0.0
  %164 = vmatprep.subr.mxu0 0.0
  %165 = vmatpush1.msra.mxu0 %v132
  %166 = vmatprep.subr.mxu0 0.0
  %167 = vmatpush2.msra.mxu0 0.0
  %168 = vmatprep.subr.mxu0 0.0
  %169 = vmatpush2.msra.mxu0 0.0
  %170 = vmatprep.subr.mxu0 0.0
  %171 = vmatpush2.msra.mxu0 0.0
  %172 = vmatprep.subr.mxu0 0.0
  %173 = vmatpush2.msra.mxu0 0.0
  %174 = vmatprep.subr.mxu0 0.0
  %175 = vmatpush2.msra.mxu0 0.0
  %176 = vmatprep.subr.mxu0 0.0
  %177 = vmatpush2.msra.mxu0 0.0
  %178 = vmatprep.subr.mxu0 0.0
  %179 = vmatpush2.msra.mxu0 0.0
  %180 = vmatprep.subr.mxu0 0.0
  %181 = vmatpush2.msra.mxu0 0.0
  %182 = vmatprep.subr.mxu0 0.0
  %183 = vmatpush2.msra.mxu0 0.0
  %184 = vmatprep.subr.mxu0 0.0
  %185 = vmatpush2.msra.mxu0 0.0
  %186 = vmatprep.subr.mxu0 0.0
  %187 = vmatpush2.msra.mxu0 0.0
  %188 = vmatprep.subr.mxu0 0.0
  %189 = vmatpush2.msra.mxu0 0.0
  %190 = vmatprep.subr.mxu0 0.0
  %191 = vmatpush2.msra.mxu0 0.0
  %192 = vmatprep.subr.mxu0 0.0
  %193 = vmatpush2.msra.mxu0 0.0
  %194 = vmatprep.subr.mxu0 0.0
  %195 = vmatpush2.msra.mxu0 0.0
  %196 = vmatprep.subr.mxu0 0.0
  %197 = vmatpush2.msra.mxu0 0.0
  %198 = vmatprep.mubr.f32.mxu0 0.0
  %199 = vmatmul.mubr.f32.gmra.mxu0 %v125
  %v200 = vpop.f32.mrf.mxu0
  %v201 = vadd.f32 0.0, %v200
  %v202 = vpop.f32.mrf.mxu0
  %203 = vmatprep.mubr.f32.mxu0 0.0
  %204 = vmatmul.mubr.f32.gmra.mxu0 %v128
  %v205 = vpop.f32.mrf.mxu0
  %v206 = vadd.f32 0.0, %v205
  %v207 = vpop.f32.mrf.mxu0
  %208 = vdwg.mxu0
  %v209 = vsub.f32 %v30, %v201
  %v210 = vsub.f32 %v31, %v206
  %v211 = vmul.f32 %v209, %v209
  %v212 = vmul.f32 %v210, %v210
  %v214 = vsel %vm41, %v211, 0
  %v217 = vsel %vm41, %v212, 0
  %219 = vmatprep.subr.mxu0 0.0
  %220 = vmatpush1.msra.mxu0 0.0
  %221 = vmatprep.subr.mxu0 0.0
  %222 = vmatpush1.msra.mxu0 0.0
  %223 = vmatprep.subr.mxu0 0.0
  %224 = vmatpush1.msra.mxu0 0.0
  %225 = vmatprep.subr.mxu0 0.0
  %226 = vmatpush1.msra.mxu0 0.0
  %227 = vmatprep.subr.mxu0 0.0
  %228 = vmatpush1.msra.mxu0 0.0
  %229 = vmatprep.subr.mxu0 0.0
  %230 = vmatpush1.msra.mxu0 0.0
  %231 = vmatprep.subr.mxu0 0.0
  %232 = vmatpush1.msra.mxu0 0.0
  %233 = vmatprep.subr.mxu0 0.0
  %234 = vmatpush1.msra.mxu0 0.0
  %235 = vmatprep.subr.mxu0 0.0
  %236 = vmatpush1.msra.mxu0 %v39
  %237 = vmatprep.subr.mxu0 0.0
  %238 = vmatpush1.msra.mxu0 %v38
  %239 = vmatprep.subr.mxu0 0.0
  %240 = vmatpush1.msra.mxu0 %v37
  %241 = vmatprep.subr.mxu0 0.0
  %242 = vmatpush1.msra.mxu0 %v36
  %243 = vmatprep.subr.mxu0 0.0
  %244 = vmatpush1.msra.mxu0 %v35
  %245 = vmatprep.subr.mxu0 0.0
  %246 = vmatpush1.msra.mxu0 %v34
  %247 = vmatprep.subr.mxu0 0.0
  %248 = vmatpush1.msra.mxu0 %v33
  %249 = vmatprep.subr.mxu0 0.0
  %250 = vmatpush1.msra.mxu0 %v32
  %251 = vmatprep.subr.mxu0 0.0
  %252 = vmatpush2.msra.mxu0 0.0
  %253 = vmatprep.subr.mxu0 0.0
  %254 = vmatpush2.msra.mxu0 0.0
  %255 = vmatprep.subr.mxu0 0.0
  %256 = vmatpush2.msra.mxu0 0.0
  %257 = vmatprep.subr.mxu0 0.0
  %258 = vmatpush2.msra.mxu0 0.0
  %259 = vmatprep.subr.mxu0 0.0
  %260 = vmatpush2.msra.mxu0 0.0
  %261 = vmatprep.subr.mxu0 0.0
  %262 = vmatpush2.msra.mxu0 0.0
  %263 = vmatprep.subr.mxu0 0.0
  %264 = vmatpush2.msra.mxu0 0.0
  %265 = vmatprep.subr.mxu0 0.0
  %266 = vmatpush2.msra.mxu0 0.0
  %267 = vmatprep.subr.mxu0 0.0
  %268 = vmatpush2.msra.mxu0 0.0
  %269 = vmatprep.subr.mxu0 0.0
  %270 = vmatpush2.msra.mxu0 0.0
  %271 = vmatprep.subr.mxu0 0.0
  %272 = vmatpush2.msra.mxu0 0.0
  %273 = vmatprep.subr.mxu0 0.0
  %274 = vmatpush2.msra.mxu0 0.0
  %275 = vmatprep.subr.mxu0 0.0
  %276 = vmatpush2.msra.mxu0 0.0
  %277 = vmatprep.subr.mxu0 0.0
  %278 = vmatpush2.msra.mxu0 0.0
  %279 = vmatprep.subr.mxu0 0.0
  %280 = vmatpush2.msra.mxu0 0.0
  %281 = vmatprep.subr.mxu0 0.0
  %282 = vmatpush2.msra.mxu0 0.0
  %283 = vmatprep.mubr.f32.mxu0 0.0
  %284 = vmatmul.mubr.f32.gmra.mxu0 %v214
  %v285 = vpop.f32.mrf.mxu0
  %v286 = vadd.f32 0.0, %v285
  %v287 = vpop.f32.mrf.mxu0
  %288 = vmatprep.mubr.f32.mxu0 0.0
  %289 = vmatmul.mubr.f32.gmra.mxu0 %v217
  %v290 = vpop.f32.mrf.mxu0
  %v291 = vadd.f32 0.0, %v290
  %v292 = vpop.f32.mrf.mxu0
  %293 = vdwg.mxu0
  %v295 = vsel %vm123, %v286, 0
  %v298 = vsel %vm123, %v291, 0
  %300 = vmatprep.subr.mxu0 0.0
  %301 = vmatpush1.msra.mxu0 0.0
  %302 = vmatprep.subr.mxu0 0.0
  %303 = vmatpush1.msra.mxu0 0.0
  %304 = vmatprep.subr.mxu0 0.0
  %305 = vmatpush1.msra.mxu0 0.0
  %306 = vmatprep.subr.mxu0 0.0
  %307 = vmatpush1.msra.mxu0 0.0
  %308 = vmatprep.subr.mxu0 0.0
  %309 = vmatpush1.msra.mxu0 0.0
  %310 = vmatprep.subr.mxu0 0.0
  %311 = vmatpush1.msra.mxu0 0.0
  %312 = vmatprep.subr.mxu0 0.0
  %313 = vmatpush1.msra.mxu0 0.0
  %314 = vmatprep.subr.mxu0 0.0
  %315 = vmatpush1.msra.mxu0 0.0
  %316 = vmatprep.subr.mxu0 0.0
  %317 = vmatpush1.msra.mxu0 0.0
  %318 = vmatprep.subr.mxu0 0.0
  %319 = vmatpush1.msra.mxu0 0.0
  %320 = vmatprep.subr.mxu0 0.0
  %321 = vmatpush1.msra.mxu0 0.0
  %322 = vmatprep.subr.mxu0 0.0
  %323 = vmatpush1.msra.mxu0 0.0
  %324 = vmatprep.subr.mxu0 0.0
  %325 = vmatpush1.msra.mxu0 0.0
  %326 = vmatprep.subr.mxu0 0.0
  %327 = vmatpush1.msra.mxu0 0.0
  %328 = vmatprep.subr.mxu0 0.0
  %329 = vmatpush1.msra.mxu0 0.0
  %330 = vmatprep.subr.mxu0 0.0
  %331 = vmatpush1.msra.mxu0 %v132
  %332 = vmatprep.subr.mxu0 0.0
  %333 = vmatpush2.msra.mxu0 0.0
  %334 = vmatprep.subr.mxu0 0.0
  %335 = vmatpush2.msra.mxu0 0.0
  %336 = vmatprep.subr.mxu0 0.0
  %337 = vmatpush2.msra.mxu0 0.0
  %338 = vmatprep.subr.mxu0 0.0
  %339 = vmatpush2.msra.mxu0 0.0
  %340 = vmatprep.subr.mxu0 0.0
  %341 = vmatpush2.msra.mxu0 0.0
  %342 = vmatprep.subr.mxu0 0.0
  %343 = vmatpush2.msra.mxu0 0.0
  %344 = vmatprep.subr.mxu0 0.0
  %345 = vmatpush2.msra.mxu0 0.0
  %346 = vmatprep.subr.mxu0 0.0
  %347 = vmatpush2.msra.mxu0 0.0
  %348 = vmatprep.subr.mxu0 0.0
  %349 = vmatpush2.msra.mxu0 0.0
  %350 = vmatprep.subr.mxu0 0.0
  %351 = vmatpush2.msra.mxu0 0.0
  %352 = vmatprep.subr.mxu0 0.0
  %353 = vmatpush2.msra.mxu0 0.0
  %354 = vmatprep.subr.mxu0 0.0
  %355 = vmatpush2.msra.mxu0 0.0
  %356 = vmatprep.subr.mxu0 0.0
  %357 = vmatpush2.msra.mxu0 0.0
  %358 = vmatprep.subr.mxu0 0.0
  %359 = vmatpush2.msra.mxu0 0.0
  %360 = vmatprep.subr.mxu0 0.0
  %361 = vmatpush2.msra.mxu0 0.0
  %362 = vmatprep.subr.mxu0 0.0
  %363 = vmatpush2.msra.mxu0 0.0
  %364 = vmatprep.mubr.f32.mxu0 0.0
  %365 = vmatmul.mubr.f32.gmra.mxu0 %v295
  %v366 = vpop.f32.mrf.mxu0
  %v367 = vadd.f32 1e-05, %v366
  %v368 = vpop.f32.mrf.mxu0
  %369 = vmatprep.mubr.f32.mxu0 0.0
  %370 = vmatmul.mubr.f32.gmra.mxu0 %v298
  %v371 = vpop.f32.mrf.mxu0
  %v372 = vadd.f32 1e-05, %v371
  %v373 = vpop.f32.mrf.mxu0
  %374 = vdwg.mxu0
  %v375 = vrsqrt.pop %v367
  %v376 = vrsqrt.pop %v372
  %v377 = vmul.f32 %v209, %v375
  %v378 = vmul.f32 %v210, %v376
  %v379 = vld [vmem:[%s3] sm:$0x1]
  %v381 = vlaneseq
  %v382 = vshrl.u32 %v381, 7
  %v383 = vsub.s32 0, %v382
  %v384 = vrot.slane %v379, %v383
  %v386 = vmul.f32 %v377, %v384
  %v387 = vmul.f32 %v378, %v384
  %v388 = vld [vmem:[%s4] sm:$0x1]
  %v390 = vlaneseq
  %v391 = vshrl.u32 %v390, 7
  %v392 = vsub.s32 0, %v391
  %v393 = vrot.slane %v388, %v392
  %v395 = vadd.f32 %v386, %v393
  %v396 = vadd.f32 %v387, %v393
  %v397 = vld [vmem:[%s1] sm:$0xff]
  %v398 = vld [vmem:[%s1 + $0x8] sm:$0xff]
  %v399 = vxor.u32 %v397, 2147483648
  %v400 = vxor.u32 %v398, 2147483648
  %v401 = vmul.f32 %v399, 1.442695
  %v402 = vpow.pop %v401
  %v403 = vmul.f32 %v400, 1.442695
  %v404 = vpow.pop %v403
  %v405 = vadd.f32 %v402, 1.0
  %v406 = vadd.f32 %v404, 1.0
  %v407 = vrcp.pop %v405
  %v408 = vmul.f32 1.0, %v407
  %v409 = vrcp.pop %v406
  %v410 = vmul.f32 1.0, %v409
  %v411 = vmul.f32 %v397, %v408
  %v412 = vmul.f32 %v398, %v410
  %v413 = vmul.f32 %v395, %v411
  %v414 = vmul.f32 %v396, %v412
  %v415 = vld [vmem:[%s2] sm:$0xff]
  %v416 = vld [vmem:[%s2 + $0x8] sm:$0xff]
  %v417 = vpack.c.bf16 %v414, %v413
  %v418 = vld [vmem:[%s7] sm:$0xf]
  %v419 = vld [vmem:[%s7 + $0x4] sm:$0xf]
  %v420 = vld [vmem:[%s7 + $0x8] sm:$0xf]
  %v421 = vld [vmem:[%s7 + $0xc] sm:$0xf]
  %v422 = vld [vmem:[%s7 + $0x10] sm:$0xf]
  %v423 = vld [vmem:[%s7 + $0x14] sm:$0xf]
  %v424 = vld [vmem:[%s7 + $0x18] sm:$0xf]
  %v425 = vld [vmem:[%s7 + $0x1c] sm:$0xf]
  %v434 = vunpack.c.l.b16 %v418
  %v435 = vunpack.c.l.b16 %v419
  %v436 = vunpack.c.l.b16 %v420
  %v437 = vunpack.c.l.b16 %v421
  %v438 = vunpack.c.l.b16 %v422
  %v439 = vunpack.c.l.b16 %v423
  %v440 = vunpack.c.l.b16 %v424
  %v441 = vunpack.c.l.b16 %v425
  %v442 = vpack.c.b16 %v435, %v434
  %v443 = vpack.c.b16 %v437, %v436
  %v444 = vpack.c.b16 %v439, %v438
  %v445 = vpack.c.b16 %v441, %v440
  %v451 = vsel %vm41, %v417, 0
  %453 = vmatprep.subr.bf16.mxu0 0
  %454 = vmatpush1.bf16.msra.mxu0 0
  %455 = vmatprep.subr.bf16.mxu0 0
  %456 = vmatpush1.bf16.msra.mxu0 0
  %457 = vmatprep.subr.bf16.mxu0 0
  %458 = vmatpush1.bf16.msra.mxu0 0
  %459 = vmatprep.subr.bf16.mxu0 0
  %460 = vmatpush1.bf16.msra.mxu0 0
  %461 = vmatprep.subr.bf16.mxu0 0
  %462 = vmatpush1.bf16.msra.mxu0 %v445
  %463 = vmatprep.subr.bf16.mxu0 0
  %464 = vmatpush1.bf16.msra.mxu0 %v444
  %465 = vmatprep.subr.bf16.mxu0 0
  %466 = vmatpush1.bf16.msra.mxu0 %v443
  %467 = vmatprep.subr.bf16.mxu0 0
  %468 = vmatpush1.bf16.msra.mxu0 %v442
  %469 = vmatprep.subr.bf16.mxu0 0
  %470 = vmatpush2.bf16.msra.mxu0 0
  %471 = vmatprep.subr.bf16.mxu0 0
  %472 = vmatpush2.bf16.msra.mxu0 0
  %473 = vmatprep.subr.bf16.mxu0 0
  %474 = vmatpush2.bf16.msra.mxu0 0
  %475 = vmatprep.subr.bf16.mxu0 0
  %476 = vmatpush2.bf16.msra.mxu0 0
  %477 = vmatprep.subr.bf16.mxu0 0
  %478 = vmatpush2.bf16.msra.mxu0 0
  %479 = vmatprep.subr.bf16.mxu0 0
  %480 = vmatpush2.bf16.msra.mxu0 0
  %481 = vmatprep.subr.bf16.mxu0 0
  %482 = vmatpush2.bf16.msra.mxu0 0
  %483 = vmatprep.subr.bf16.mxu0 0
  %484 = vmatpush2.bf16.msra.mxu0 0
  %485 = vmatprep.mubr.bf16.mxu0 0
  %486 = vmatmul.mubr.bf16.gmra.mxu0 %v451
  %v487 = vpop.f32.mrf.mxu0
  %v488 = vadd.f32 0.0, %v487
  %v489 = vpop.f32.mrf.mxu0
  %v490 = vpop.f32.mrf.mxu0
  %v491 = vadd.f32 0.0, %v490
  %v492 = vpop.f32.mrf.mxu0
  %493 = vdwg.mxu0
  %v494 = vadd.f32 %v415, %v488
  %v495 = vadd.f32 %v416, %v491
  %496 = vst.msk [vmem:[%s8] sm:$0xff] %vm41, %v494
  %497 = vst.msk [vmem:[%s8 + $0x8] sm:$0xff] %vm41, %v495
  // Predicated region
  $region34: #{rwkv6_block.9} parent=0 // pred_check
    _
  $region35: #{rwkv6_block.9} parent=0 // pred_check_branch
    %499 = sbr.rel (0) target = $region37
  $region36: #{rwkv6_block.9} parent=0 // pred_region
    _
  $region37: #{rwkv6_block.9} parent=0 // pred_fallthru
    _
  // Predicated region
  $region38: #{rwkv6_block.9} parent=0 // pred_check
    _
  $region39: #{rwkv6_block.9} parent=0 // pred_check_branch
    %501 = sbr.rel (0) target = $region41
  $region40: #{rwkv6_block.9} parent=0 // pred_region
    _
  $region41: #{rwkv6_block.9} parent=0 // pred_fallthru
    _

// kernel: rwkv6_block.8
$region0: #{rwkv6_block.8}
  #allocation0 [shape = 'u32[]', space=smem, size = 0x4, offset = 0x4, fixed_abs, tag = 'smem constant byte address 0x4 - core index']
  #allocation1 [shape = 'u32[144,128]{1,0:T(1,128)}', space=vmem, size = 0x12000, scoped, tag = 'internal scratch']
  #allocation2 [shape = 'f32[2,16,32]{2,1,0:T(8,128)}', space=vmem, size = 0x4000, scoped, tag = 'scratch operand']
  %s0 = inlined_call_operand.vmem [shape: f32[4,8,16], index: 0, kind: input, shape index: {}]
  %s1 = inlined_call_operand.vmem [shape: f32[4,8,16], index: 1, kind: input, shape index: {}]
  %s2 = inlined_call_operand.vmem [shape: f32[4,8,16], index: 2, kind: input, shape index: {}]
  %s3 = inlined_call_operand.vmem [shape: f32[4,8,32], index: 3, kind: input, shape index: {}]
  %s4 = inlined_call_operand.vmem [shape: f32[4,1,16], index: 4, kind: input, shape index: {}]
  %s5 = inlined_call_operand.vmem [shape: f32[4,8,32], index: 5, kind: output, shape index: {}]
  %s6 = sld [smem:[#allocation0]]
  $region57: #{rwkv6_block.8} parent=0
    _
  %s8 = ssub.s32 1, %s6
  %s9 = scalar_select 0, %s8, %s6
  loop: start=0, step=1, limit=4
  $region2: #{rwkv6_block.8} parent=0 // loop_pre_header
    _
  $region3: #{rwkv6_block.8} parent=0 // loop_header
    %s11 = sphi 0, %s15
    %p12 = scmp.ge.s32.totalorder %s11, 4
    %s18 = sphi 0, %s30
    %s19 = sphi 0, %s26
    %s20 = sphi 0, %s18
    %s21 = sphi 0, %s19
    %s22 = sphi 0, %s20
    %s23 = sphi 0, %s21
    %s35 = sphi 0, %s37
    %s38 = sphi 0, %s35
    %s39 = sphi 0, %s38
    %s55 = sphi 0, %s39
    %s63 = sphi 0, %s65
    %s66 = sphi 0, %s63
    %s67 = sphi 0, %s66
    %s83 = sphi 0, %s67
    %s91 = sphi 0, %s93
    %s94 = sphi 0, %s91
    %s95 = sphi 0, %s94
    %s111 = sphi 0, %s95
    %s119 = sphi 0, %s121
    %s122 = sphi 0, %s119
    %s123 = sphi 0, %s122
    %s139 = sphi 0, %s123
    %s145 = sphi 0, %s147
    %s148 = sphi 0, %s145
    %s149 = sphi 0, %s148
    %s165 = sphi 0, %s149
    %s173 = sphi 0, %s175
    %s176 = sphi 0, %s173
    %s177 = sphi 0, %s176
    %s193 = sphi 0, %s177
  $region4: #{rwkv6_block.8} parent=0 // loop_header_branch
    %14 = sbr.rel (%p12) target = $region8
  $region5: #{rwkv6_block.8} parent=0 // loop_body
    %s16 = ssub.s32 %s11, 1
    %s17 = ssub.s32 %s11, 2
    %s24 = sadd.s32 1, %s19
    %p25 = scmp.ge.s32.totalorder %s24, 1
    %s26 = scalar_select %p25, 0, %s24
    %s27 = sadd.s32 1, %s18
    %s28 = scalar_select %p25, %s27, %s18
    %p29 = scmp.ge.s32.totalorder %s28, 2
    %s30 = scalar_select %p29, 0, %s28
    %s31 = ssub.s32 %s18, %s30
    %s32 = ssub.s32 %s19, %s26
    %s33 = sor.u32 %s31, %s32
    %p34 = scmp.eq.s32.totalorder %s33, 0
    %s36 = sadd.s32 %s35, 1
    %s37 = scalar_select %p34, %s35, %s36
    %p40 = pneg %p34
    %p41 = scmp.eq.s32.totalorder %s11, 1
    %p42 = por %p40, %p41
    %p43 = scmp.ne.s32.totalorder %s35, %s38
    %p44 = scmp.eq.s32.totalorder %s11, 0
    %p45 = por %p43, %p44
    %p46 = scmp.ne.s32.totalorder %s35, %s38
    %p47 = scmp.eq.s32.totalorder %s16, 1
    %p48 = por %p46, %p47
    %p49 = scmp.ne.s32.totalorder %s38, %s39
    %p50 = scmp.eq.s32.totalorder %s16, 0
    %p51 = por %p49, %p50
    %p52 = scmp.ne.s32.totalorder %s38, %s39
    %p53 = scmp.eq.s32.totalorder %s17, 1
    %p54 = por %p52, %p53
    %p56 = scmp.ne.s32.totalorder %s39, %s55
    %p57 = scmp.eq.s32.totalorder %s17, 0
    %p58 = por %p56, %p57
    %s59 = ssub.s32 %s18, %s30
    %s60 = ssub.s32 %s19, %s26
    %s61 = sor.u32 %s59, %s60
    %p62 = scmp.eq.s32.totalorder %s61, 0
    %s64 = sadd.s32 %s63, 1
    %s65 = scalar_select %p62, %s63, %s64
    %p68 = pneg %p62
    %p69 = scmp.eq.s32.totalorder %s11, 1
    %p70 = por %p68, %p69
    %p71 = scmp.ne.s32.totalorder %s63, %s66
    %p72 = scmp.eq.s32.totalorder %s11, 0
    %p73 = por %p71, %p72
    %p74 = scmp.ne.s32.totalorder %s63, %s66
    %p75 = scmp.eq.s32.totalorder %s16, 1
    %p76 = por %p74, %p75
    %p77 = scmp.ne.s32.totalorder %s66, %s67
    %p78 = scmp.eq.s32.totalorder %s16, 0
    %p79 = por %p77, %p78
    %p80 = scmp.ne.s32.totalorder %s66, %s67
    %p81 = scmp.eq.s32.totalorder %s17, 1
    %p82 = por %p80, %p81
    %p84 = scmp.ne.s32.totalorder %s67, %s83
    %p85 = scmp.eq.s32.totalorder %s17, 0
    %p86 = por %p84, %p85
    %s87 = ssub.s32 %s18, %s30
    %s88 = ssub.s32 %s19, %s26
    %s89 = sor.u32 %s87, %s88
    %p90 = scmp.eq.s32.totalorder %s89, 0
    %s92 = sadd.s32 %s91, 1
    %s93 = scalar_select %p90, %s91, %s92
    %p96 = pneg %p90
    %p97 = scmp.eq.s32.totalorder %s11, 1
    %p98 = por %p96, %p97
    %p99 = scmp.ne.s32.totalorder %s91, %s94
    %p100 = scmp.eq.s32.totalorder %s11, 0
    %p101 = por %p99, %p100
    %p102 = scmp.ne.s32.totalorder %s91, %s94
    %p103 = scmp.eq.s32.totalorder %s16, 1
    %p104 = por %p102, %p103
    %p105 = scmp.ne.s32.totalorder %s94, %s95
    %p106 = scmp.eq.s32.totalorder %s16, 0
    %p107 = por %p105, %p106
    %p108 = scmp.ne.s32.totalorder %s94, %s95
    %p109 = scmp.eq.s32.totalorder %s17, 1
    %p110 = por %p108, %p109
    %p112 = scmp.ne.s32.totalorder %s95, %s111
    %p113 = scmp.eq.s32.totalorder %s17, 0
    %p114 = por %p112, %p113
    %s115 = ssub.s32 %s18, %s30
    %s116 = ssub.s32 %s19, %s26
    %s117 = sor.u32 %s115, %s116
    %p118 = scmp.eq.s32.totalorder %s117, 0
    %s120 = sadd.s32 %s119, 1
    %s121 = scalar_select %p118, %s119, %s120
    %p124 = pneg %p118
    %p125 = scmp.eq.s32.totalorder %s11, 1
    %p126 = por %p124, %p125
    %p127 = scmp.ne.s32.totalorder %s119, %s122
    %p128 = scmp.eq.s32.totalorder %s11, 0
    %p129 = por %p127, %p128
    %p130 = scmp.ne.s32.totalorder %s119, %s122
    %p131 = scmp.eq.s32.totalorder %s16, 1
    %p132 = por %p130, %p131
    %p133 = scmp.ne.s32.totalorder %s122, %s123
    %p134 = scmp.eq.s32.totalorder %s16, 0
    %p135 = por %p133, %p134
    %p136 = scmp.ne.s32.totalorder %s122, %s123
    %p137 = scmp.eq.s32.totalorder %s17, 1
    %p138 = por %p136, %p137
    %p140 = scmp.ne.s32.totalorder %s123, %s139
    %p141 = scmp.eq.s32.totalorder %s17, 0
    %p142 = por %p140, %p141
    %s143 = ssub.s32 %s18, %s30
    %p144 = scmp.eq.s32.totalorder %s143, 0
    %s146 = sadd.s32 %s145, 1
    %s147 = scalar_select %p144, %s145, %s146
    %p150 = pneg %p144
    %p151 = scmp.eq.s32.totalorder %s11, 1
    %p152 = por %p150, %p151
    %p153 = scmp.ne.s32.totalorder %s145, %s148
    %p154 = scmp.eq.s32.totalorder %s11, 0
    %p155 = por %p153, %p154
    %p156 = scmp.ne.s32.totalorder %s145, %s148
    %p157 = scmp.eq.s32.totalorder %s16, 1
    %p158 = por %p156, %p157
    %p159 = scmp.ne.s32.totalorder %s148, %s149
    %p160 = scmp.eq.s32.totalorder %s16, 0
    %p161 = por %p159, %p160
    %p162 = scmp.ne.s32.totalorder %s148, %s149
    %p163 = scmp.eq.s32.totalorder %s17, 1
    %p164 = por %p162, %p163
    %p166 = scmp.ne.s32.totalorder %s149, %s165
    %p167 = scmp.eq.s32.totalorder %s17, 0
    %p168 = por %p166, %p167
    %s169 = ssub.s32 %s18, %s30
    %s170 = ssub.s32 %s19, %s26
    %s171 = sor.u32 %s169, %s170
    %p172 = scmp.eq.s32.totalorder %s171, 0
    %s174 = sadd.s32 %s173, 1
    %s175 = scalar_select %p172, %s173, %s174
    %p178 = pneg %p172
    %p179 = scmp.eq.s32.totalorder %s11, 1
    %p180 = por %p178, %p179
    %p181 = scmp.ne.s32.totalorder %s173, %s176
    %p182 = scmp.eq.s32.totalorder %s11, 0
    %p183 = por %p181, %p182
    %p184 = scmp.ne.s32.totalorder %s173, %s176
    %p185 = scmp.eq.s32.totalorder %s16, 1
    %p186 = por %p184, %p185
    %p187 = scmp.ne.s32.totalorder %s176, %s177
    %p188 = scmp.eq.s32.totalorder %s16, 0
    %p189 = por %p187, %p188
    %p190 = scmp.ne.s32.totalorder %s176, %s177
    %p191 = scmp.eq.s32.totalorder %s17, 1
    %p192 = por %p190, %p191
    %p194 = scmp.ne.s32.totalorder %s177, %s193
    %p195 = scmp.eq.s32.totalorder %s17, 0
    %p196 = por %p194, %p195
    %p197 = scmp.le.s32.totalorder 1, %s11
    %p198 = scmp.lt.s32.totalorder %s11, 3
    %p199 = pnand %p197, %p198
    %p200 = pneg %p199
    // Predicated region
    $region9: #{rwkv6_block.8} parent=5 // pred_check
      _
    $region10: #{rwkv6_block.8} parent=5 // pred_check_branch
      %202 = sbr.rel (%p199) target = $region12
    $region11: #{rwkv6_block.8} parent=5 // pred_region
      %s203 = ssub.s32 %s11, 1
    $region12: #{rwkv6_block.8} parent=5 // pred_fallthru
      _
    %p204 = scmp.lt.s32.totalorder %s11, 2
    // Predicated region
    $region13: #{rwkv6_block.8} parent=5 // pred_check
      %p205 = pneg %p204
    $region14: #{rwkv6_block.8} parent=5 // pred_check_branch
      %207 = sbr.rel (%p205) target = $region16
    $region15: #{rwkv6_block.8} parent=5 // pred_region
      // Predicated region
      $region17: #{rwkv6_block.8} parent=15 // pred_check
        %p208 = pneg %p45
      $region18: #{rwkv6_block.8} parent=15 // pred_check_branch
        %210 = sbr.rel (%p208) target = $region20
      $region19: #{rwkv6_block.8} parent=15 // pred_region
        %s211 = smul.u32 2, %s18
        %p212 = scmp.lt.s32.totalorder %s211, 3
        %s213 = scalar_select %p212, %s211, 3
        %p214 = scmp.lt.s32.totalorder %s19, 0
        %s215 = scalar_select %p214, %s19, 0
        %s216 = sadd.s32 %s215, %s213
        %s217 = smul.addr %s216, 8
        %s218 = scalar_lea.vmem %s0, %s217
        %s219 = smul.u32 2, %s18
      $region20: #{rwkv6_block.8} parent=15 // pred_fallthru
        _
      // Predicated region
      $region21: #{rwkv6_block.8} parent=15 // pred_check
        %p220 = pneg %p73
      $region22: #{rwkv6_block.8} parent=15 // pred_check_branch
        %222 = sbr.rel (%p220) target = $region24
      $region23: #{rwkv6_block.8} parent=15 // pred_region
        %s223 = smul.u32 2, %s18
        %p224 = scmp.lt.s32.totalorder %s223, 3
        %s225 = scalar_select %p224, %s223, 3
        %p226 = scmp.lt.s32.totalorder %s19, 0
        %s227 = scalar_select %p226, %s19, 0
        %s228 = sadd.s32 %s227, %s225
        %s229 = smul.addr %s228, 8
        %s230 = scalar_lea.vmem %s1, %s229
        %s231 = smul.u32 2, %s18
      $region24: #{rwkv6_block.8} parent=15 // pred_fallthru
        _
      // Predicated region
      $region25: #{rwkv6_block.8} parent=15 // pred_check
        %p232 = pneg %p101
      $region26: #{rwkv6_block.8} parent=15 // pred_check_branch
        %234 = sbr.rel (%p232) target = $region28
      $region27: #{rwkv6_block.8} parent=15 // pred_region
        %s235 = smul.u32 2, %s18
        %p236 = scmp.lt.s32.totalorder %s235, 3
        %s237 = scalar_select %p236, %s235, 3
        %p238 = scmp.lt.s32.totalorder %s19, 0
        %s239 = scalar_select %p238, %s19, 0
        %s240 = sadd.s32 %s239, %s237
        %s241 = smul.addr %s240, 8
        %s242 = scalar_lea.vmem %s2, %s241
        %s243 = smul.u32 2, %s18
      $region28: #{rwkv6_block.8} parent=15 // pred_fallthru
        _
      // Predicated region
      $region29: #{rwkv6_block.8} parent=15 // pred_check
        %p244 = pneg %p129
      $region30: #{rwkv6_block.8} parent=15 // pred_check_branch
        %246 = sbr.rel (%p244) target = $region32
      $region31: #{rwkv6_block.8} parent=15 // pred_region
        %s247 = smul.u32 2, %s18
        %p248 = scmp.lt.s32.totalorder %s247, 3
        %s249 = scalar_select %p248, %s247, 3
        %p250 = scmp.lt.s32.totalorder %s19, 0
        %s251 = scalar_select %p250, %s19, 0
        %s252 = sadd.s32 %s251, %s249
        %s253 = smul.addr %s252, 8
        %s254 = scalar_lea.vmem %s3, %s253
        %s255 = smul.u32 2, %s18
      $region32: #{rwkv6_block.8} parent=15 // pred_fallthru
        _
      // Predicated region
      $region33: #{rwkv6_block.8} parent=15 // pred_check
        %p256 = pneg %p155
      $region34: #{rwkv6_block.8} parent=15 // pred_check_branch
        %258 = sbr.rel (%p256) target = $region36
      $region35: #{rwkv6_block.8} parent=15 // pred_region
        %s259 = smul.u32 2, %s18
        %p260 = scmp.lt.s32.totalorder %s259, 3
        %s261 = scalar_select %p260, %s259, 3
        %s262 = scalar_lea.vmem %s4, %s261
        %s263 = smul.u32 2, %s18
      $region36: #{rwkv6_block.8} parent=15 // pred_fallthru
        _
    $region16: #{rwkv6_block.8} parent=5 // pred_fallthru
      _
    %p264 = scmp.le.s32.totalorder 1, %s11
    %p265 = scmp.lt.s32.totalorder %s11, 3
    %p266 = pnand %p264, %p265
    %p267 = pneg %p266
    // Predicated region
    $region37: #{rwkv6_block.8} parent=5 // pred_check
      _
    $region38: #{rwkv6_block.8} parent=5 // pred_check_branch
      %269 = sbr.rel (%p266) target = $region40
    $region39: #{rwkv6_block.8} parent=5 // pred_region
      %s270 = ssub.s32 %s11, 1
      %s271 = smul.u32 2, %s20
      %p272 = scmp.lt.s32.totalorder %s271, 3
      %s273 = scalar_select %p272, %s271, 3
      %p274 = scmp.lt.s32.totalorder %s21, 0
      %s275 = scalar_select %p274, %s21, 0
      %s276 = sadd.s32 %s275, %s273
      %s277 = smul.addr %s276, 8
      %s278 = scalar_lea.vmem %s0, %s277
      %p279 = pneg %p51
      %p280 = pneg %p48
      %s281 = smul.u32 2, %s20
      %p282 = scmp.lt.s32.totalorder %s281, 3
      %s283 = scalar_select %p282, %s281, 3
      %p284 = scmp.lt.s32.totalorder %s21, 0
      %s285 = scalar_select %p284, %s21, 0
      %s286 = sadd.s32 %s285, %s283
      %s287 = smul.addr %s286, 8
      %s288 = scalar_lea.vmem %s1, %s287
      %p289 = pneg %p79
      %p290 = pneg %p76
      %s291 = smul.u32 2, %s20
      %p292 = scmp.lt.s32.totalorder %s291, 3
      %s293 = scalar_select %p292, %s291, 3
      %p294 = scmp.lt.s32.totalorder %s21, 0
      %s295 = scalar_select %p294, %s21, 0
      %s296 = sadd.s32 %s295, %s293
      %s297 = smul.addr %s296, 8
      %s298 = scalar_lea.vmem %s2, %s297
      %p299 = pneg %p107
      %p300 = pneg %p104
      %s301 = smul.u32 2, %s20
      %p302 = scmp.lt.s32.totalorder %s301, 3
      %s303 = scalar_select %p302, %s301, 3
      %p304 = scmp.lt.s32.totalorder %s21, 0
      %s305 = scalar_select %p304, %s21, 0
      %s306 = sadd.s32 %s305, %s303
      %s307 = smul.addr %s306, 8
      %s308 = scalar_lea.vmem %s3, %s307
      %p309 = pneg %p135
      %p310 = pneg %p132
      %s311 = smul.u32 2, %s20
      %p312 = scmp.lt.s32.totalorder %s311, 3
      %s313 = scalar_select %p312, %s311, 3
      %s314 = scalar_lea.vmem %s4, %s313
      %p315 = pneg %p161
      %p316 = pneg %p158
      %p317 = pneg %p189
      %p318 = pneg %p186
      %s319 = smul.u32 2, %s20
      %p320 = scmp.lt.s32.totalorder %s319, 3
      %s321 = scalar_select %p320, %s319, 3
      %p322 = scmp.lt.s32.totalorder %s21, 0
      %s323 = scalar_select %p322, %s21, 0
      %s324 = sadd.s32 %s323, %s321
      %s325 = smul.addr %s324, 8
      %s326 = scalar_lea.vmem %s5, %s325
      %s327 = smul.u32 2, %s20
      %p328 = scmp.lt.s32.totalorder %s327, 3
      %s329 = scalar_select %p328, %s327, 3
      %p330 = scmp.lt.s32.totalorder %s21, 0
      %s331 = scalar_select %p330, %s21, 0
      %s332 = sadd.s32 %s331, %s329
      %s333 = smul.addr %s332, 8
      %s334 = scalar_lea.vmem %s0, %s333
      %s335 = smul.u32 2, %s20
      %s336 = smul.u32 2, %s20
      %p337 = scmp.lt.s32.totalorder %s336, 3
      %s338 = scalar_select %p337, %s336, 3
      %p339 = scmp.lt.s32.totalorder %s21, 0
      %s340 = scalar_select %p339, %s21, 0
      %s341 = sadd.s32 %s340, %s338
      %s342 = smul.addr %s341, 8
      %s343 = scalar_lea.vmem %s1, %s342
      %s344 = smul.u32 2, %s20
      %s345 = smul.u32 2, %s20
      %p346 = scmp.lt.s32.totalorder %s345, 3
      %s347 = scalar_select %p346, %s345, 3
      %p348 = scmp.lt.s32.totalorder %s21, 0
      %s349 = scalar_select %p348, %s21, 0
      %s350 = sadd.s32 %s349, %s347
      %s351 = smul.addr %s350, 8
      %s352 = scalar_lea.vmem %s2, %s351
      %s353 = smul.u32 2, %s20
      %s354 = smul.u32 2, %s20
      %p355 = scmp.lt.s32.totalorder %s354, 3
      %s356 = scalar_select %p355, %s354, 3
      %p357 = scmp.lt.s32.totalorder %s21, 0
      %s358 = scalar_select %p357, %s21, 0
      %s359 = sadd.s32 %s358, %s356
      %s360 = smul.addr %s359, 8
      %s361 = scalar_lea.vmem %s3, %s360
      %s362 = smul.u32 2, %s20
      %s363 = smul.u32 2, %s20
      %p364 = scmp.lt.s32.totalorder %s363, 3
      %s365 = scalar_select %p364, %s363, 3
      %s366 = scalar_lea.vmem %s4, %s365
      %s367 = smul.u32 2, %s20
      %s368 = smul.u32 2, %s20
      %p369 = scmp.lt.s32.totalorder %s368, 3
      %s370 = scalar_select %p369, %s368, 3
      %p371 = scmp.lt.s32.totalorder %s21, 0
      %s372 = scalar_select %p371, %s21, 0
      %s373 = sadd.s32 %s372, %s370
      %s374 = smul.addr %s373, 8
      %s375 = scalar_lea.vmem %s5, %s374
      %s376 = smul.u32 2, %s20
      %p377 = scmp.eq.s32.totalorder %s21, 0
      // Predicated region
      $region41: #{rwkv6_block.8} parent=39 // pred_check
        %p378 = pneg %p377
      $region42: #{rwkv6_block.8} parent=39 // pred_check_branch
        %380 = sbr.rel (%p378) target = $region44
      $region43: #{rwkv6_block.8} parent=39 // pred_region
        %vm381 = vcmask 261120
        %382 = vst.msk [vmem:[#allocation2] sm:$0xff] %vm381, 0.0
        %383 = vst.msk [vmem:[#allocation2 + $0x8] sm:$0xff] %vm381, 0.0
        %384 = vst.msk [vmem:[#allocation2 + $0x10] sm:$0xff] %vm381, 0.0
        %385 = vst.msk [vmem:[#allocation2 + $0x18] sm:$0xff] %vm381, 0.0
      $region44: #{rwkv6_block.8} parent=39 // pred_fallthru
        _
      %v386 = vld [vmem:[%s366] sm:$0x1]
      %v387 = vld [vmem:[%s366 + $0x1] sm:$0x1]
      %v388 = vld [vmem:[#allocation2] sm:$0xff]
      %v389 = vld [vmem:[#allocation2 + $0x8] sm:$0xff]
      %v390 = vld [vmem:[#allocation2 + $0x10] sm:$0xff]
      %v391 = vld [vmem:[#allocation2 + $0x18] sm:$0xff]
      %v392 = vld [vmem:[%s334] sm:$0x1]
      %v393 = vld [vmem:[%s334 + $0x8] sm:$0x1]
      %v394 = vld [vmem:[%s343] sm:$0x1]
      %v395 = vld [vmem:[%s343 + $0x8] sm:$0x1]
      %v396 = vld [vmem:[%s352] sm:$0x1]
      %v397 = vld [vmem:[%s352 + $0x8] sm:$0x1]
      %v398 = vld [vmem:[%s361] sm:$0x1]
      %v399 = vld [vmem:[%s361 + $0x8] sm:$0x1]
      %v400 = vmul.f32 %v392, %v386
      %v401 = vmul.f32 %v393, %v387
      %v402 = vmul.f32 %v400, %v394
      %v403 = vmul.f32 %v401, %v395
      %v406 = vrot.slane %v403, 7
      %vm407 = vcmask 1041409
      %v408 = vsel %vm407, %v406, %v402
      %vm410 = vcmask 123904
      %v411 = vsel %vm410, %v408, 0.0
      %412 = vadd.xlane.f32.xlu0 %v411
      %v413 = vpop.xlane.xlu0 %412
      %v414 = vlaneseq
      %v415 = vshrl.u32 %v414, 7
      %v416 = vsub.s32 0, %v415
      %v417 = vrot.slane %v392, %v416
      %419 = vbcast.lane.b32.xlu0 %v417, 256
      %v420 = vpop.permute.xlu0 %419
      %s422 = sor.u32 256, 8
      %423 = vbcast.lane.b32.xlu0 %v417, %s422
      %v424 = vpop.permute.xlu0 %423
      %v425 = vlaneseq
      %v426 = vshrl.u32 %v425, 7
      %v427 = vsub.s32 0, %v426
      %v428 = vrot.slane %v393, %v427
      %430 = vbcast.lane.b32.xlu0 %v428, 256
      %v431 = vpop.permute.xlu0 %430
      %s433 = sor.u32 256, 8
      %434 = vbcast.lane.b32.xlu0 %v428, %s433
      %v435 = vpop.permute.xlu0 %434
      %v436 = vmul.f32 %v420, %v388
      %v437 = vmul.f32 %v424, %v389
      %v438 = vmul.f32 %v431, %v390
      %v439 = vmul.f32 %v435, %v391
      %vm440 = vcmask 261120
      %v441 = vsel %vm440, %v436, 0.0
      %v442 = vsel %vm440, %v437, 0.0
      %v443 = vadd.f32 %v441, %v442
      %v444 = vrot.slane %v443, 4
      %v445 = vadd.f32 %v443, %v444
      %v446 = vrot.slane %v445, 2
      %v447 = vadd.f32 %v445, %v446
      %v448 = vrot.slane %v447, 1
      %v449 = vadd.f32 %v447, %v448
      %v450 = vsel %vm440, %v438, 0.0
      %v451 = vsel %vm440, %v439, 0.0
      %v452 = vadd.f32 %v450, %v451
      %v453 = vrot.slane %v452, 4
      %v454 = vadd.f32 %v452, %v453
      %v455 = vrot.slane %v454, 2
      %v456 = vadd.f32 %v454, %v455
      %v457 = vrot.slane %v456, 1
      %v458 = vadd.f32 %v456, %v457
      %v461 = vrot.slane %v399, 7
      %v462 = vsel %vm407, %v461, %v398
      %v464 = vmul.f32 %v413, %v462
      %v466 = vrot.slane %v464, 1
      %v469 = vadd.f32 %v449, %v464
      %v470 = vadd.f32 %v458, %v466
      %vm471 = vcmask 253952
      %472 = vst.msk [vmem:[%s375] sm:$0x1] %vm471, %v469
      %473 = vst.msk [vmem:[%s375 + $0x8] sm:$0x1] %vm471, %v470
      %v474 = vlaneseq
      %v475 = vshrl.u32 %v474, 7
      %v476 = vsub.s32 0, %v475
      %v477 = vrot.slane %v396, %v476
      %479 = vbcast.lane.b32.xlu0 %v477, 256
      %v480 = vpop.permute.xlu0 %479
      %s482 = sor.u32 256, 8
      %483 = vbcast.lane.b32.xlu0 %v477, %s482
      %v484 = vpop.permute.xlu0 %483
      %v485 = vlaneseq
      %v486 = vshrl.u32 %v485, 7
      %v487 = vsub.s32 0, %v486
      %v488 = vrot.slane %v397, %v487
      %490 = vbcast.lane.b32.xlu0 %v488, 256
      %v491 = vpop.permute.xlu0 %490
      %s493 = sor.u32 256, 8
      %494 = vbcast.lane.b32.xlu0 %v488, %s493
      %v495 = vpop.permute.xlu0 %494
      %v496 = vmul.f32 %v480, %v388
      %v497 = vmul.f32 %v484, %v389
      %v498 = vmul.f32 %v491, %v390
      %v499 = vmul.f32 %v495, %v391
      %v500 = vlaneseq
      %v501 = vshrl.u32 %v500, 7
      %v502 = vsub.s32 0, %v501
      %v503 = vrot.slane %v394, %v502
      %505 = vbcast.lane.b32.xlu0 %v503, 256
      %v506 = vpop.permute.xlu0 %505
      %s508 = sor.u32 256, 8
      %509 = vbcast.lane.b32.xlu0 %v503, %s508
      %v510 = vpop.permute.xlu0 %509
      %v511 = vlaneseq
      %v512 = vshrl.u32 %v511, 7
      %v513 = vsub.s32 0, %v512
      %v514 = vrot.slane %v395, %v513
      %516 = vbcast.lane.b32.xlu0 %v514, 256
      %v517 = vpop.permute.xlu0 %516
      %s519 = sor.u32 256, 8
      %520 = vbcast.lane.b32.xlu0 %v514, %s519
      %v521 = vpop.permute.xlu0 %520
      %v522 = vlaneseq
      %v523 = vshrl.u32 %v522, 7
      %v524 = vsub.s32 0, %v523
      %v525 = vrot.slane %v398, %v524
      %v526 = vlaneseq
      %v527 = vshrl.u32 %v526, 7
      %v528 = vsub.s32 0, %v527
      %v529 = vrot.slane %v399, %v528
      %v530 = vmul.f32 %v506, %v525
      %v531 = vmul.f32 %v510, %v525
      %v532 = vmul.f32 %v517, %v529
      %v533 = vmul.f32 %v521, %v529
      %v534 = vadd.f32 %v496, %v530
      %v535 = vadd.f32 %v497, %v531
      %v536 = vadd.f32 %v498, %v532
      %v537 = vadd.f32 %v499, %v533
      %v538 = vld [vmem:[%s334 + $0x1] sm:$0x1]
      %v539 = vld [vmem:[%s334 + $0x9] sm:$0x1]
      %v540 = vld [vmem:[%s343 + $0x1] sm:$0x1]
      %v541 = vld [vmem:[%s343 + $0x9] sm:$0x1]
      %v542 = vld [vmem:[%s352 + $0x1] sm:$0x1]
      %v543 = vld [vmem:[%s352 + $0x9] sm:$0x1]
      %v544 = vld [vmem:[%s361 + $0x1] sm:$0x1]
      %v545 = vld [vmem:[%s361 + $0x9] sm:$0x1]
      %v546 = vmul.f32 %v538, %v386
      %v547 = vmul.f32 %v539, %v387
      %v548 = vmul.f32 %v546, %v540
      %v549 = vmul.f32 %v547, %v541
      %v552 = vrot.slane %v549, 7
      %v553 = vsel %vm407, %v552, %v548
      %v555 = vsel %vm410, %v553, 0.0
      %556 = vadd.xlane.f32.xlu0 %v555
      %v557 = vpop.xlane.xlu0 %556
      %v558 = vlaneseq
      %v559 = vshrl.u32 %v558, 7
      %v560 = vsub.s32 0, %v559
      %v561 = vrot.slane %v538, %v560
      %563 = vbcast.lane.b32.xlu0 %v561, 256
      %v564 = vpop.permute.xlu0 %563
      %s566 = sor.u32 256, 8
      %567 = vbcast.lane.b32.xlu0 %v561, %s566
      %v568 = vpop.permute.xlu0 %567
      %v569 = vlaneseq
      %v570 = vshrl.u32 %v569, 7
      %v571 = vsub.s32 0, %v570
      %v572 = vrot.slane %v539, %v571
      %574 = vbcast.lane.b32.xlu0 %v572, 256
      %v575 = vpop.permute.xlu0 %574
      %s577 = sor.u32 256, 8
      %578 = vbcast.lane.b32.xlu0 %v572, %s577
      %v579 = vpop.permute.xlu0 %578
      %v580 = vmul.f32 %v564, %v534
      %v581 = vmul.f32 %v568, %v535
      %v582 = vmul.f32 %v575, %v536
      %v583 = vmul.f32 %v579, %v537
      %v584 = vsel %vm440, %v580, 0.0
      %v585 = vsel %vm440, %v581, 0.0
      %v586 = vadd.f32 %v584, %v585
      %v587 = vrot.slane %v586, 4
      %v588 = vadd.f32 %v586, %v587
      %v589 = vrot.slane %v588, 2
      %v590 = vadd.f32 %v588, %v589
      %v591 = vrot.slane %v590, 1
      %v592 = vadd.f32 %v590, %v591
      %v593 = vsel %vm440, %v582, 0.0
      %v594 = vsel %vm440, %v583, 0.0
      %v595 = vadd.f32 %v593, %v594
      %v596 = vrot.slane %v595, 4
      %v597 = vadd.f32 %v595, %v596
      %v598 = vrot.slane %v597, 2
      %v599 = vadd.f32 %v597, %v598
      %v600 = vrot.slane %v599, 1
      %v601 = vadd.f32 %v599, %v600
      %v604 = vrot.slane %v545, 7
      %v605 = vsel %vm407, %v604, %v544
      %v607 = vmul.f32 %v557, %v605
      %v609 = vrot.slane %v607, 1
      %v612 = vadd.f32 %v592, %v607
      %v613 = vadd.f32 %v601, %v609
      %614 = vst.msk [vmem:[%s375 + $0x1] sm:$0x1] %vm471, %v612
      %615 = vst.msk [vmem:[%s375 + $0x9] sm:$0x1] %vm471, %v613
      %v616 = vlaneseq
      %v617 = vshrl.u32 %v616, 7
      %v618 = vsub.s32 0, %v617
      %v619 = vrot.slane %v542, %v618
      %621 = vbcast.lane.b32.xlu0 %v619, 256
      %v622 = vpop.permute.xlu0 %621
      %s624 = sor.u32 256, 8
      %625 = vbcast.lane.b32.xlu0 %v619, %s624
      %v626 = vpop.permute.xlu0 %625
      %v627 = vlaneseq
      %v628 = vshrl.u32 %v627, 7
      %v629 = vsub.s32 0, %v628
      %v630 = vrot.slane %v543, %v629
      %632 = vbcast.lane.b32.xlu0 %v630, 256
      %v633 = vpop.permute.xlu0 %632
      %s635 = sor.u32 256, 8
      %636 = vbcast.lane.b32.xlu0 %v630, %s635
      %v637 = vpop.permute.xlu0 %636
      %v638 = vmul.f32 %v622, %v534
      %v639 = vmul.f32 %v626, %v535
      %v640 = vmul.f32 %v633, %v536
      %v641 = vmul.f32 %v637, %v537
      %v642 = vlaneseq
      %v643 = vshrl.u32 %v642, 7
      %v644 = vsub.s32 0, %v643
      %v645 = vrot.slane %v540, %v644
      %647 = vbcast.lane.b32.xlu0 %v645, 256
      %v648 = vpop.permute.xlu0 %647
      %s650 = sor.u32 256, 8
      %651 = vbcast.lane.b32.xlu0 %v645, %s650
      %v652 = vpop.permute.xlu0 %651
      %v653 = vlaneseq
      %v654 = vshrl.u32 %v653, 7
      %v655 = vsub.s32 0, %v654
      %v656 = vrot.slane %v541, %v655
      %658 = vbcast.lane.b32.xlu0 %v656, 256
      %v659 = vpop.permute.xlu0 %658
      %s661 = sor.u32 256, 8
      %662 = vbcast.lane.b32.xlu0 %v656, %s661
      %v663 = vpop.permute.xlu0 %662
      %v664 = vlaneseq
      %v665 = vshrl.u32 %v664, 7
      %v666 = vsub.s32 0, %v665
      %v667 = vrot.slane %v544, %v666
      %v668 = vlaneseq
      %v669 = vshrl.u32 %v668, 7
      %v670 = vsub.s32 0, %v669
      %v671 = vrot.slane %v545, %v670
      %v672 = vmul.f32 %v648, %v667
      %v673 = vmul.f32 %v652, %v667
      %v674 = vmul.f32 %v659, %v671
      %v675 = vmul.f32 %v663, %v671
      %v676 = vadd.f32 %v638, %v672
      %v677 = vadd.f32 %v639, %v673
      %v678 = vadd.f32 %v640, %v674
      %v679 = vadd.f32 %v641, %v675
      %v680 = vld [vmem:[%s334 + $0x2] sm:$0x1]
      %v681 = vld [vmem:[%s334 + $0xa] sm:$0x1]
      %v682 = vld [vmem:[%s343 + $0x2] sm:$0x1]
      %v683 = vld [vmem:[%s343 + $0xa] sm:$0x1]
      %v684 = vld [vmem:[%s352 + $0x2] sm:$0x1]
      %v685 = vld [vmem:[%s352 + $0xa] sm:$0x1]
      %v686 = vld [vmem:[%s361 + $0x2] sm:$0x1]
      %v687 = vld [vmem:[%s361 + $0xa] sm:$0x1]
      %v688 = vmul.f32 %v680, %v386
      %v689 = vmul.f32 %v681, %v387
      %v690 = vmul.f32 %v688, %v682
      %v691 = vmul.f32 %v689, %v683
      %v694 = vrot.slane %v691, 7
      %v695 = vsel %vm407, %v694, %v690
      %v697 = vsel %vm410, %v695, 0.0
      %698 = vadd.xlane.f32.xlu0 %v697
      %v699 = vpop.xlane.xlu0 %698
      %v700 = vlaneseq
      %v701 = vshrl.u32 %v700, 7
      %v702 = vsub.s32 0, %v701
      %v703 = vrot.slane %v680, %v702
      %705 = vbcast.lane.b32.xlu0 %v703, 256
      %v706 = vpop.permute.xlu0 %705
      %s708 = sor.u32 256, 8
      %709 = vbcast.lane.b32.xlu0 %v703, %s708
      %v710 = vpop.permute.xlu0 %709
      %v711 = vlaneseq
      %v712 = vshrl.u32 %v711, 7
      %v713 = vsub.s32 0, %v712
      %v714 = vrot.slane %v681, %v713
      %716 = vbcast.lane.b32.xlu0 %v714, 256
      %v717 = vpop.permute.xlu0 %716
      %s719 = sor.u32 256, 8
      %720 = vbcast.lane.b32.xlu0 %v714, %s719
      %v721 = vpop.permute.xlu0 %720
      %v722 = vmul.f32 %v706, %v676
      %v723 = vmul.f32 %v710, %v677
      %v724 = vmul.f32 %v717, %v678
      %v725 = vmul.f32 %v721, %v679
      %v726 = vsel %vm440, %v722, 0.0
      %v727 = vsel %vm440, %v723, 0.0
      %v728 = vadd.f32 %v726, %v727
      %v729 = vrot.slane %v728, 4
      %v730 = vadd.f32 %v728, %v729
      %v731 = vrot.slane %v730, 2
      %v732 = vadd.f32 %v730, %v731
      %v733 = vrot.slane %v732, 1
      %v734 = vadd.f32 %v732, %v733
      %v735 = vsel %vm440, %v724, 0.0
      %v736 = vsel %vm440, %v725, 0.0
      %v737 = vadd.f32 %v735, %v736
      %v738 = vrot.slane %v737, 4
      %v739 = vadd.f32 %v737, %v738
      %v740 = vrot.slane %v739, 2
      %v741 = vadd.f32 %v739, %v740
      %v742 = vrot.slane %v741, 1
      %v743 = vadd.f32 %v741, %v742
      %v746 = vrot.slane %v687, 7
      %v747 = vsel %vm407, %v746, %v686
      %v749 = vmul.f32 %v699, %v747
      %v751 = vrot.slane %v749, 1
      %v754 = vadd.f32 %v734, %v749
      %v755 = vadd.f32 %v743, %v751
      %756 = vst.msk [vmem:[%s375 + $0x2] sm:$0x1] %vm471, %v754
      %757 = vst.msk [vmem:[%s375 + $0xa] sm:$0x1] %vm471, %v755
      %v758 = vlaneseq
      %v759 = vshrl.u32 %v758, 7
      %v760 = vsub.s32 0, %v759
      %v761 = vrot.slane %v684, %v760
      %763 = vbcast.lane.b32.xlu0 %v761, 256
      %v764 = vpop.permute.xlu0 %763
      %s766 = sor.u32 256, 8
      %767 = vbcast.lane.b32.xlu0 %v761, %s766
      %v768 = vpop.permute.xlu0 %767
      %v769 = vlaneseq
      %v770 = vshrl.u32 %v769, 7
      %v771 = vsub.s32 0, %v770
      %v772 = vrot.slane %v685, %v771
      %774 = vbcast.lane.b32.xlu0 %v772, 256
      %v775 = vpop.permute.xlu0 %774
      %s777 = sor.u32 256, 8
      %778 = vbcast.lane.b32.xlu0 %v772, %s777
      %v779 = vpop.permute.xlu0 %778
      %v780 = vmul.f32 %v764, %v676
      %v781 = vmul.f32 %v768, %v677
      %v782 = vmul.f32 %v775, %v678
      %v783 = vmul.f32 %v779, %v679
      %v784 = vlaneseq
      %v785 = vshrl.u32 %v784, 7
      %v786 = vsub.s32 0, %v785
      %v787 = vrot.slane %v682, %v786
      %789 = vbcast.lane.b32.xlu0 %v787, 256
      %v790 = vpop.permute.xlu0 %789
      %s792 = sor.u32 256, 8
      %793 = vbcast.lane.b32.xlu0 %v787, %s792
      %v794 = vpop.permute.xlu0 %793
      %v795 = vlaneseq
      %v796 = vshrl.u32 %v795, 7
      %v797 = vsub.s32 0, %v796
      %v798 = vrot.slane %v683, %v797
      %800 = vbcast.lane.b32.xlu0 %v798, 256
      %v801 = vpop.permute.xlu0 %800
      %s803 = sor.u32 256, 8
      %804 = vbcast.lane.b32.xlu0 %v798, %s803
      %v805 = vpop.permute.xlu0 %804
      %v806 = vlaneseq
      %v807 = vshrl.u32 %v806, 7
      %v808 = vsub.s32 0, %v807
      %v809 = vrot.slane %v686, %v808
      %v810 = vlaneseq
      %v811 = vshrl.u32 %v810, 7
      %v812 = vsub.s32 0, %v811
      %v813 = vrot.slane %v687, %v812
      %v814 = vmul.f32 %v790, %v809
      %v815 = vmul.f32 %v794, %v809
      %v816 = vmul.f32 %v801, %v813
      %v817 = vmul.f32 %v805, %v813
      %v818 = vadd.f32 %v780, %v814
      %v819 = vadd.f32 %v781, %v815
      %v820 = vadd.f32 %v782, %v816
      %v821 = vadd.f32 %v783, %v817
      %v822 = vld [vmem:[%s334 + $0x3] sm:$0x1]
      %v823 = vld [vmem:[%s334 + $0xb] sm:$0x1]
      %v824 = vld [vmem:[%s343 + $0x3] sm:$0x1]
      %v825 = vld [vmem:[%s343 + $0xb] sm:$0x1]
      %v826 = vld [vmem:[%s352 + $0x3] sm:$0x1]
      %v827 = vld [vmem:[%s352 + $0xb] sm:$0x1]
      %v828 = vld [vmem:[%s361 + $0x3] sm:$0x1]
      %v829 = vld [vmem:[%s361 + $0xb] sm:$0x1]
      %v830 = vmul.f32 %v822, %v386
      %v831 = vmul.f32 %v823, %v387
      %v832 = vmul.f32 %v830, %v824
      %v833 = vmul.f32 %v831, %v825
      %v836 = vrot.slane %v833, 7
      %v837 = vsel %vm407, %v836, %v832
      %v839 = vsel %vm410, %v837, 0.0
      %840 = vadd.xlane.f32.xlu0 %v839
      %v841 = vpop.xlane.xlu0 %840
      %v842 = vlaneseq
      %v843 = vshrl.u32 %v842, 7
      %v844 = vsub.s32 0, %v843
      %v845 = vrot.slane %v822, %v844
      %847 = vbcast.lane.b32.xlu0 %v845, 256
      %v848 = vpop.permute.xlu0 %847
      %s850 = sor.u32 256, 8
      %851 = vbcast.lane.b32.xlu0 %v845, %s850
      %v852 = vpop.permute.xlu0 %851
      %v853 = vlaneseq
      %v854 = vshrl.u32 %v853, 7
      %v855 = vsub.s32 0, %v854
      %v856 = vrot.slane %v823, %v855
      %858 = vbcast.lane.b32.xlu0 %v856, 256
      %v859 = vpop.permute.xlu0 %858
      %s861 = sor.u32 256, 8
      %862 = vbcast.lane.b32.xlu0 %v856, %s861
      %v863 = vpop.permute.xlu0 %862
      %v864 = vmul.f32 %v848, %v818
      %v865 = vmul.f32 %v852, %v819
      %v866 = vmul.f32 %v859, %v820
      %v867 = vmul.f32 %v863, %v821
      %v868 = vsel %vm440, %v864, 0.0
      %v869 = vsel %vm440, %v865, 0.0
      %v870 = vadd.f32 %v868, %v869
      %v871 = vrot.slane %v870, 4
      %v872 = vadd.f32 %v870, %v871
      %v873 = vrot.slane %v872, 2
      %v874 = vadd.f32 %v872, %v873
      %v875 = vrot.slane %v874, 1
      %v876 = vadd.f32 %v874, %v875
      %v877 = vsel %vm440, %v866, 0.0
      %v878 = vsel %vm440, %v867, 0.0
      %v879 = vadd.f32 %v877, %v878
      %v880 = vrot.slane %v879, 4
      %v881 = vadd.f32 %v879, %v880
      %v882 = vrot.slane %v881, 2
      %v883 = vadd.f32 %v881, %v882
      %v884 = vrot.slane %v883, 1
      %v885 = vadd.f32 %v883, %v884
      %v888 = vrot.slane %v829, 7
      %v889 = vsel %vm407, %v888, %v828
      %v891 = vmul.f32 %v841, %v889
      %v893 = vrot.slane %v891, 1
      %v896 = vadd.f32 %v876, %v891
      %v897 = vadd.f32 %v885, %v893
      %898 = vst.msk [vmem:[%s375 + $0x3] sm:$0x1] %vm471, %v896
      %899 = vst.msk [vmem:[%s375 + $0xb] sm:$0x1] %vm471, %v897
      %v900 = vlaneseq
      %v901 = vshrl.u32 %v900, 7
      %v902 = vsub.s32 0, %v901
      %v903 = vrot.slane %v826, %v902
      %905 = vbcast.lane.b32.xlu0 %v903, 256
      %v906 = vpop.permute.xlu0 %905
      %s908 = sor.u32 256, 8
      %909 = vbcast.lane.b32.xlu0 %v903, %s908
      %v910 = vpop.permute.xlu0 %909
      %v911 = vlaneseq
      %v912 = vshrl.u32 %v911, 7
      %v913 = vsub.s32 0, %v912
      %v914 = vrot.slane %v827, %v913
      %916 = vbcast.lane.b32.xlu0 %v914, 256
      %v917 = vpop.permute.xlu0 %916
      %s919 = sor.u32 256, 8
      %920 = vbcast.lane.b32.xlu0 %v914, %s919
      %v921 = vpop.permute.xlu0 %920
      %v922 = vmul.f32 %v906, %v818
      %v923 = vmul.f32 %v910, %v819
      %v924 = vmul.f32 %v917, %v820
      %v925 = vmul.f32 %v921, %v821
      %v926 = vlaneseq
      %v927 = vshrl.u32 %v926, 7
      %v928 = vsub.s32 0, %v927
      %v929 = vrot.slane %v824, %v928
      %931 = vbcast.lane.b32.xlu0 %v929, 256
      %v932 = vpop.permute.xlu0 %931
      %s934 = sor.u32 256, 8
      %935 = vbcast.lane.b32.xlu0 %v929, %s934
      %v936 = vpop.permute.xlu0 %935
      %v937 = vlaneseq
      %v938 = vshrl.u32 %v937, 7
      %v939 = vsub.s32 0, %v938
      %v940 = vrot.slane %v825, %v939
      %942 = vbcast.lane.b32.xlu0 %v940, 256
      %v943 = vpop.permute.xlu0 %942
      %s945 = sor.u32 256, 8
      %946 = vbcast.lane.b32.xlu0 %v940, %s945
      %v947 = vpop.permute.xlu0 %946
      %v948 = vlaneseq
      %v949 = vshrl.u32 %v948, 7
      %v950 = vsub.s32 0, %v949
      %v951 = vrot.slane %v828, %v950
      %v952 = vlaneseq
      %v953 = vshrl.u32 %v952, 7
      %v954 = vsub.s32 0, %v953
      %v955 = vrot.slane %v829, %v954
      %v956 = vmul.f32 %v932, %v951
      %v957 = vmul.f32 %v936, %v951
      %v958 = vmul.f32 %v943, %v955
      %v959 = vmul.f32 %v947, %v955
      %v960 = vadd.f32 %v922, %v956
      %v961 = vadd.f32 %v923, %v957
      %v962 = vadd.f32 %v924, %v958
      %v963 = vadd.f32 %v925, %v959
      %v964 = vld [vmem:[%s334 + $0x4] sm:$0x1]
      %v965 = vld [vmem:[%s334 + $0xc] sm:$0x1]
      %v966 = vld [vmem:[%s343 + $0x4] sm:$0x1]
      %v967 = vld [vmem:[%s343 + $0xc] sm:$0x1]
      %v968 = vld [vmem:[%s352 + $0x4] sm:$0x1]
      %v969 = vld [vmem:[%s352 + $0xc] sm:$0x1]
      %v970 = vld [vmem:[%s361 + $0x4] sm:$0x1]
      %v971 = vld [vmem:[%s361 + $0xc] sm:$0x1]
      %v972 = vmul.f32 %v964, %v386
      %v973 = vmul.f32 %v965, %v387
      %v974 = vmul.f32 %v972, %v966
      %v975 = vmul.f32 %v973, %v967
      %v978 = vrot.slane %v975, 7
      %v979 = vsel %vm407, %v978, %v974
      %v981 = vsel %vm410, %v979, 0.0
      %982 = vadd.xlane.f32.xlu0 %v981
      %v983 = vpop.xlane.xlu0 %982
      %v984 = vlaneseq
      %v985 = vshrl.u32 %v984, 7
      %v986 = vsub.s32 0, %v985
      %v987 = vrot.slane %v964, %v986
      %989 = vbcast.lane.b32.xlu0 %v987, 256
      %v990 = vpop.permute.xlu0 %989
      %s992 = sor.u32 256, 8
      %993 = vbcast.lane.b32.xlu0 %v987, %s992
      %v994 = vpop.permute.xlu0 %993
      %v995 = vlaneseq
      %v996 = vshrl.u32 %v995, 7
      %v997 = vsub.s32 0, %v996
      %v998 = vrot.slane %v965, %v997
      %1000 = vbcast.lane.b32.xlu0 %v998, 256
      %v1001 = vpop.permute.xlu0 %1000
      %s1003 = sor.u32 256, 8
      %1004 = vbcast.lane.b32.xlu0 %v998, %s1003
      %v1005 = vpop.permute.xlu0 %1004
      %v1006 = vmul.f32 %v990, %v960
      %v1007 = vmul.f32 %v994, %v961
      %v1008 = vmul.f32 %v1001, %v962
      %v1009 = vmul.f32 %v1005, %v963
      %v1010 = vsel %vm440, %v1006, 0.0
      %v1011 = vsel %vm440, %v1007, 0.0
      %v1012 = vadd.f32 %v1010, %v1011
      %v1013 = vrot.slane %v1012, 4
      %v1014 = vadd.f32 %v1012, %v1013
      %v1015 = vrot.slane %v1014, 2
      %v1016 = vadd.f32 %v1014, %v1015
      %v1017 = vrot.slane %v1016, 1
      %v1018 = vadd.f32 %v1016, %v1017
      %v1019 = vsel %vm440, %v1008, 0.0
      %v1020 = vsel %vm440, %v1009, 0.0
      %v1021 = vadd.f32 %v1019, %v1020
      %v1022 = vrot.slane %v1021, 4
      %v1023 = vadd.f32 %v1021, %v1022
      %v1024 = vrot.slane %v1023, 2
      %v1025 = vadd.f32 %v1023, %v1024
      %v1026 = vrot.slane %v1025, 1
      %v1027 = vadd.f32 %v1025, %v1026
      %v1030 = vrot.slane %v971, 7
      %v1031 = vsel %vm407, %v1030, %v970
      %v1033 = vmul.f32 %v983, %v1031
      %v1035 = vrot.slane %v1033, 1
      %v1038 = vadd.f32 %v1018, %v1033
      %v1039 = vadd.f32 %v1027, %v1035
      %1040 = vst.msk [vmem:[%s375 + $0x4] sm:$0x1] %vm471, %v1038
      %1041 = vst.msk [vmem:[%s375 + $0xc] sm:$0x1] %vm471, %v1039
      %v1042 = vlaneseq
      %v1043 = vshrl.u32 %v1042, 7
      %v1044 = vsub.s32 0, %v1043
      %v1045 = vrot.slane %v968, %v1044
      %1047 = vbcast.lane.b32.xlu0 %v1045, 256
      %v1048 = vpop.permute.xlu0 %1047
      %s1050 = sor.u32 256, 8
      %1051 = vbcast.lane.b32.xlu0 %v1045, %s1050
      %v1052 = vpop.permute.xlu0 %1051
      %v1053 = vlaneseq
      %v1054 = vshrl.u32 %v1053, 7
      %v1055 = vsub.s32 0, %v1054
      %v1056 = vrot.slane %v969, %v1055
      %1058 = vbcast.lane.b32.xlu0 %v1056, 256
      %v1059 = vpop.permute.xlu0 %1058
      %s1061 = sor.u32 256, 8
      %1062 = vbcast.lane.b32.xlu0 %v1056, %s1061
      %v1063 = vpop.permute.xlu0 %1062
      %v1064 = vmul.f32 %v1048, %v960
      %v1065 = vmul.f32 %v1052, %v961
      %v1066 = vmul.f32 %v1059, %v962
      %v1067 = vmul.f32 %v1063, %v963
      %v1068 = vlaneseq
      %v1069 = vshrl.u32 %v1068, 7
      %v1070 = vsub.s32 0, %v1069
      %v1071 = vrot.slane %v966, %v1070
      %1073 = vbcast.lane.b32.xlu0 %v1071, 256
      %v1074 = vpop.permute.xlu0 %1073
      %s1076 = sor.u32 256, 8
      %1077 = vbcast.lane.b32.xlu0 %v1071, %s1076
      %v1078 = vpop.permute.xlu0 %1077
      %v1079 = vlaneseq
      %v1080 = vshrl.u32 %v1079, 7
      %v1081 = vsub.s32 0, %v1080
      %v1082 = vrot.slane %v967, %v1081
      %1084 = vbcast.lane.b32.xlu0 %v1082, 256
      %v1085 = vpop.permute.xlu0 %1084
      %s1087 = sor.u32 256, 8
      %1088 = vbcast.lane.b32.xlu0 %v1082, %s1087
      %v1089 = vpop.permute.xlu0 %1088
      %v1090 = vlaneseq
      %v1091 = vshrl.u32 %v1090, 7
      %v1092 = vsub.s32 0, %v1091
      %v1093 = vrot.slane %v970, %v1092
      %v1094 = vlaneseq
      %v1095 = vshrl.u32 %v1094, 7
      %v1096 = vsub.s32 0, %v1095
      %v1097 = vrot.slane %v971, %v1096
      %v1098 = vmul.f32 %v1074, %v1093
      %v1099 = vmul.f32 %v1078, %v1093
      %v1100 = vmul.f32 %v1085, %v1097
      %v1101 = vmul.f32 %v1089, %v1097
      %v1102 = vadd.f32 %v1064, %v1098
      %v1103 = vadd.f32 %v1065, %v1099
      %v1104 = vadd.f32 %v1066, %v1100
      %v1105 = vadd.f32 %v1067, %v1101
      %v1106 = vld [vmem:[%s334 + $0x5] sm:$0x1]
      %v1107 = vld [vmem:[%s334 + $0xd] sm:$0x1]
      %v1108 = vld [vmem:[%s343 + $0x5] sm:$0x1]
      %v1109 = vld [vmem:[%s343 + $0xd] sm:$0x1]
      %v1110 = vld [vmem:[%s352 + $0x5] sm:$0x1]
      %v1111 = vld [vmem:[%s352 + $0xd] sm:$0x1]
      %v1112 = vld [vmem:[%s361 + $0x5] sm:$0x1]
      %v1113 = vld [vmem:[%s361 + $0xd] sm:$0x1]
      %v1114 = vmul.f32 %v1106, %v386
      %v1115 = vmul.f32 %v1107, %v387
      %v1116 = vmul.f32 %v1114, %v1108
      %v1117 = vmul.f32 %v1115, %v1109
      %v1120 = vrot.slane %v1117, 7
      %v1121 = vsel %vm407, %v1120, %v1116
      %v1123 = vsel %vm410, %v1121, 0.0
      %1124 = vadd.xlane.f32.xlu0 %v1123
      %v1125 = vpop.xlane.xlu0 %1124
      %v1126 = vlaneseq
      %v1127 = vshrl.u32 %v1126, 7
      %v1128 = vsub.s32 0, %v1127
      %v1129 = vrot.slane %v1106, %v1128
      %1131 = vbcast.lane.b32.xlu0 %v1129, 256
      %v1132 = vpop.permute.xlu0 %1131
      %s1134 = sor.u32 256, 8
      %1135 = vbcast.lane.b32.xlu0 %v1129, %s1134
      %v1136 = vpop.permute.xlu0 %1135
      %v1137 = vlaneseq
      %v1138 = vshrl.u32 %v1137, 7
      %v1139 = vsub.s32 0, %v1138
      %v1140 = vrot.slane %v1107, %v1139
      %1142 = vbcast.lane.b32.xlu0 %v1140, 256
      %v1143 = vpop.permute.xlu0 %1142
      %s1145 = sor.u32 256, 8
      %1146 = vbcast.lane.b32.xlu0 %v1140, %s1145
      %v1147 = vpop.permute.xlu0 %1146
      %v1148 = vmul.f32 %v1132, %v1102
      %v1149 = vmul.f32 %v1136, %v1103
      %v1150 = vmul.f32 %v1143, %v1104
      %v1151 = vmul.f32 %v1147, %v1105
      %v1152 = vsel %vm440, %v1148, 0.0
      %v1153 = vsel %vm440, %v1149, 0.0
      %v1154 = vadd.f32 %v1152, %v1153
      %v1155 = vrot.slane %v1154, 4
      %v1156 = vadd.f32 %v1154, %v1155
      %v1157 = vrot.slane %v1156, 2
      %v1158 = vadd.f32 %v1156, %v1157
      %v1159 = vrot.slane %v1158, 1
      %v1160 = vadd.f32 %v1158, %v1159
      %v1161 = vsel %vm440, %v1150, 0.0
      %v1162 = vsel %vm440, %v1151, 0.0
      %v1163 = vadd.f32 %v1161, %v1162
      %v1164 = vrot.slane %v1163, 4
      %v1165 = vadd.f32 %v1163, %v1164
      %v1166 = vrot.slane %v1165, 2
      %v1167 = vadd.f32 %v1165, %v1166
      %v1168 = vrot.slane %v1167, 1
      %v1169 = vadd.f32 %v1167, %v1168
      %v1172 = vrot.slane %v1113, 7
      %v1173 = vsel %vm407, %v1172, %v1112
      %v1175 = vmul.f32 %v1125, %v1173
      %v1177 = vrot.slane %v1175, 1
      %v1180 = vadd.f32 %v1160, %v1175
      %v1181 = vadd.f32 %v1169, %v1177
      %1182 = vst.msk [vmem:[%s375 + $0x5] sm:$0x1] %vm471, %v1180
      %1183 = vst.msk [vmem:[%s375 + $0xd] sm:$0x1] %vm471, %v1181
      %v1184 = vlaneseq
      %v1185 = vshrl.u32 %v1184, 7
      %v1186 = vsub.s32 0, %v1185
      %v1187 = vrot.slane %v1110, %v1186
      %1189 = vbcast.lane.b32.xlu0 %v1187, 256
      %v1190 = vpop.permute.xlu0 %1189
      %s1192 = sor.u32 256, 8
      %1193 = vbcast.lane.b32.xlu0 %v1187, %s1192
      %v1194 = vpop.permute.xlu0 %1193
      %v1195 = vlaneseq
      %v1196 = vshrl.u32 %v1195, 7
      %v1197 = vsub.s32 0, %v1196
      %v1198 = vrot.slane %v1111, %v1197
      %1200 = vbcast.lane.b32.xlu0 %v1198, 256
      %v1201 = vpop.permute.xlu0 %1200
      %s1203 = sor.u32 256, 8
      %1204 = vbcast.lane.b32.xlu0 %v1198, %s1203
      %v1205 = vpop.permute.xlu0 %1204
      %v1206 = vmul.f32 %v1190, %v1102
      %v1207 = vmul.f32 %v1194, %v1103
      %v1208 = vmul.f32 %v1201, %v1104
      %v1209 = vmul.f32 %v1205, %v1105
      %v1210 = vlaneseq
      %v1211 = vshrl.u32 %v1210, 7
      %v1212 = vsub.s32 0, %v1211
      %v1213 = vrot.slane %v1108, %v1212
      %1215 = vbcast.lane.b32.xlu0 %v1213, 256
      %v1216 = vpop.permute.xlu0 %1215
      %s1218 = sor.u32 256, 8
      %1219 = vbcast.lane.b32.xlu0 %v1213, %s1218
      %v1220 = vpop.permute.xlu0 %1219
      %v1221 = vlaneseq
      %v1222 = vshrl.u32 %v1221, 7
      %v1223 = vsub.s32 0, %v1222
      %v1224 = vrot.slane %v1109, %v1223
      %1226 = vbcast.lane.b32.xlu0 %v1224, 256
      %v1227 = vpop.permute.xlu0 %1226
      %s1229 = sor.u32 256, 8
      %1230 = vbcast.lane.b32.xlu0 %v1224, %s1229
      %v1231 = vpop.permute.xlu0 %1230
      %v1232 = vlaneseq
      %v1233 = vshrl.u32 %v1232, 7
      %v1234 = vsub.s32 0, %v1233
      %v1235 = vrot.slane %v1112, %v1234
      %v1236 = vlaneseq
      %v1237 = vshrl.u32 %v1236, 7
      %v1238 = vsub.s32 0, %v1237
      %v1239 = vrot.slane %v1113, %v1238
      %v1240 = vmul.f32 %v1216, %v1235
      %v1241 = vmul.f32 %v1220, %v1235
      %v1242 = vmul.f32 %v1227, %v1239
      %v1243 = vmul.f32 %v1231, %v1239
      %v1244 = vadd.f32 %v1206, %v1240
      %v1245 = vadd.f32 %v1207, %v1241
      %v1246 = vadd.f32 %v1208, %v1242
      %v1247 = vadd.f32 %v1209, %v1243
      %v1248 = vld [vmem:[%s334 + $0x6] sm:$0x1]
      %v1249 = vld [vmem:[%s334 + $0xe] sm:$0x1]
      %v1250 = vld [vmem:[%s343 + $0x6] sm:$0x1]
      %v1251 = vld [vmem:[%s343 + $0xe] sm:$0x1]
      %v1252 = vld [vmem:[%s352 + $0x6] sm:$0x1]
      %v1253 = vld [vmem:[%s352 + $0xe] sm:$0x1]
      %v1254 = vld [vmem:[%s361 + $0x6] sm:$0x1]
      %v1255 = vld [vmem:[%s361 + $0xe] sm:$0x1]
      %v1256 = vmul.f32 %v1248, %v386
      %v1257 = vmul.f32 %v1249, %v387
      %v1258 = vmul.f32 %v1256, %v1250
      %v1259 = vmul.f32 %v1257, %v1251
      %v1262 = vrot.slane %v1259, 7
      %v1263 = vsel %vm407, %v1262, %v1258
      %v1265 = vsel %vm410, %v1263, 0.0
      %1266 = vadd.xlane.f32.xlu0 %v1265
      %v1267 = vpop.xlane.xlu0 %1266
      %v1268 = vlaneseq
      %v1269 = vshrl.u32 %v1268, 7
      %v1270 = vsub.s32 0, %v1269
      %v1271 = vrot.slane %v1248, %v1270
      %1273 = vbcast.lane.b32.xlu0 %v1271, 256
      %v1274 = vpop.permute.xlu0 %1273
      %s1276 = sor.u32 256, 8
      %1277 = vbcast.lane.b32.xlu0 %v1271, %s1276
      %v1278 = vpop.permute.xlu0 %1277
      %v1279 = vlaneseq
      %v1280 = vshrl.u32 %v1279, 7
      %v1281 = vsub.s32 0, %v1280
      %v1282 = vrot.slane %v1249, %v1281
      %1284 = vbcast.lane.b32.xlu0 %v1282, 256
      %v1285 = vpop.permute.xlu0 %1284
      %s1287 = sor.u32 256, 8
      %1288 = vbcast.lane.b32.xlu0 %v1282, %s1287
      %v1289 = vpop.permute.xlu0 %1288
      %v1290 = vmul.f32 %v1274, %v1244
      %v1291 = vmul.f32 %v1278, %v1245
      %v1292 = vmul.f32 %v1285, %v1246
      %v1293 = vmul.f32 %v1289, %v1247
      %v1294 = vsel %vm440, %v1290, 0.0
      %v1295 = vsel %vm440, %v1291, 0.0
      %v1296 = vadd.f32 %v1294, %v1295
      %v1297 = vrot.slane %v1296, 4
      %v1298 = vadd.f32 %v1296, %v1297
      %v1299 = vrot.slane %v1298, 2
      %v1300 = vadd.f32 %v1298, %v1299
      %v1301 = vrot.slane %v1300, 1
      %v1302 = vadd.f32 %v1300, %v1301
      %v1303 = vsel %vm440, %v1292, 0.0
      %v1304 = vsel %vm440, %v1293, 0.0
      %v1305 = vadd.f32 %v1303, %v1304
      %v1306 = vrot.slane %v1305, 4
      %v1307 = vadd.f32 %v1305, %v1306
      %v1308 = vrot.slane %v1307, 2
      %v1309 = vadd.f32 %v1307, %v1308
      %v1310 = vrot.slane %v1309, 1
      %v1311 = vadd.f32 %v1309, %v1310
      %v1314 = vrot.slane %v1255, 7
      %v1315 = vsel %vm407, %v1314, %v1254
      %v1317 = vmul.f32 %v1267, %v1315
      %v1319 = vrot.slane %v1317, 1
      %v1322 = vadd.f32 %v1302, %v1317
      %v1323 = vadd.f32 %v1311, %v1319
      %1324 = vst.msk [vmem:[%s375 + $0x6] sm:$0x1] %vm471, %v1322
      %1325 = vst.msk [vmem:[%s375 + $0xe] sm:$0x1] %vm471, %v1323
      %v1326 = vlaneseq
      %v1327 = vshrl.u32 %v1326, 7
      %v1328 = vsub.s32 0, %v1327
      %v1329 = vrot.slane %v1252, %v1328
      %1331 = vbcast.lane.b32.xlu0 %v1329, 256
      %v1332 = vpop.permute.xlu0 %1331
      %s1334 = sor.u32 256, 8
      %1335 = vbcast.lane.b32.xlu0 %v1329, %s1334
      %v1336 = vpop.permute.xlu0 %1335
      %v1337 = vlaneseq
      %v1338 = vshrl.u32 %v1337, 7
      %v1339 = vsub.s32 0, %v1338
      %v1340 = vrot.slane %v1253, %v1339
      %1342 = vbcast.lane.b32.xlu0 %v1340, 256
      %v1343 = vpop.permute.xlu0 %1342
      %s1345 = sor.u32 256, 8
      %1346 = vbcast.lane.b32.xlu0 %v1340, %s1345
      %v1347 = vpop.permute.xlu0 %1346
      %v1348 = vmul.f32 %v1332, %v1244
      %v1349 = vmul.f32 %v1336, %v1245
      %v1350 = vmul.f32 %v1343, %v1246
      %v1351 = vmul.f32 %v1347, %v1247
      %v1352 = vlaneseq
      %v1353 = vshrl.u32 %v1352, 7
      %v1354 = vsub.s32 0, %v1353
      %v1355 = vrot.slane %v1250, %v1354
      %1357 = vbcast.lane.b32.xlu0 %v1355, 256
      %v1358 = vpop.permute.xlu0 %1357
      %s1360 = sor.u32 256, 8
      %1361 = vbcast.lane.b32.xlu0 %v1355, %s1360
      %v1362 = vpop.permute.xlu0 %1361
      %v1363 = vlaneseq
      %v1364 = vshrl.u32 %v1363, 7
      %v1365 = vsub.s32 0, %v1364
      %v1366 = vrot.slane %v1251, %v1365
      %1368 = vbcast.lane.b32.xlu0 %v1366, 256
      %v1369 = vpop.permute.xlu0 %1368
      %s1371 = sor.u32 256, 8
      %1372 = vbcast.lane.b32.xlu0 %v1366, %s1371
      %v1373 = vpop.permute.xlu0 %1372
      %v1374 = vlaneseq
      %v1375 = vshrl.u32 %v1374, 7
      %v1376 = vsub.s32 0, %v1375
      %v1377 = vrot.slane %v1254, %v1376
      %v1378 = vlaneseq
      %v1379 = vshrl.u32 %v1378, 7
      %v1380 = vsub.s32 0, %v1379
      %v1381 = vrot.slane %v1255, %v1380
      %v1382 = vmul.f32 %v1358, %v1377
      %v1383 = vmul.f32 %v1362, %v1377
      %v1384 = vmul.f32 %v1369, %v1381
      %v1385 = vmul.f32 %v1373, %v1381
      %v1386 = vadd.f32 %v1348, %v1382
      %v1387 = vadd.f32 %v1349, %v1383
      %v1388 = vadd.f32 %v1350, %v1384
      %v1389 = vadd.f32 %v1351, %v1385
      %v1390 = vld [vmem:[%s334 + $0x7] sm:$0x1]
      %v1391 = vld [vmem:[%s334 + $0xf] sm:$0x1]
      %v1392 = vld [vmem:[%s343 + $0x7] sm:$0x1]
      %v1393 = vld [vmem:[%s343 + $0xf] sm:$0x1]
      %v1394 = vld [vmem:[%s352 + $0x7] sm:$0x1]
      %v1395 = vld [vmem:[%s352 + $0xf] sm:$0x1]
      %v1396 = vld [vmem:[%s361 + $0x7] sm:$0x1]
      %v1397 = vld [vmem:[%s361 + $0xf] sm:$0x1]
      %v1398 = vmul.f32 %v1390, %v386
      %v1399 = vmul.f32 %v1391, %v387
      %v1400 = vmul.f32 %v1398, %v1392
      %v1401 = vmul.f32 %v1399, %v1393
      %v1404 = vrot.slane %v1401, 7
      %v1405 = vsel %vm407, %v1404, %v1400
      %v1407 = vsel %vm410, %v1405, 0.0
      %1408 = vadd.xlane.f32.xlu0 %v1407
      %v1409 = vpop.xlane.xlu0 %1408
      %v1410 = vlaneseq
      %v1411 = vshrl.u32 %v1410, 7
      %v1412 = vsub.s32 0, %v1411
      %v1413 = vrot.slane %v1390, %v1412
      %1415 = vbcast.lane.b32.xlu0 %v1413, 256
      %v1416 = vpop.permute.xlu0 %1415
      %s1418 = sor.u32 256, 8
      %1419 = vbcast.lane.b32.xlu0 %v1413, %s1418
      %v1420 = vpop.permute.xlu0 %1419
      %v1421 = vlaneseq
      %v1422 = vshrl.u32 %v1421, 7
      %v1423 = vsub.s32 0, %v1422
      %v1424 = vrot.slane %v1391, %v1423
      %1426 = vbcast.lane.b32.xlu0 %v1424, 256
      %v1427 = vpop.permute.xlu0 %1426
      %s1429 = sor.u32 256, 8
      %1430 = vbcast.lane.b32.xlu0 %v1424, %s1429
      %v1431 = vpop.permute.xlu0 %1430
      %v1432 = vmul.f32 %v1416, %v1386
      %v1433 = vmul.f32 %v1420, %v1387
      %v1434 = vmul.f32 %v1427, %v1388
      %v1435 = vmul.f32 %v1431, %v1389
      %v1436 = vsel %vm440, %v1432, 0.0
      %v1437 = vsel %vm440, %v1433, 0.0
      %v1438 = vadd.f32 %v1436, %v1437
      %v1439 = vrot.slane %v1438, 4
      %v1440 = vadd.f32 %v1438, %v1439
      %v1441 = vrot.slane %v1440, 2
      %v1442 = vadd.f32 %v1440, %v1441
      %v1443 = vrot.slane %v1442, 1
      %v1444 = vadd.f32 %v1442, %v1443
      %v1445 = vsel %vm440, %v1434, 0.0
      %v1446 = vsel %vm440, %v1435, 0.0
      %v1447 = vadd.f32 %v1445, %v1446
      %v1448 = vrot.slane %v1447, 4
      %v1449 = vadd.f32 %v1447, %v1448
      %v1450 = vrot.slane %v1449, 2
      %v1451 = vadd.f32 %v1449, %v1450
      %v1452 = vrot.slane %v1451, 1
      %v1453 = vadd.f32 %v1451, %v1452
      %v1456 = vrot.slane %v1397, 7
      %v1457 = vsel %vm407, %v1456, %v1396
      %v1459 = vmul.f32 %v1409, %v1457
      %v1461 = vrot.slane %v1459, 1
      %v1464 = vadd.f32 %v1444, %v1459
      %v1465 = vadd.f32 %v1453, %v1461
      %1466 = vst.msk [vmem:[%s375 + $0x7] sm:$0x1] %vm471, %v1464
      %1467 = vst.msk [vmem:[%s375 + $0xf] sm:$0x1] %vm471, %v1465
      %v1468 = vlaneseq
      %v1469 = vshrl.u32 %v1468, 7
      %v1470 = vsub.s32 0, %v1469
      %v1471 = vrot.slane %v1394, %v1470
      %1473 = vbcast.lane.b32.xlu0 %v1471, 256
      %v1474 = vpop.permute.xlu0 %1473
      %s1476 = sor.u32 256, 8
      %1477 = vbcast.lane.b32.xlu0 %v1471, %s1476
      %v1478 = vpop.permute.xlu0 %1477
      %v1479 = vlaneseq
      %v1480 = vshrl.u32 %v1479, 7
      %v1481 = vsub.s32 0, %v1480
      %v1482 = vrot.slane %v1395, %v1481
      %1484 = vbcast.lane.b32.xlu0 %v1482, 256
      %v1485 = vpop.permute.xlu0 %1484
      %s1487 = sor.u32 256, 8
      %1488 = vbcast.lane.b32.xlu0 %v1482, %s1487
      %v1489 = vpop.permute.xlu0 %1488
      %v1490 = vmul.f32 %v1474, %v1386
      %v1491 = vmul.f32 %v1478, %v1387
      %v1492 = vmul.f32 %v1485, %v1388
      %v1493 = vmul.f32 %v1489, %v1389
      %v1494 = vlaneseq
      %v1495 = vshrl.u32 %v1494, 7
      %v1496 = vsub.s32 0, %v1495
      %v1497 = vrot.slane %v1392, %v1496
      %1499 = vbcast.lane.b32.xlu0 %v1497, 256
      %v1500 = vpop.permute.xlu0 %1499
      %s1502 = sor.u32 256, 8
      %1503 = vbcast.lane.b32.xlu0 %v1497, %s1502
      %v1504 = vpop.permute.xlu0 %1503
      %v1505 = vlaneseq
      %v1506 = vshrl.u32 %v1505, 7
      %v1507 = vsub.s32 0, %v1506
      %v1508 = vrot.slane %v1393, %v1507
      %1510 = vbcast.lane.b32.xlu0 %v1508, 256
      %v1511 = vpop.permute.xlu0 %1510
      %s1513 = sor.u32 256, 8
      %1514 = vbcast.lane.b32.xlu0 %v1508, %s1513
      %v1515 = vpop.permute.xlu0 %1514
      %v1516 = vlaneseq
      %v1517 = vshrl.u32 %v1516, 7
      %v1518 = vsub.s32 0, %v1517
      %v1519 = vrot.slane %v1396, %v1518
      %v1520 = vlaneseq
      %v1521 = vshrl.u32 %v1520, 7
      %v1522 = vsub.s32 0, %v1521
      %v1523 = vrot.slane %v1397, %v1522
      %v1524 = vmul.f32 %v1500, %v1519
      %v1525 = vmul.f32 %v1504, %v1519
      %v1526 = vmul.f32 %v1511, %v1523
      %v1527 = vmul.f32 %v1515, %v1523
      %v1528 = vadd.f32 %v1490, %v1524
      %v1529 = vadd.f32 %v1491, %v1525
      %v1530 = vadd.f32 %v1492, %v1526
      %v1531 = vadd.f32 %v1493, %v1527
      %1532 = vst.msk [vmem:[#allocation2] sm:$0xff] %vm440, %v1528
      %1533 = vst.msk [vmem:[#allocation2 + $0x8] sm:$0xff] %vm440, %v1529
      %1534 = vst.msk [vmem:[#allocation2 + $0x10] sm:$0xff] %vm440, %v1530
      %1535 = vst.msk [vmem:[#allocation2 + $0x18] sm:$0xff] %vm440, %v1531
      %s1536 = smul.u32 2, %s20
      %p1537 = scmp.lt.s32.totalorder %s1536, 3
      %s1538 = scalar_select %p1537, %s1536, 3
      %p1539 = scmp.lt.s32.totalorder %s21, 0
      %s1540 = scalar_select %p1539, %s21, 0
      %s1541 = sadd.s32 %s1540, %s1538
      %s1542 = smul.addr %s1541, 8
      %s1543 = scalar_lea.vmem %s5, %s1542
      // Predicated region
      $region45: #{rwkv6_block.8} parent=39 // pred_check
        %p1544 = pneg %p186
      $region46: #{rwkv6_block.8} parent=39 // pred_check_branch
        %1546 = sbr.rel (%p1544) target = $region48
      $region47: #{rwkv6_block.8} parent=39 // pred_region
        %s1547 = smul.u32 2, %s20
      $region48: #{rwkv6_block.8} parent=39 // pred_fallthru
        _
    $region40: #{rwkv6_block.8} parent=5 // pred_fallthru
      _
    %p1548 = scmp.le.s32.totalorder 2, %s11
    // Predicated region
    $region49: #{rwkv6_block.8} parent=5 // pred_check
      %p1549 = pneg %p1548
    $region50: #{rwkv6_block.8} parent=5 // pred_check_branch
      %1551 = sbr.rel (%p1549) target = $region52
    $region51: #{rwkv6_block.8} parent=5 // pred_region
      %s1552 = ssub.s32 %s11, 2
      // Predicated region
      $region53: #{rwkv6_block.8} parent=51 // pred_check
        %p1553 = pneg %p192
      $region54: #{rwkv6_block.8} parent=51 // pred_check_branch
        %1555 = sbr.rel (%p1553) target = $region56
      $region55: #{rwkv6_block.8} parent=51 // pred_region
        %s1556 = smul.u32 2, %s22
        %p1557 = scmp.lt.s32.totalorder %s1556, 3
        %s1558 = scalar_select %p1557, %s1556, 3
        %p1559 = scmp.lt.s32.totalorder %s23, 0
        %s1560 = scalar_select %p1559, %s23, 0
        %s1561 = sadd.s32 %s1560, %s1558
        %s1562 = smul.addr %s1561, 8
        %s1563 = scalar_lea.vmem %s5, %s1562
      $region56: #{rwkv6_block.8} parent=51 // pred_fallthru
        _
    $region52: #{rwkv6_block.8} parent=5 // pred_fallthru
      _
  $region6: #{rwkv6_block.8} parent=0 // loop_footer
    %s15 = sadd.s32 1, %s11
  $region7: #{rwkv6_block.8} parent=0 // loop_footer_branch
    %10 = sbr.rel target = $region3
  $region8: #{rwkv6_block.8} parent=0 // loop_exit
    _

// kernel: rwkv6_block.11
$region0: #{rwkv6_block.11}
  #allocation0 [shape = 'u32[]', space=smem, size = 0x4, offset = 0x4, fixed_abs, tag = 'smem constant byte address 0x4 - core index']
  #allocation1 [shape = 'u32[144,128]{1,0:T(1,128)}', space=vmem, size = 0x12000, scoped, tag = 'internal scratch']
  %s0 = inlined_call_operand.vmem [shape: f32[16,64], index: 0, kind: input, shape index: {}]
  %s1 = inlined_call_operand.vmem [shape: f32[16,64], index: 1, kind: input, shape index: {}]
  %s2 = inlined_call_operand.vmem [shape: f32[16,64], index: 2, kind: input, shape index: {}]
  %s3 = inlined_call_operand.vmem [shape: f32[1,64], index: 3, kind: input, shape index: {}]
  %s4 = inlined_call_operand.vmem [shape: f32[1,64], index: 4, kind: input, shape index: {}]
  %s5 = inlined_call_operand.vmem [shape: bf16[64,224], index: 5, kind: input, shape index: {}]
  %s6 = inlined_call_operand.vmem [shape: bf16[224,64], index: 6, kind: input, shape index: {}]
  %s7 = inlined_call_operand.vmem [shape: bf16[64,64], index: 7, kind: input, shape index: {}]
  %s8 = inlined_call_operand.hbm [shape: f32[16,64], index: 8, kind: output, shape index: {}]
  %s9 = sld [smem:[#allocation0]]
  $region42: #{rwkv6_block.11} parent=0
    _
  %s11 = ssub.s32 1, %s9
  %s12 = scalar_select 0, %s11, %s9
  $region1: #{rwkv6_block.11} parent=0
    #allocation2 [shape = 'u8[8192]{0}', space=vmem, size = 0x2000, scoped, tag = 'output window, operand 0, single buffered']
    #allocation3 [shape = 's32[1]{0}', space=sflag, size = 0x4, scoped, tag = 'scoped memory for rwkv6_block.11']
    %13 = vsyncpa [#allocation3], 0
    // Predicated region
    $region2: #{rwkv6_block.11} parent=1 // pred_check
      _
    $region3: #{rwkv6_block.11} parent=1 // pred_check_branch
      %15 = sbr.rel (0) target = $region5
    $region4: #{rwkv6_block.11} parent=1 // pred_region
      _
    $region5: #{rwkv6_block.11} parent=1 // pred_fallthru
      _
    // Predicated region
    $region6: #{rwkv6_block.11} parent=1 // pred_check
      _
    $region7: #{rwkv6_block.11} parent=1 // pred_check_branch
      %17 = sbr.rel (0) target = $region9
    $region8: #{rwkv6_block.11} parent=1 // pred_region
      _
    $region9: #{rwkv6_block.11} parent=1 // pred_fallthru
      _
    // Predicated region
    $region10: #{rwkv6_block.11} parent=1 // pred_check
      _
    $region11: #{rwkv6_block.11} parent=1 // pred_check_branch
      %19 = sbr.rel (0) target = $region13
    $region12: #{rwkv6_block.11} parent=1 // pred_region
      _
    $region13: #{rwkv6_block.11} parent=1 // pred_fallthru
      _
    // Predicated region
    $region14: #{rwkv6_block.11} parent=1 // pred_check
      _
    $region15: #{rwkv6_block.11} parent=1 // pred_check_branch
      %21 = sbr.rel (0) target = $region17
    $region16: #{rwkv6_block.11} parent=1 // pred_region
      _
    $region17: #{rwkv6_block.11} parent=1 // pred_fallthru
      _
    // Predicated region
    $region18: #{rwkv6_block.11} parent=1 // pred_check
      _
    $region19: #{rwkv6_block.11} parent=1 // pred_check_branch
      %23 = sbr.rel (0) target = $region21
    $region20: #{rwkv6_block.11} parent=1 // pred_region
      _
    $region21: #{rwkv6_block.11} parent=1 // pred_fallthru
      _
    // Predicated region
    $region22: #{rwkv6_block.11} parent=1 // pred_check
      _
    $region23: #{rwkv6_block.11} parent=1 // pred_check_branch
      %25 = sbr.rel (0) target = $region25
    $region24: #{rwkv6_block.11} parent=1 // pred_region
      _
    $region25: #{rwkv6_block.11} parent=1 // pred_fallthru
      _
    // Predicated region
    $region26: #{rwkv6_block.11} parent=1 // pred_check
      _
    $region27: #{rwkv6_block.11} parent=1 // pred_check_branch
      %27 = sbr.rel (0) target = $region29
    $region28: #{rwkv6_block.11} parent=1 // pred_region
      _
    $region29: #{rwkv6_block.11} parent=1 // pred_fallthru
      _
    // Predicated region
    $region30: #{rwkv6_block.11} parent=1 // pred_check
      _
    $region31: #{rwkv6_block.11} parent=1 // pred_check_branch
      %29 = sbr.rel (0) target = $region33
    $region32: #{rwkv6_block.11} parent=1 // pred_region
      _
    $region33: #{rwkv6_block.11} parent=1 // pred_fallthru
      _
    %v31 = vld [vmem:[%s0] sm:$0xff]
    %v32 = vld [vmem:[%s0 + $0x8] sm:$0xff]
    %v33 = vld [vmem:[%s1] sm:$0xff]
    %v34 = vld [vmem:[%s1 + $0x8] sm:$0xff]
    %v35 = vld [vmem:[%s3] sm:$0x1]
    %v37 = vlaneseq
    %v38 = vshrl.u32 %v37, 7
    %v39 = vsub.s32 0, %v38
    %v40 = vrot.slane %v35, %v39
    %v42 = vmul.f32 %v33, %v40
    %v43 = vmul.f32 %v34, %v40
    %v44 = vadd.f32 %v31, %v42
    %v45 = vadd.f32 %v32, %v43
    %v46 = vpack.c.bf16 %v45, %v44
    %v47 = vld [vmem:[%s5] sm:$0xff]
    %v48 = vld [vmem:[%s5 + $0x8] sm:$0xff]
    %v49 = vld [vmem:[%s5 + $0x10] sm:$0xff]
    %v50 = vld [vmem:[%s5 + $0x18] sm:$0xff]
    %v51 = vld [vmem:[%s5 + $0x20] sm:$0xff]
    %v52 = vld [vmem:[%s5 + $0x28] sm:$0xff]
    %v53 = vld [vmem:[%s5 + $0x30] sm:$0xff]
    %v54 = vld [vmem:[%s5 + $0x38] sm:$0xff]
    %v63 = vunpack.c.l.b16 %v47
    %v64 = vunpack.c.h.b16 %v47
    %v65 = vunpack.c.l.b16 %v48
    %v66 = vunpack.c.h.b16 %v48
    %v67 = vunpack.c.l.b16 %v49
    %v68 = vunpack.c.h.b16 %v49
    %v69 = vunpack.c.l.b16 %v50
    %v70 = vunpack.c.h.b16 %v50
    %v71 = vunpack.c.l.b16 %v51
    %v72 = vunpack.c.h.b16 %v51
    %v73 = vunpack.c.l.b16 %v52
    %v74 = vunpack.c.h.b16 %v52
    %v75 = vunpack.c.l.b16 %v53
    %v76 = vunpack.c.h.b16 %v53
    %v77 = vunpack.c.l.b16 %v54
    %v78 = vunpack.c.h.b16 %v54
    %v79 = vpack.c.b16 %v65, %v63
    %v80 = vpack.c.b16 %v66, %v64
    %v81 = vpack.c.b16 %v69, %v67
    %v82 = vpack.c.b16 %v70, %v68
    %v83 = vpack.c.b16 %v73, %v71
    %v84 = vpack.c.b16 %v74, %v72
    %v85 = vpack.c.b16 %v77, %v75
    %v86 = vpack.c.b16 %v78, %v76
    %vm95 = vcmask 523264
    %v97 = vsel %vm95, %v46, 0
    %99 = vmatprep.subr.bf16.mxu0 0
    %100 = vmatpush1.bf16.msra.mxu0 0
    %101 = vmatprep.subr.bf16.mxu0 0
    %102 = vmatpush1.bf16.msra.mxu0 0
    %103 = vmatprep.subr.bf16.mxu0 0
    %104 = vmatpush1.bf16.msra.mxu0 0
    %105 = vmatprep.subr.bf16.mxu0 0
    %106 = vmatpush1.bf16.msra.mxu0 0
    %107 = vmatprep.subr.bf16.mxu0 %v86
    %108 = vmatpush1.bf16.msra.mxu0 %v85
    %109 = vmatprep.subr.bf16.mxu0 %v84
    %110 = vmatpush1.bf16.msra.mxu0 %v83
    %111 = vmatprep.subr.bf16.mxu0 %v82
    %112 = vmatpush1.bf16.msra.mxu0 %v81
    %113 = vmatprep.subr.bf16.mxu0 %v80
    %114 = vmatpush1.bf16.msra.mxu0 %v79
    %115 = vmatprep.subr.bf16.mxu0 0
    %116 = vmatpush2.bf16.msra.mxu0 0
    %117 = vmatprep.subr.bf16.mxu0 0
    %118 = vmatpush2.bf16.msra.mxu0 0
    %119 = vmatprep.subr.bf16.mxu0 0
    %120 = vmatpush2.bf16.msra.mxu0 0
    %121 = vmatprep.subr.bf16.mxu0 0
    %122 = vmatpush2.bf16.msra.mxu0 0
    %123 = vmatprep.subr.bf16.mxu0 0
    %124 = vmatpush2.bf16.msra.mxu0 0
    %125 = vmatprep.subr.bf16.mxu0 0
    %126 = vmatpush2.bf16.msra.mxu0 0
    %127 = vmatprep.subr.bf16.mxu0 0
    %128 = vmatpush2.bf16.msra.mxu0 0
    %129 = vmatprep.subr.bf16.mxu0 0
    %130 = vmatpush2.bf16.msra.mxu0 0
    %131 = vmatprep.mubr.bf16.mxu0 0
    %132 = vmatmul.mubr.bf16.gmra.mxu0 %v97
    %v133 = vpop.f32.mrf.mxu0
    %v134 = vadd.f32 0.0, %v133
    %v135 = vpop.f32.mrf.mxu0
    %v136 = vadd.f32 0.0, %v135
    %v137 = vpop.f32.mrf.mxu0
    %v138 = vadd.f32 0.0, %v137
    %v139 = vpop.f32.mrf.mxu0
    %v140 = vadd.f32 0.0, %v139
    %141 = vdwg.mxu0
    %v142 = vmax.f32 %v134, 0.0
    %v143 = vmax.f32 %v136, 0.0
    %v144 = vmax.f32 %v138, 0.0
    %v145 = vmax.f32 %v140, 0.0
    %v146 = vmul.f32 %v142, %v142
    %v147 = vmul.f32 %v143, %v143
    %v148 = vmul.f32 %v144, %v144
    %v149 = vmul.f32 %v145, %v145
    %v150 = vpack.c.bf16 %v148, %v146
    %v151 = vpack.c.bf16 %v149, %v147
    %v152 = vld [vmem:[%s6] sm:$0xf]
    %v153 = vld [vmem:[%s6 + $0x4] sm:$0xf]
    %v154 = vld [vmem:[%s6 + $0x8] sm:$0xf]
    %v155 = vld [vmem:[%s6 + $0xc] sm:$0xf]
    %v156 = vld [vmem:[%s6 + $0x10] sm:$0xf]
    %v157 = vld [vmem:[%s6 + $0x14] sm:$0xf]
    %v158 = vld [vmem:[%s6 + $0x18] sm:$0xf]
    %v159 = vld [vmem:[%s6 + $0x1c] sm:$0xf]
    %v160 = vld [vmem:[%s6 + $0x20] sm:$0xf]
    %v161 = vld [vmem:[%s6 + $0x24] sm:$0xf]
    %v162 = vld [vmem:[%s6 + $0x28] sm:$0xf]
    %v163 = vld [vmem:[%s6 + $0x2c] sm:$0xf]
    %v164 = vld [vmem:[%s6 + $0x30] sm:$0xf]
    %v165 = vld [vmem:[%s6 + $0x34] sm:$0xf]
    %v166 = vld [vmem:[%s6 + $0x38] sm:$0xf]
    %v167 = vld [vmem:[%s6 + $0x3c] sm:$0xf]
    %v168 = vld [vmem:[%s6 + $0x40] sm:$0xf]
    %v169 = vld [vmem:[%s6 + $0x44] sm:$0xf]
    %v170 = vld [vmem:[%s6 + $0x48] sm:$0xf]
    %v171 = vld [vmem:[%s6 + $0x4c] sm:$0xf]
    %v172 = vld [vmem:[%s6 + $0x50] sm:$0xf]
    %v173 = vld [vmem:[%s6 + $0x54] sm:$0xf]
    %v174 = vld [vmem:[%s6 + $0x58] sm:$0xf]
    %v175 = vld [vmem:[%s6 + $0x5c] sm:$0xf]
    %v176 = vld [vmem:[%s6 + $0x60] sm:$0xf]
    %v177 = vld [vmem:[%s6 + $0x64] sm:$0xf]
    %v178 = vld [vmem:[%s6 + $0x68] sm:$0xf]
    %v179 = vld [vmem:[%s6 + $0x6c] sm:$0xf]
    %v208 = vunpack.c.l.b16 %v152
    %v209 = vunpack.c.l.b16 %v153
    %v210 = vunpack.c.l.b16 %v154
    %v211 = vunpack.c.l.b16 %v155
    %v212 = vunpack.c.l.b16 %v156
    %v213 = vunpack.c.l.b16 %v157
    %v214 = vunpack.c.l.b16 %v158
    %v215 = vunpack.c.l.b16 %v159
    %v216 = vunpack.c.l.b16 %v160
    %v217 = vunpack.c.l.b16 %v161
    %v218 = vunpack.c.l.b16 %v162
    %v219 = vunpack.c.l.b16 %v163
    %v220 = vunpack.c.l.b16 %v164
    %v221 = vunpack.c.l.b16 %v165
    %v222 = vunpack.c.l.b16 %v166
    %v223 = vunpack.c.l.b16 %v167
    %v224 = vunpack.c.l.b16 %v168
    %v225 = vunpack.c.l.b16 %v169
    %v226 = vunpack.c.l.b16 %v170
    %v227 = vunpack.c.l.b16 %v171
    %v228 = vunpack.c.l.b16 %v172
    %v229 = vunpack.c.l.b16 %v173
    %v230 = vunpack.c.l.b16 %v174
    %v231 = vunpack.c.l.b16 %v175
    %v232 = vunpack.c.l.b16 %v176
    %v233 = vunpack.c.l.b16 %v177
    %v234 = vunpack.c.l.b16 %v178
    %v235 = vunpack.c.l.b16 %v179
    %v236 = vpack.c.b16 %v209, %v208
    %v237 = vpack.c.b16 %v211, %v210
    %v238 = vpack.c.b16 %v213, %v212
    %v239 = vpack.c.b16 %v215, %v214
    %v240 = vpack.c.b16 %v217, %v216
    %v241 = vpack.c.b16 %v219, %v218
    %v242 = vpack.c.b16 %v221, %v220
    %v243 = vpack.c.b16 %v223, %v222
    %v244 = vpack.c.b16 %v225, %v224
    %v245 = vpack.c.b16 %v227, %v226
    %v246 = vpack.c.b16 %v229, %v228
    %v247 = vpack.c.b16 %v231, %v230
    %v248 = vpack.c.b16 %v233, %v232
    %v249 = vpack.c.b16 %v235, %v234
    %vm264 = vcmask 785408
    %v266 = vsel %vm264, %v151, 0
    %268 = vmatprep.subr.bf16.mxu0 0
    %269 = vmatpush1.bf16.msra.mxu0 %v243
    %270 = vmatprep.subr.bf16.mxu0 0
    %271 = vmatpush1.bf16.msra.mxu0 %v242
    %272 = vmatprep.subr.bf16.mxu0 0
    %273 = vmatpush1.bf16.msra.mxu0 %v241
    %274 = vmatprep.subr.bf16.mxu0 0
    %275 = vmatpush1.bf16.msra.mxu0 %v240
    %276 = vmatprep.subr.bf16.mxu0 0
    %277 = vmatpush1.bf16.msra.mxu0 %v239
    %278 = vmatprep.subr.bf16.mxu0 0
    %279 = vmatpush1.bf16.msra.mxu0 %v238
    %280 = vmatprep.subr.bf16.mxu0 0
    %281 = vmatpush1.bf16.msra.mxu0 %v237
    %282 = vmatprep.subr.bf16.mxu0 0
    %283 = vmatpush1.bf16.msra.mxu0 %v236
    %284 = vmatprep.subr.bf16.mxu0 0
    %285 = vmatpush2.bf16.msra.mxu0 0
    %286 = vmatprep.subr.bf16.mxu0 0
    %287 = vmatpush2.bf16.msra.mxu0 0
    %288 = vmatprep.subr.bf16.mxu0 0
    %289 = vmatpush2.bf16.msra.mxu0 %v249
    %290 = vmatprep.subr.bf16.mxu0 0
    %291 = vmatpush2.bf16.msra.mxu0 %v248
    %292 = vmatprep.subr.bf16.mxu0 0
    %293 = vmatpush2.bf16.msra.mxu0 %v247
    %294 = vmatprep.subr.bf16.mxu0 0
    %295 = vmatpush2.bf16.msra.mxu0 %v246
    %296 = vmatprep.subr.bf16.mxu0 0
    %297 = vmatpush2.bf16.msra.mxu0 %v245
    %298 = vmatprep.subr.bf16.mxu0 0
    %299 = vmatpush2.bf16.msra.mxu0 %v244
    %300 = vmatprep.mubr.bf16.mxu0 %v266
    %301 = vmatmul.mubr.bf16.gmra.mxu0 %v150
    %v302 = vpop.f32.mrf.mxu0
    %v303 = vadd.f32 0.0, %v302
    %v304 = vpop.f32.mrf.mxu0
    %v305 = vpop.f32.mrf.mxu0
    %v306 = vadd.f32 0.0, %v305
    %v307 = vpop.f32.mrf.mxu0
    %308 = vdwg.mxu0
    %v309 = vld [vmem:[%s4] sm:$0x1]
    %v311 = vlaneseq
    %v312 = vshrl.u32 %v311, 7
    %v313 = vsub.s32 0, %v312
    %v314 = vrot.slane %v309, %v313
    %v316 = vmul.f32 %v33, %v314
    %v317 = vmul.f32 %v34, %v314
    %v318 = vadd.f32 %v31, %v316
    %v319 = vadd.f32 %v32, %v317
    %v320 = vpack.c.bf16 %v319, %v318
    %v321 = vld [vmem:[%s7] sm:$0xf]
    %v322 = vld [vmem:[%s7 + $0x4] sm:$0xf]
    %v323 = vld [vmem:[%s7 + $0x8] sm:$0xf]
    %v324 = vld [vmem:[%s7 + $0xc] sm:$0xf]
    %v325 = vld [vmem:[%s7 + $0x10] sm:$0xf]
    %v326 = vld [vmem:[%s7 + $0x14] sm:$0xf]
    %v327 = vld [vmem:[%s7 + $0x18] sm:$0xf]
    %v328 = vld [vmem:[%s7 + $0x1c] sm:$0xf]
    %v337 = vunpack.c.l.b16 %v321
    %v338 = vunpack.c.l.b16 %v322
    %v339 = vunpack.c.l.b16 %v323
    %v340 = vunpack.c.l.b16 %v324
    %v341 = vunpack.c.l.b16 %v325
    %v342 = vunpack.c.l.b16 %v326
    %v343 = vunpack.c.l.b16 %v327
    %v344 = vunpack.c.l.b16 %v328
    %v345 = vpack.c.b16 %v338, %v337
    %v346 = vpack.c.b16 %v340, %v339
    %v347 = vpack.c.b16 %v342, %v341
    %v348 = vpack.c.b16 %v344, %v343
    %v354 = vsel %vm95, %v320, 0
    %356 = vmatprep.subr.bf16.mxu0 0
    %357 = vmatpush1.bf16.msra.mxu0 0
    %358 = vmatprep.subr.bf16.mxu0 0
    %359 = vmatpush1.bf16.msra.mxu0 0
    %360 = vmatprep.subr.bf16.mxu0 0
    %361 = vmatpush1.bf16.msra.mxu0 0
    %362 = vmatprep.subr.bf16.mxu0 0
    %363 = vmatpush1.bf16.msra.mxu0 0
    %364 = vmatprep.subr.bf16.mxu0 0
    %365 = vmatpush1.bf16.msra.mxu0 %v348
    %366 = vmatprep.subr.bf16.mxu0 0
    %367 = vmatpush1.bf16.msra.mxu0 %v347
    %368 = vmatprep.subr.bf16.mxu0 0
    %369 = vmatpush1.bf16.msra.mxu0 %v346
    %370 = vmatprep.subr.bf16.mxu0 0
    %371 = vmatpush1.bf16.msra.mxu0 %v345
    %372 = vmatprep.subr.bf16.mxu0 0
    %373 = vmatpush2.bf16.msra.mxu0 0
    %374 = vmatprep.subr.bf16.mxu0 0
    %375 = vmatpush2.bf16.msra.mxu0 0
    %376 = vmatprep.subr.bf16.mxu0 0
    %377 = vmatpush2.bf16.msra.mxu0 0
    %378 = vmatprep.subr.bf16.mxu0 0
    %379 = vmatpush2.bf16.msra.mxu0 0
    %380 = vmatprep.subr.bf16.mxu0 0
    %381 = vmatpush2.bf16.msra.mxu0 0
    %382 = vmatprep.subr.bf16.mxu0 0
    %383 = vmatpush2.bf16.msra.mxu0 0
    %384 = vmatprep.subr.bf16.mxu0 0
    %385 = vmatpush2.bf16.msra.mxu0 0
    %386 = vmatprep.subr.bf16.mxu0 0
    %387 = vmatpush2.bf16.msra.mxu0 0
    %388 = vmatprep.mubr.bf16.mxu0 0
    %389 = vmatmul.mubr.bf16.gmra.mxu0 %v354
    %v390 = vpop.f32.mrf.mxu0
    %v391 = vadd.f32 0.0, %v390
    %v392 = vpop.f32.mrf.mxu0
    %v393 = vpop.f32.mrf.mxu0
    %v394 = vadd.f32 0.0, %v393
    %v395 = vpop.f32.mrf.mxu0
    %396 = vdwg.mxu0
    %v397 = vld [vmem:[%s2] sm:$0xff]
    %v398 = vld [vmem:[%s2 + $0x8] sm:$0xff]
    %v399 = vxor.u32 %v391, 2147483648
    %v400 = vxor.u32 %v394, 2147483648
    %v401 = vmul.f32 %v399, 1.442695
    %v402 = vpow.pop %v401
    %v403 = vmul.f32 %v400, 1.442695
    %v404 = vpow.pop %v403
    %v405 = vadd.f32 %v402, 1.0
    %v406 = vadd.f32 %v404, 1.0
    %v407 = vrcp.pop %v405
    %v408 = vmul.f32 1.0, %v407
    %v409 = vrcp.pop %v406
    %v410 = vmul.f32 1.0, %v409
    %v411 = vmul.f32 %v408, %v303
    %v412 = vmul.f32 %v410, %v306
    %v413 = vadd.f32 %v397, %v411
    %v414 = vadd.f32 %v398, %v412
    %415 = vst.msk [vmem:[#allocation2] sm:$0xff] %vm95, %v413
    %416 = vst.msk [vmem:[#allocation2 + $0x8] sm:$0xff] %vm95, %v414
    // Predicated region
    $region34: #{rwkv6_block.11} parent=1 // pred_check
      _
    $region35: #{rwkv6_block.11} parent=1 // pred_check_branch
      %418 = sbr.rel (0) target = $region37
    $region36: #{rwkv6_block.11} parent=1 // pred_region
      %s420 = ssub.s32 256, 256
      %421 = vsyncadd [#allocation3], %s420
      %s422 = sshll.u32 [#allocation2], 4
      %s423 = int_to_ptr.vmem [resolvable:$true] %s422
      %428 = dma.vmem_to_hbm [thread:$0]  %s423, 256, %s8, [#allocation3], 128, 128, 8
    $region37: #{rwkv6_block.11} parent=1 // pred_fallthru
      _
    // Predicated region
    $region38: #{rwkv6_block.11} parent=1 // pred_check
      _
    $region39: #{rwkv6_block.11} parent=1 // pred_check_branch
      %430 = sbr.rel (0) target = $region41
    $region40: #{rwkv6_block.11} parent=1 // pred_region
      %431 = dma.done [#allocation3], 256
    $region41: #{rwkv6_block.11} parent=1 // pred_fallthru
      _
    %432 = vsyncpa [#allocation3], 1

</llo_original>
